<compile_context>
chip_gen: v7x
topology: tpu7x:2x2x1
jax: 0.10.0
libtpu: 0.0.40
codegen_flags: <defaults>
</compile_context>

<pallas_src>
import jax
import jax.numpy as jnp
from jax.experimental import pallas as pl
from jax.experimental.pallas import tpu as pltpu

_VMEM = pltpu.MemorySpace.VMEM


# ----------------------------------------------------------------------------
# Kernel 1: fused encoder
#   relu(x @ Wc + bc)  -> global average pool per image -> fc (+ bias)
# ----------------------------------------------------------------------------
def make_encoder_kernel(batch, hw):
    def kernel(x_ref, wc_ref, bc_ref, wf_ref, bf_ref, o_ref):
        # x_ref: (B*HW, C)  wc: (C, F)  bc: (1, F)  wf: (F, E)  bf: (1, E)
        y = jnp.dot(x_ref[...], wc_ref[...],
                    preferred_element_type=jnp.float32) + bc_ref[...]
        y = jnp.maximum(y, 0.0)                                  # (B*HW, F)
        # global average pool per image (sublane reduce, static aligned slices)
        pooled = jnp.concatenate(
            [jnp.mean(y[b * hw:(b + 1) * hw, :], axis=0, keepdims=True)
             for b in range(batch)], axis=0)                     # (B, F)
        # fused encoder fc
        o_ref[...] = jnp.dot(pooled, wf_ref[...],
                             preferred_element_type=jnp.float32) + bf_ref[...]
    return kernel


def encoder_forward(x_flat, w_conv, b_conv, w_fc, b_fc, batch):
    bhw, _ = x_flat.shape
    embed = w_fc.shape[1]
    return pl.pallas_call(
        make_encoder_kernel(batch, bhw // batch),
        out_shape=jax.ShapeDtypeStruct((batch, embed), jnp.float32),
        in_specs=[pl.BlockSpec(memory_space=_VMEM)] * 5,
        out_specs=pl.BlockSpec(memory_space=_VMEM),
    )(x_flat, w_conv, b_conv, w_fc, b_fc)


# ----------------------------------------------------------------------------
# Kernel 2: fused LSTM decoder
#   all layers + final vocab projection in one grid-less pallas_call;
#   time recurrence is a statically unrolled in-kernel loop, inter-layer
#   h-sequence lives in a VMEM scratch.
# ----------------------------------------------------------------------------
def make_decoder_kernel(t1, batch, hidden, num_layers):
    gates_w = 4 * hidden

    def kernel(*refs):
        seq_ref = refs[0]                                   # (T1*B, E)
        idx = 1
        layers = []
        for _ in range(num_layers):
            layers.append((refs[idx], refs[idx + 1], refs[idx + 2]))
            idx += 3
        w_out_ref = refs[idx]                               # (H, Vp)
        b_out_ref = refs[idx + 1]                           # (1, Vp)
        logits_ref = refs[idx + 2]                          # (T1*B, Vp)
        hs_ref = refs[idx + 3]                              # (T1*B, H) scratch

        # lane mask selecting the "g" gate band (tanh); others use sigmoid.
        lane = jax.lax.broadcasted_iota(jnp.int32, (batch, gates_w), 1)
        use_tanh = jnp.logical_and(lane >= 2 * hidden, lane < 3 * hidden)

        x_all = seq_ref[...]                                # (T1*B, in)
        for wih_ref, whh_ref, b_ref in layers:
            # Hoisted input->gates projection for ALL timesteps (one MXU pass).
            gx = jnp.dot(x_all, wih_ref[...],
                         preferred_element_type=jnp.float32) + b_ref[...]
            whh = whh_ref[...]                              # (H, 4H)
            h = jnp.zeros((batch, hidden), jnp.float32)     # states=None
            c = jnp.zeros((batch, hidden), jnp.float32)
            for t in range(t1):                             # static unroll
                gates = gx[t * batch:(t + 1) * batch, :] + jnp.dot(
                    h, whh, preferred_element_type=jnp.float32)   # (B, 4H)
                # full-width activations (EUP) + one lane-mask select
                act = jnp.where(use_tanh, jnp.tanh(gates),
                                jax.nn.sigmoid(gates))
                i_g = act[:, 0 * hidden:1 * hidden]
                f_g = act[:, 1 * hidden:2 * hidden]
                g_g = act[:, 2 * hidden:3 * hidden]
                o_g = act[:, 3 * hidden:4 * hidden]
                c = f_g * c + i_g * g_g
                h = o_g * jnp.tanh(c)
                hs_ref[t * batch:(t + 1) * batch, :] = h
            x_all = hs_ref[...]                             # next layer input

        # fused output projection, lane-dense (Vp multiple of 128) store
        logits_ref[...] = (jnp.dot(x_all, w_out_ref[...],
                                   preferred_element_type=jnp.float32)
                           + b_out_ref[...])
    return kernel


def decoder_forward(seq_flat, batch, lstm_layers, w_out_p, b_out_p):
    tb = seq_flat.shape[0]
    t1 = tb // batch
    hidden = lstm_layers[0]["w_hh"].shape[0]
    vocab_p = w_out_p.shape[1]
    num_layers = len(lstm_layers)

    inputs = [seq_flat]
    for layer in lstm_layers:
        inputs += [layer["w_ih"], layer["w_hh"], layer["b"]]
    inputs += [w_out_p, b_out_p]

    return pl.pallas_call(
        make_decoder_kernel(t1, batch, hidden, num_layers),
        out_shape=jax.ShapeDtypeStruct((tb, vocab_p), jnp.float32),
        in_specs=[pl.BlockSpec(memory_space=_VMEM)] * len(inputs),
        out_specs=pl.BlockSpec(memory_space=_VMEM),
        scratch_shapes=[pltpu.VMEM((tb, hidden), jnp.float32)],
    )(*inputs)


# ----------------------------------------------------------------------------
# Full model: CNN_to_LSTM.forward(images, captions)
# ----------------------------------------------------------------------------
def cnn_to_lstm_forward(params, images_nchw, captions):
    # --- CNN_Encoder ---
    B, C, Hh, Ww = images_nchw.shape
    x = jnp.transpose(images_nchw, (0, 2, 3, 1))            # NCHW -> NHWC
    x = x.reshape(B * Hh * Ww, C).astype(jnp.float32)
    enc = encoder_forward(x, params["w_conv"], params["b_conv"],
                          params["w_enc_fc"], params["b_enc_fc"], B)  # (B, E)
    # dropout(0.5): eval-mode identity

    # --- LSTM_Decoder (teacher forcing) ---
    emb = jnp.take(params["embedding"], captions, axis=0)   # (T, B, E)
    # dropout(0.5): eval-mode identity
    seq = jnp.concatenate([enc[None], emb], axis=0)         # (T+1, B, E)
    T1, _, E = seq.shape
    seq_flat = seq.reshape(T1 * B, E)

    # pad vocab to a lane-dense multiple of 128 for the fused output projection
    V = params["w_out"].shape[1]
    Vp = ((V + 127) // 128) * 128
    w_out_p = jnp.pad(params["w_out"], ((0, 0), (0, Vp - V)))
    b_out_p = jnp.pad(params["b_out"], ((0, 0), (0, Vp - V)))

    logits = decoder_forward(seq_flat, B, params["lstm_layers"],
                             w_out_p, b_out_p)               # (T1*B, Vp)
    return logits.reshape(T1, B, Vp)[:, :, :V]               # (T+1, B, V)


# ----------------------------------------------------------------------------
# Deterministic parameter construction
# ----------------------------------------------------------------------------
def make_params(key, in_ch, feat_dim, embed_size, hidden_size, num_layers,
                vocab_size):
    ks = jax.random.split(key, 8 + 3 * num_layers)
    s = 0.05
    params = {
        "w_conv": s * jax.random.normal(ks[0], (in_ch, feat_dim), jnp.float32),
        "b_conv": s * jax.random.normal(ks[1], (1, feat_dim), jnp.float32),
        "w_enc_fc": s * jax.random.normal(ks[2], (feat_dim, embed_size),
                                          jnp.float32),
        "b_enc_fc": s * jax.random.normal(ks[3], (1, embed_size), jnp.float32),
        "embedding": s * jax.random.normal(ks[4], (vocab_size, embed_size),
                                           jnp.float32),
        "w_out": s * jax.random.normal(ks[5], (hidden_size, vocab_size),
                                       jnp.float32),
        "b_out": s * jax.random.normal(ks[6], (1, vocab_size), jnp.float32),
        "lstm_layers": [],
    }
    for l in range(num_layers):
        in_sz = embed_size if l == 0 else hidden_size
        k0, k1, k2 = ks[7 + 3 * l], ks[8 + 3 * l], ks[9 + 3 * l]
        params["lstm_layers"].append({
            # stored pre-transposed: (in, 4H) / (H, 4H); gate order i,f,g,o
            "w_ih": s * jax.random.normal(k0, (in_sz, 4 * hidden_size),
                                          jnp.float32),
            "w_hh": s * jax.random.normal(k1, (hidden_size, 4 * hidden_size),
                                          jnp.float32),
            # combined b_ih + b_hh
            "b": s * jax.random.normal(k2, (1, 4 * hidden_size), jnp.float32),
        })
    return params


if __name__ == "__main__":
    # Small shapes consistent with the module's forward pass.
    B, C, HH, WW = 2, 4, 16, 16          # images (NCHW)
    T = 8                                 # caption length (seq-first)
    feat_dim = 64                         # stand-in for resnet.fc.in_features
    embed_size, hidden_size = 32, 32
    num_layers, vocab_size = 2, 50

    key = jax.random.PRNGKey(0)
    k_img, k_cap, k_par = jax.random.split(key, 3)

    images = jax.random.normal(k_img, (B, C, HH, WW), jnp.float32)
    captions = jax.random.randint(k_cap, (T, B), 0, vocab_size, jnp.int32)
    params = make_params(k_par, C, feat_dim, embed_size, hidden_size,
                         num_layers, vocab_size)

    fwd = jax.jit(cnn_to_lstm_forward)
    outputs = fwd(params, images, captions)
    outputs = jax.block_until_ready(outputs)
    assert outputs.shape == (T + 1, B, vocab_size), outputs.shape
    assert bool(jnp.all(jnp.isfinite(outputs)))
    print("KERNEL_OK")
</pallas_src>

<mosaic_0001>
module attributes {stable_mosaic.version = 11 : i64} {
  func.func @kernel(%arg0: memref<512x4xf32, #tpu.memory_space<vmem>>, %arg1: memref<4x64xf32, #tpu.memory_space<vmem>>, %arg2: memref<1x64xf32, #tpu.memory_space<vmem>>, %arg3: memref<64x32xf32, #tpu.memory_space<vmem>>, %arg4: memref<1x32xf32, #tpu.memory_space<vmem>>, %arg5: memref<2x32xf32, #tpu.memory_space<vmem>>) attributes {dimension_semantics = [], scalar_prefetch = 0 : i64, scratch_operands = 0 : i64, tpu.core_type = #tpu.core_type<tc>} {
    %c0 = arith.constant 0 : index
    %c0_0 = arith.constant 0 : index
    %0 = vector.load %arg0[%c0, %c0_0] : memref<512x4xf32, #tpu.memory_space<vmem>>, vector<512x4xf32>
    %c0_1 = arith.constant 0 : index
    %c0_2 = arith.constant 0 : index
    %1 = vector.load %arg1[%c0_1, %c0_2] : memref<4x64xf32, #tpu.memory_space<vmem>>, vector<4x64xf32>
    %cst = arith.constant dense<0.000000e+00> : vector<512x64xf32>
    %2 = tpu.matmul %0, %1, %cst {dimension_numbers = #tpu.dot_dimension_numbers<[1], [0], [0], [1], [0, 0, 1, 1], [], []>} : vector<512x4xf32>, vector<4x64xf32>, vector<512x64xf32> -> vector<512x64xf32>
    %c0_3 = arith.constant 0 : index
    %c0_4 = arith.constant 0 : index
    %3 = vector.load %arg2[%c0_3, %c0_4] : memref<1x64xf32, #tpu.memory_space<vmem>>, vector<1x64xf32>
    %4 = vector.broadcast %3 : vector<1x64xf32> to vector<512x64xf32>
    %5 = arith.addf %2, %4 : vector<512x64xf32>
    %cst_5 = arith.constant 0.000000e+00 : f32
    %6 = vector.broadcast %cst_5 : f32 to vector<512x64xf32>
    %7 = arith.maximumf %5, %6 : vector<512x64xf32>
    %8 = vector.extract_strided_slice %7 {offsets = [0, 0], sizes = [256, 64], strides = [1, 1]} : vector<512x64xf32> to vector<256x64xf32>
    %cst_6 = arith.constant dense<0.000000e+00> : vector<64xf32>
    %9 = vector.multi_reduction <add>, %8, %cst_6 [0] : vector<256x64xf32> to vector<64xf32>
    %10 = vector.shape_cast %9 : vector<64xf32> to vector<1x64xf32>
    %cst_7 = arith.constant 2.560000e+02 : f32
    %11 = vector.broadcast %cst_7 : f32 to vector<1x64xf32>
    %12 = arith.divf %10, %11 : vector<1x64xf32>
    %13 = vector.extract_strided_slice %7 {offsets = [256, 0], sizes = [256, 64], strides = [1, 1]} : vector<512x64xf32> to vector<256x64xf32>
    %cst_8 = arith.constant dense<0.000000e+00> : vector<64xf32>
    %14 = vector.multi_reduction <add>, %13, %cst_8 [0] : vector<256x64xf32> to vector<64xf32>
    %15 = vector.shape_cast %14 : vector<64xf32> to vector<1x64xf32>
    %cst_9 = arith.constant 2.560000e+02 : f32
    %16 = vector.broadcast %cst_9 : f32 to vector<1x64xf32>
    %17 = arith.divf %15, %16 : vector<1x64xf32>
    %18 = tpu.concatenate %12, %17 in 0 : vector<1x64xf32>, vector<1x64xf32> -> vector<2x64xf32>
    %c0_10 = arith.constant 0 : index
    %c0_11 = arith.constant 0 : index
    %19 = vector.load %arg3[%c0_10, %c0_11] : memref<64x32xf32, #tpu.memory_space<vmem>>, vector<64x32xf32>
    %cst_12 = arith.constant dense<0.000000e+00> : vector<2x32xf32>
    %20 = tpu.matmul %18, %19, %cst_12 {dimension_numbers = #tpu.dot_dimension_numbers<[1], [0], [0], [1], [0, 0, 1, 1], [], []>} : vector<2x64xf32>, vector<64x32xf32>, vector<2x32xf32> -> vector<2x32xf32>
    %c0_13 = arith.constant 0 : index
    %c0_14 = arith.constant 0 : index
    %21 = vector.load %arg4[%c0_13, %c0_14] : memref<1x32xf32, #tpu.memory_space<vmem>>, vector<1x32xf32>
    %22 = vector.broadcast %21 : vector<1x32xf32> to vector<2x32xf32>
    %23 = arith.addf %20, %22 : vector<2x32xf32>
    %c0_15 = arith.constant 0 : index
    %c0_16 = arith.constant 0 : index
    %24 = vector.load %arg5[%c0_15, %c0_16] : memref<2x32xf32, #tpu.memory_space<vmem>>, vector<2x32xf32>
    tpu.vector_store %arg5[%c0_15, %c0_16], %23 {strides = array<i32>} : memref<2x32xf32, #tpu.memory_space<vmem>>, vector<2x32xf32>,
    return
  }
}

module attributes {stable_mosaic.version = 11 : i64} {
  func.func @kernel(%arg0: memref<18x32xf32, #tpu.memory_space<vmem>>, %arg1: memref<32x128xf32, #tpu.memory_space<vmem>>, %arg2: memref<32x128xf32, #tpu.memory_space<vmem>>, %arg3: memref<1x128xf32, #tpu.memory_space<vmem>>, %arg4: memref<32x128xf32, #tpu.memory_space<vmem>>, %arg5: memref<32x128xf32, #tpu.memory_space<vmem>>, %arg6: memref<1x128xf32, #tpu.memory_space<vmem>>, %arg7: memref<32x128xf32, #tpu.memory_space<vmem>>, %arg8: memref<1x128xf32, #tpu.memory_space<vmem>>, %arg9: memref<18x128xf32, #tpu.memory_space<vmem>>, %arg10: memref<18x32xf32, #tpu.memory_space<vmem>>) attributes {dimension_semantics = [], scalar_prefetch = 0 : i64, scratch_operands = 1 : i64, tpu.core_type = #tpu.core_type<tc>} {
    %0 = tpu.iota {dimensions = array<i32: 1>} : vector<2x128xi32>
    %c64_i32 = arith.constant 64 : i32
    %1 = vector.broadcast %c64_i32 : i32 to vector<2x128xi32>
    %2 = arith.cmpi sge, %0, %1 : vector<2x128xi32>
    %c96_i32 = arith.constant 96 : i32
    %3 = vector.broadcast %c96_i32 : i32 to vector<2x128xi32>
    %4 = arith.cmpi slt, %0, %3 : vector<2x128xi32>
    %5 = arith.andi %2, %4 : vector<2x128xi1>
    %c0 = arith.constant 0 : index
    %c0_0 = arith.constant 0 : index
    %6 = vector.load %arg0[%c0, %c0_0] : memref<18x32xf32, #tpu.memory_space<vmem>>, vector<18x32xf32>
    %c0_1 = arith.constant 0 : index
    %c0_2 = arith.constant 0 : index
    %7 = vector.load %arg1[%c0_1, %c0_2] : memref<32x128xf32, #tpu.memory_space<vmem>>, vector<32x128xf32>
    %cst = arith.constant dense<0.000000e+00> : vector<18x128xf32>
    %8 = tpu.matmul %6, %7, %cst {dimension_numbers = #tpu.dot_dimension_numbers<[1], [0], [0], [1], [0, 0, 1, 1], [], []>} : vector<18x32xf32>, vector<32x128xf32>, vector<18x128xf32> -> vector<18x128xf32>
    %c0_3 = arith.constant 0 : index
    %c0_4 = arith.constant 0 : index
    %9 = vector.load %arg3[%c0_3, %c0_4] : memref<1x128xf32, #tpu.memory_space<vmem>>, vector<1x128xf32>
    %10 = vector.broadcast %9 : vector<1x128xf32> to vector<18x128xf32>
    %11 = arith.addf %8, %10 : vector<18x128xf32>
    %c0_5 = arith.constant 0 : index
    %c0_6 = arith.constant 0 : index
    %12 = vector.load %arg2[%c0_5, %c0_6] : memref<32x128xf32, #tpu.memory_space<vmem>>, vector<32x128xf32>
    %cst_7 = arith.constant 0.000000e+00 : f32
    %13 = vector.broadcast %cst_7 : f32 to vector<2x32xf32>
    %cst_8 = arith.constant 0.000000e+00 : f32
    %14 = vector.broadcast %cst_8 : f32 to vector<2x32xf32>
    %15 = vector.extract_strided_slice %11 {offsets = [0, 0], sizes = [2, 128], strides = [1, 1]} : vector<18x128xf32> to vector<2x128xf32>
    %cst_9 = arith.constant dense<0.000000e+00> : vector<2x128xf32>
    %16 = tpu.matmul %13, %12, %cst_9 {dimension_numbers = #tpu.dot_dimension_numbers<[1], [0], [0], [1], [0, 0, 1, 1], [], []>} : vector<2x32xf32>, vector<32x128xf32>, vector<2x128xf32> -> vector<2x128xf32>
    %17 = arith.addf %15, %16 : vector<2x128xf32>
    %18 = math.tanh %17 : vector<2x128xf32>
    %19 = arith.negf %17 : vector<2x128xf32>
    %20 = math.exp %19 : vector<2x128xf32>
    %cst_10 = arith.constant 1.000000e+00 : f32
    %21 = vector.broadcast %cst_10 : f32 to vector<2x128xf32>
    %22 = arith.addf %21, %20 : vector<2x128xf32>
    %23 = arith.divf %21, %22 : vector<2x128xf32>
    %24 = arith.select %5, %18, %23 : vector<2x128xi1>, vector<2x128xf32>
    %25 = vector.extract_strided_slice %24 {offsets = [0, 0], sizes = [2, 32], strides = [1, 1]} : vector<2x128xf32> to vector<2x32xf32>
    %26 = vector.extract_strided_slice %24 {offsets = [0, 32], sizes = [2, 32], strides = [1, 1]} : vector<2x128xf32> to vector<2x32xf32>
    %27 = vector.extract_strided_slice %24 {offsets = [0, 64], sizes = [2, 32], strides = [1, 1]} : vector<2x128xf32> to vector<2x32xf32>
    %28 = vector.extract_strided_slice %24 {offsets = [0, 96], sizes = [2, 32], strides = [1, 1]} : vector<2x128xf32> to vector<2x32xf32>
    %29 = arith.mulf %26, %14 : vector<2x32xf32>
    %30 = arith.mulf %25, %27 : vector<2x32xf32>
    %31 = arith.addf %29, %30 : vector<2x32xf32>
    %32 = math.tanh %31 : vector<2x32xf32>
    %33 = arith.mulf %28, %32 : vector<2x32xf32>
    %c0_11 = arith.constant 0 : index
    %c0_12 = arith.constant 0 : index
    %34 = vector.load %arg10[%c0_11, %c0_12] : memref<18x32xf32, #tpu.memory_space<vmem>>, vector<2x32xf32>
    tpu.vector_store %arg10[%c0_11, %c0_12], %33 {strides = array<i32>} : memref<18x32xf32, #tpu.memory_space<vmem>>, vector<2x32xf32>,
    %35 = vector.extract_strided_slice %11 {offsets = [2, 0], sizes = [2, 128], strides = [1, 1]} : vector<18x128xf32> to vector<2x128xf32>
    %cst_13 = arith.constant dense<0.000000e+00> : vector<2x128xf32>
    %36 = tpu.matmul %33, %12, %cst_13 {dimension_numbers = #tpu.dot_dimension_numbers<[1], [0], [0], [1], [0, 0, 1, 1], [], []>} : vector<2x32xf32>, vector<32x128xf32>, vector<2x128xf32> -> vector<2x128xf32>
    %37 = arith.addf %35, %36 : vector<2x128xf32>
    %38 = math.tanh %37 : vector<2x128xf32>
    %39 = arith.negf %37 : vector<2x128xf32>
    %40 = math.exp %39 : vector<2x128xf32>
    %cst_14 = arith.constant 1.000000e+00 : f32
    %41 = vector.broadcast %cst_14 : f32 to vector<2x128xf32>
    %42 = arith.addf %41, %40 : vector<2x128xf32>
    %43 = arith.divf %41, %42 : vector<2x128xf32>
    %44 = arith.select %5, %38, %43 : vector<2x128xi1>, vector<2x128xf32>
    %45 = vector.extract_strided_slice %44 {offsets = [0, 0], sizes = [2, 32], strides = [1, 1]} : vector<2x128xf32> to vector<2x32xf32>
    %46 = vector.extract_strided_slice %44 {offsets = [0, 32], sizes = [2, 32], strides = [1, 1]} : vector<2x128xf32> to vector<2x32xf32>
    %47 = vector.extract_strided_slice %44 {offsets = [0, 64], sizes = [2, 32], strides = [1, 1]} : vector<2x128xf32> to vector<2x32xf32>
    %48 = vector.extract_strided_slice %44 {offsets = [0, 96], sizes = [2, 32], strides = [1, 1]} : vector<2x128xf32> to vector<2x32xf32>
    %49 = arith.mulf %46, %31 : vector<2x32xf32>
    %50 = arith.mulf %45, %47 : vector<2x32xf32>
    %51 = arith.addf %49, %50 : vector<2x32xf32>
    %52 = math.tanh %51 : vector<2x32xf32>
    %53 = arith.mulf %48, %52 : vector<2x32xf32>
    %c2 = arith.constant 2 : index
    %c0_15 = arith.constant 0 : index
    %54 = vector.load %arg10[%c2, %c0_15] : memref<18x32xf32, #tpu.memory_space<vmem>>, vector<2x32xf32>
    tpu.vector_store %arg10[%c2, %c0_15], %53 {strides = array<i32>} : memref<18x32xf32, #tpu.memory_space<vmem>>, vector<2x32xf32>,
    %55 = vector.extract_strided_slice %11 {offsets = [4, 0], sizes = [2, 128], strides = [1, 1]} : vector<18x128xf32> to vector<2x128xf32>
    %cst_16 = arith.constant dense<0.000000e+00> : vector<2x128xf32>
    %56 = tpu.matmul %53, %12, %cst_16 {dimension_numbers = #tpu.dot_dimension_numbers<[1], [0], [0], [1], [0, 0, 1, 1], [], []>} : vector<2x32xf32>, vector<32x128xf32>, vector<2x128xf32> -> vector<2x128xf32>
    %57 = arith.addf %55, %56 : vector<2x128xf32>
    %58 = math.tanh %57 : vector<2x128xf32>
    %59 = arith.negf %57 : vector<2x128xf32>
    %60 = math.exp %59 : vector<2x128xf32>
    %cst_17 = arith.constant 1.000000e+00 : f32
    %61 = vector.broadcast %cst_17 : f32 to vector<2x128xf32>
    %62 = arith.addf %61, %60 : vector<2x128xf32>
    %63 = arith.divf %61, %62 : vector<2x128xf32>
    %64 = arith.select %5, %58, %63 : vector<2x128xi1>, vector<2x128xf32>
    %65 = vector.extract_strided_slice %64 {offsets = [0, 0], sizes = [2, 32], strides = [1, 1]} : vector<2x128xf32> to vector<2x32xf32>
    %66 = vector.extract_strided_slice %64 {offsets = [0, 32], sizes = [2, 32], strides = [1, 1]} : vector<2x128xf32> to vector<2x32xf32>
    %67 = vector.extract_strided_slice %64 {offsets = [0, 64], sizes = [2, 32], strides = [1, 1]} : vector<2x128xf32> to vector<2x32xf32>
    %68 = vector.extract_strided_slice %64 {offsets = [0, 96], sizes = [2, 32], strides = [1, 1]} : vector<2x128xf32> to vector<2x32xf32>
    %69 = arith.mulf %66, %51 : vector<2x32xf32>
    %70 = arith.mulf %65, %67 : vector<2x32xf32>
    %71 = arith.addf %69, %70 : vector<2x32xf32>
    %72 = math.tanh %71 : vector<2x32xf32>
    %73 = arith.mulf %68, %72 : vector<2x32xf32>
    %c4 = arith.constant 4 : index
    %c0_18 = arith.constant 0 : index
    %74 = vector.load %arg10[%c4, %c0_18] : memref<18x32xf32, #tpu.memory_space<vmem>>, vector<2x32xf32>
    tpu.vector_store %arg10[%c4, %c0_18], %73 {strides = array<i32>} : memref<18x32xf32, #tpu.memory_space<vmem>>, vector<2x32xf32>,
    %75 = vector.extract_strided_slice %11 {offsets = [6, 0], sizes = [2, 128], strides = [1, 1]} : vector<18x128xf32> to vector<2x128xf32>
    %cst_19 = arith.constant dense<0.000000e+00> : vector<2x128xf32>
    %76 = tpu.matmul %73, %12, %cst_19 {dimension_numbers = #tpu.dot_dimension_numbers<[1], [0], [0], [1], [0, 0, 1, 1], [], []>} : vector<2x32xf32>, vector<32x128xf32>, vector<2x128xf32> -> vector<2x128xf32>
    %77 = arith.addf %75, %76 : vector<2x128xf32>
    %78 = math.tanh %77 : vector<2x128xf32>
    %79 = arith.negf %77 : vector<2x128xf32>
    %80 = math.exp %79 : vector<2x128xf32>
    %cst_20 = arith.constant 1.000000e+00 : f32
    %81 = vector.broadcast %cst_20 : f32 to vector<2x128xf32>
    %82 = arith.addf %81, %80 : vector<2x128xf32>
    %83 = arith.divf %81, %82 : vector<2x128xf32>
    %84 = arith.select %5, %78, %83 : vector<2x128xi1>, vector<2x128xf32>
    %85 = vector.extract_strided_slice %84 {offsets = [0, 0], sizes = [2, 32], strides = [1, 1]} : vector<2x128xf32> to vector<2x32xf32>
    %86 = vector.extract_strided_slice %84 {offsets = [0, 32], sizes = [2, 32], strides = [1, 1]} : vector<2x128xf32> to vector<2x32xf32>
    %87 = vector.extract_strided_slice %84 {offsets = [0, 64], sizes = [2, 32], strides = [1, 1]} : vector<2x128xf32> to vector<2x32xf32>
    %88 = vector.extract_strided_slice %84 {offsets = [0, 96], sizes = [2, 32], strides = [1, 1]} : vector<2x128xf32> to vector<2x32xf32>
    %89 = arith.mulf %86, %71 : vector<2x32xf32>
    %90 = arith.mulf %85, %87 : vector<2x32xf32>
    %91 = arith.addf %89, %90 : vector<2x32xf32>
    %92 = math.tanh %91 : vector<2x32xf32>
    %93 = arith.mulf %88, %92 : vector<2x32xf32>
    %c6 = arith.constant 6 : index
    %c0_21 = arith.constant 0 : index
    %94 = vector.load %arg10[%c6, %c0_21] : memref<18x32xf32, #tpu.memory_space<vmem>>, vector<2x32xf32>
    tpu.vector_store %arg10[%c6, %c0_21], %93 {strides = array<i32>} : memref<18x32xf32, #tpu.memory_space<vmem>>, vector<2x32xf32>,
    %95 = vector.extract_strided_slice %11 {offsets = [8, 0], sizes = [2, 128], strides = [1, 1]} : vector<18x128xf32> to vector<2x128xf32>
    %cst_22 = arith.constant dense<0.000000e+00> : vector<2x128xf32>
    %96 = tpu.matmul %93, %12, %cst_22 {dimension_numbers = #tpu.dot_dimension_numbers<[1], [0], [0], [1], [0, 0, 1, 1], [], []>} : vector<2x32xf32>, vector<32x128xf32>, vector<2x128xf32> -> vector<2x128xf32>
    %97 = arith.addf %95, %96 : vector<2x128xf32>
    %98 = math.tanh %97 : vector<2x128xf32>
    %99 = arith.negf %97 : vector<2x128xf32>
    %100 = math.exp %99 : vector<2x128xf32>
    %cst_23 = arith.constant 1.000000e+00 : f32
    %101 = vector.broadcast %cst_23 : f32 to vector<2x128xf32>
    %102 = arith.addf %101, %100 : vector<2x128xf32>
    %103 = arith.divf %101, %102 : vector<2x128xf32>
    %104 = arith.select %5, %98, %103 : vector<2x128xi1>, vector<2x128xf32>
    %105 = vector.extract_strided_slice %104 {offsets = [0, 0], sizes = [2, 32], strides = [1, 1]} : vector<2x128xf32> to vector<2x32xf32>
    %106 = vector.extract_strided_slice %104 {offsets = [0, 32], sizes = [2, 32], strides = [1, 1]} : vector<2x128xf32> to vector<2x32xf32>
    %107 = vector.extract_strided_slice %104 {offsets = [0, 64], sizes = [2, 32], strides = [1, 1]} : vector<2x128xf32> to vector<2x32xf32>
    %108 = vector.extract_strided_slice %104 {offsets = [0, 96], sizes = [2, 32], strides = [1, 1]} : vector<2x128xf32> to vector<2x32xf32>
    %109 = arith.mulf %106, %91 : vector<2x32xf32>
    %110 = arith.mulf %105, %107 : vector<2x32xf32>
    %111 = arith.addf %109, %110 : vector<2x32xf32>
    %112 = math.tanh %111 : vector<2x32xf32>
    %113 = arith.mulf %108, %112 : vector<2x32xf32>
    %c8 = arith.constant 8 : index
    %c0_24 = arith.constant 0 : index
    %114 = vector.load %arg10[%c8, %c0_24] : memref<18x32xf32, #tpu.memory_space<vmem>>, vector<2x32xf32>
    tpu.vector_store %arg10[%c8, %c0_24], %113 {strides = array<i32>} : memref<18x32xf32, #tpu.memory_space<vmem>>, vector<2x32xf32>,
    %115 = vector.extract_strided_slice %11 {offsets = [10, 0], sizes = [2, 128], strides = [1, 1]} : vector<18x128xf32> to vector<2x128xf32>
    %cst_25 = arith.constant dense<0.000000e+00> : vector<2x128xf32>
    %116 = tpu.matmul %113, %12, %cst_25 {dimension_numbers = #tpu.dot_dimension_numbers<[1], [0], [0], [1], [0, 0, 1, 1], [], []>} : vector<2x32xf32>, vector<32x128xf32>, vector<2x128xf32> -> vector<2x128xf32>
    %117 = arith.addf %115, %116 : vector<2x128xf32>
    %118 = math.tanh %117 : vector<2x128xf32>
    %119 = arith.negf %117 : vector<2x128xf32>
    %120 = math.exp %119 : vector<2x128xf32>
    %cst_26 = arith.constant 1.000000e+00 : f32
    %121 = vector.broadcast %cst_26 : f32 to vector<2x128xf32>
    %122 = arith.addf %121, %120 : vector<2x128xf32>
    %123 = arith.divf %121, %122 : vector<2x128xf32>
    %124 = arith.select %5, %118, %123 : vector<2x128xi1>, vector<2x128xf32>
    %125 = vector.extract_strided_slice %124 {offsets = [0, 0], sizes = [2, 32], strides = [1, 1]} : vector<2x128xf32> to vector<2x32xf32>
    %126 = vector.extract_strided_slice %124 {offsets = [0, 32], sizes = [2, 32], strides = [1, 1]} : vector<2x128xf32> to vector<2x32xf32>
    %127 = vector.extract_strided_slice %124 {offsets = [0, 64], sizes = [2, 32], strides = [1, 1]} : vector<2x128xf32> to vector<2x32xf32>
    %128 = vector.extract_strided_slice %124 {offsets = [0, 96], sizes = [2, 32], strides = [1, 1]} : vector<2x128xf32> to vector<2x32xf32>
    %129 = arith.mulf %126, %111 : vector<2x32xf32>
    %130 = arith.mulf %125, %127 : vector<2x32xf32>
    %131 = arith.addf %129, %130 : vector<2x32xf32>
    %132 = math.tanh %131 : vector<2x32xf32>
    %133 = arith.mulf %128, %132 : vector<2x32xf32>
    %c10 = arith.constant 10 : index
    %c0_27 = arith.constant 0 : index
    %134 = vector.load %arg10[%c10, %c0_27] : memref<18x32xf32, #tpu.memory_space<vmem>>, vector<2x32xf32>
    tpu.vector_store %arg10[%c10, %c0_27], %133 {strides = array<i32>} : memref<18x32xf32, #tpu.memory_space<vmem>>, vector<2x32xf32>,
    %135 = vector.extract_strided_slice %11 {offsets = [12, 0], sizes = [2, 128], strides = [1, 1]} : vector<18x128xf32> to vector<2x128xf32>
    %cst_28 = arith.constant dense<0.000000e+00> : vector<2x128xf32>
    %136 = tpu.matmul %133, %12, %cst_28 {dimension_numbers = #tpu.dot_dimension_numbers<[1], [0], [0], [1], [0, 0, 1, 1], [], []>} : vector<2x32xf32>, vector<32x128xf32>, vector<2x128xf32> -> vector<2x128xf32>
    %137 = arith.addf %135, %136 : vector<2x128xf32>
    %138 = math.tanh %137 : vector<2x128xf32>
    %139 = arith.negf %137 : vector<2x128xf32>
    %140 = math.exp %139 : vector<2x128xf32>
    %cst_29 = arith.constant 1.000000e+00 : f32
    %141 = vector.broadcast %cst_29 : f32 to vector<2x128xf32>
    %142 = arith.addf %141, %140 : vector<2x128xf32>
    %143 = arith.divf %141, %142 : vector<2x128xf32>
    %144 = arith.select %5, %138, %143 : vector<2x128xi1>, vector<2x128xf32>
    %145 = vector.extract_strided_slice %144 {offsets = [0, 0], sizes = [2, 32], strides = [1, 1]} : vector<2x128xf32> to vector<2x32xf32>
    %146 = vector.extract_strided_slice %144 {offsets = [0, 32], sizes = [2, 32], strides = [1, 1]} : vector<2x128xf32> to vector<2x32xf32>
    %147 = vector.extract_strided_slice %144 {offsets = [0, 64], sizes = [2, 32], strides = [1, 1]} : vector<2x128xf32> to vector<2x32xf32>
    %148 = vector.extract_strided_slice %144 {offsets = [0, 96], sizes = [2, 32], strides = [1, 1]} : vector<2x128xf32> to vector<2x32xf32>
    %149 = arith.mulf %146, %131 : vector<2x32xf32>
    %150 = arith.mulf %145, %147 : vector<2x32xf32>
    %151 = arith.addf %149, %150 : vector<2x32xf32>
    %152 = math.tanh %151 : vector<2x32xf32>
    %153 = arith.mulf %148, %152 : vector<2x32xf32>
    %c12 = arith.constant 12 : index
    %c0_30 = arith.constant 0 : index
    %154 = vector.load %arg10[%c12, %c0_30] : memref<18x32xf32, #tpu.memory_space<vmem>>, vector<2x32xf32>
    tpu.vector_store %arg10[%c12, %c0_30], %153 {strides = array<i32>} : memref<18x32xf32, #tpu.memory_space<vmem>>, vector<2x32xf32>,
    %155 = vector.extract_strided_slice %11 {offsets = [14, 0], sizes = [2, 128], strides = [1, 1]} : vector<18x128xf32> to vector<2x128xf32>
    %cst_31 = arith.constant dense<0.000000e+00> : vector<2x128xf32>
    %156 = tpu.matmul %153, %12, %cst_31 {dimension_numbers = #tpu.dot_dimension_numbers<[1], [0], [0], [1], [0, 0, 1, 1], [], []>} : vector<2x32xf32>, vector<32x128xf32>, vector<2x128xf32> -> vector<2x128xf32>
    %157 = arith.addf %155, %156 : vector<2x128xf32>
    %158 = math.tanh %157 : vector<2x128xf32>
    %159 = arith.negf %157 : vector<2x128xf32>
    %160 = math.exp %159 : vector<2x128xf32>
    %cst_32 = arith.constant 1.000000e+00 : f32
    %161 = vector.broadcast %cst_32 : f32 to vector<2x128xf32>
    %162 = arith.addf %161, %160 : vector<2x128xf32>
    %163 = arith.divf %161, %162 : vector<2x128xf32>
    %164 = arith.select %5, %158, %163 : vector<2x128xi1>, vector<2x128xf32>
    %165 = vector.extract_strided_slice %164 {offsets = [0, 0], sizes = [2, 32], strides = [1, 1]} : vector<2x128xf32> to vector<2x32xf32>
    %166 = vector.extract_strided_slice %164 {offsets = [0, 32], sizes = [2, 32], strides = [1, 1]} : vector<2x128xf32> to vector<2x32xf32>
    %167 = vector.extract_strided_slice %164 {offsets = [0, 64], sizes = [2, 32], strides = [1, 1]} : vector<2x128xf32> to vector<2x32xf32>
    %168 = vector.extract_strided_slice %164 {offsets = [0, 96], sizes = [2, 32], strides = [1, 1]} : vector<2x128xf32> to vector<2x32xf32>
    %169 = arith.mulf %166, %151 : vector<2x32xf32>
    %170 = arith.mulf %165, %167 : vector<2x32xf32>
    %171 = arith.addf %169, %170 : vector<2x32xf32>
    %172 = math.tanh %171 : vector<2x32xf32>
    %173 = arith.mulf %168, %172 : vector<2x32xf32>
    %c14 = arith.constant 14 : index
    %c0_33 = arith.constant 0 : index
    %174 = vector.load %arg10[%c14, %c0_33] : memref<18x32xf32, #tpu.memory_space<vmem>>, vector<2x32xf32>
    tpu.vector_store %arg10[%c14, %c0_33], %173 {strides = array<i32>} : memref<18x32xf32, #tpu.memory_space<vmem>>, vector<2x32xf32>,
    %175 = vector.extract_strided_slice %11 {offsets = [16, 0], sizes = [2, 128], strides = [1, 1]} : vector<18x128xf32> to vector<2x128xf32>
    %cst_34 = arith.constant dense<0.000000e+00> : vector<2x128xf32>
    %176 = tpu.matmul %173, %12, %cst_34 {dimension_numbers = #tpu.dot_dimension_numbers<[1], [0], [0], [1], [0, 0, 1, 1], [], []>} : vector<2x32xf32>, vector<32x128xf32>, vector<2x128xf32> -> vector<2x128xf32>
    %177 = arith.addf %175, %176 : vector<2x128xf32>
    %178 = math.tanh %177 : vector<2x128xf32>
    %179 = arith.negf %177 : vector<2x128xf32>
    %180 = math.exp %179 : vector<2x128xf32>
    %cst_35 = arith.constant 1.000000e+00 : f32
    %181 = vector.broadcast %cst_35 : f32 to vector<2x128xf32>
    %182 = arith.addf %181, %180 : vector<2x128xf32>
    %183 = arith.divf %181, %182 : vector<2x128xf32>
    %184 = arith.select %5, %178, %183 : vector<2x128xi1>, vector<2x128xf32>
    %185 = vector.extract_strided_slice %184 {offsets = [0, 0], sizes = [2, 32], strides = [1, 1]} : vector<2x128xf32> to vector<2x32xf32>
    %186 = vector.extract_strided_slice %184 {offsets = [0, 32], sizes = [2, 32], strides = [1, 1]} : vector<2x128xf32> to vector<2x32xf32>
    %187 = vector.extract_strided_slice %184 {offsets = [0, 64], sizes = [2, 32], strides = [1, 1]} : vector<2x128xf32> to vector<2x32xf32>
    %188 = vector.extract_strided_slice %184 {offsets = [0, 96], sizes = [2, 32], strides = [1, 1]} : vector<2x128xf32> to vector<2x32xf32>
    %189 = arith.mulf %186, %171 : vector<2x32xf32>
    %190 = arith.mulf %185, %187 : vector<2x32xf32>
    %191 = arith.addf %189, %190 : vector<2x32xf32>
    %192 = math.tanh %191 : vector<2x32xf32>
    %193 = arith.mulf %188, %192 : vector<2x32xf32>
    %c16 = arith.constant 16 : index
    %c0_36 = arith.constant 0 : index
    %194 = vector.load %arg10[%c16, %c0_36] : memref<18x32xf32, #tpu.memory_space<vmem>>, vector<2x32xf32>
    tpu.vector_store %arg10[%c16, %c0_36], %193 {strides = array<i32>} : memref<18x32xf32, #tpu.memory_space<vmem>>, vector<2x32xf32>,
    %c0_37 = arith.constant 0 : index
    %c0_38 = arith.constant 0 : index
    %195 = vector.load %arg10[%c0_37, %c0_38] : memref<18x32xf32, #tpu.memory_space<vmem>>, vector<18x32xf32>
    %c0_39 = arith.constant 0 : index
    %c0_40 = arith.constant 0 : index
    %196 = vector.load %arg4[%c0_39, %c0_40] : memref<32x128xf32, #tpu.memory_space<vmem>>, vector<32x128xf32>
    %cst_41 = arith.constant dense<0.000000e+00> : vector<18x128xf32>
    %197 = tpu.matmul %195, %196, %cst_41 {dimension_numbers = #tpu.dot_dimension_numbers<[1], [0], [0], [1], [0, 0, 1, 1], [], []>} : vector<18x32xf32>, vector<32x128xf32>, vector<18x128xf32> -> vector<18x128xf32>
    %c0_42 = arith.constant 0 : index
    %c0_43 = arith.constant 0 : index
    %198 = vector.load %arg6[%c0_42, %c0_43] : memref<1x128xf32, #tpu.memory_space<vmem>>, vector<1x128xf32>
    %199 = vector.broadcast %198 : vector<1x128xf32> to vector<18x128xf32>
    %200 = arith.addf %197, %199 : vector<18x128xf32>
    %c0_44 = arith.constant 0 : index
    %c0_45 = arith.constant 0 : index
    %201 = vector.load %arg5[%c0_44, %c0_45] : memref<32x128xf32, #tpu.memory_space<vmem>>, vector<32x128xf32>
    %cst_46 = arith.constant 0.000000e+00 : f32
    %202 = vector.broadcast %cst_46 : f32 to vector<2x32xf32>
    %cst_47 = arith.constant 0.000000e+00 : f32
    %203 = vector.broadcast %cst_47 : f32 to vector<2x32xf32>
    %204 = vector.extract_strided_slice %200 {offsets = [0, 0], sizes = [2, 128], strides = [1, 1]} : vector<18x128xf32> to vector<2x128xf32>
    %cst_48 = arith.constant dense<0.000000e+00> : vector<2x128xf32>
    %205 = tpu.matmul %202, %201, %cst_48 {dimension_numbers = #tpu.dot_dimension_numbers<[1], [0], [0], [1], [0, 0, 1, 1], [], []>} : vector<2x32xf32>, vector<32x128xf32>, vector<2x128xf32> -> vector<2x128xf32>
    %206 = arith.addf %204, %205 : vector<2x128xf32>
    %207 = math.tanh %206 : vector<2x128xf32>
    %208 = arith.negf %206 : vector<2x128xf32>
    %209 = math.exp %208 : vector<2x128xf32>
    %cst_49 = arith.constant 1.000000e+00 : f32
    %210 = vector.broadcast %cst_49 : f32 to vector<2x128xf32>
    %211 = arith.addf %210, %209 : vector<2x128xf32>
    %212 = arith.divf %210, %211 : vector<2x128xf32>
    %213 = arith.select %5, %207, %212 : vector<2x128xi1>, vector<2x128xf32>
    %214 = vector.extract_strided_slice %213 {offsets = [0, 0], sizes = [2, 32], strides = [1, 1]} : vector<2x128xf32> to vector<2x32xf32>
    %215 = vector.extract_strided_slice %213 {offsets = [0, 32], sizes = [2, 32], strides = [1, 1]} : vector<2x128xf32> to vector<2x32xf32>
    %216 = vector.extract_strided_slice %213 {offsets = [0, 64], sizes = [2, 32], strides = [1, 1]} : vector<2x128xf32> to vector<2x32xf32>
    %217 = vector.extract_strided_slice %213 {offsets = [0, 96], sizes = [2, 32], strides = [1, 1]} : vector<2x128xf32> to vector<2x32xf32>
    %218 = arith.mulf %215, %203 : vector<2x32xf32>
    %219 = arith.mulf %214, %216 : vector<2x32xf32>
    %220 = arith.addf %218, %219 : vector<2x32xf32>
    %221 = math.tanh %220 : vector<2x32xf32>
    %222 = arith.mulf %217, %221 : vector<2x32xf32>
    %c0_50 = arith.constant 0 : index
    %c0_51 = arith.constant 0 : index
    %223 = vector.load %arg10[%c0_50, %c0_51] : memref<18x32xf32, #tpu.memory_space<vmem>>, vector<2x32xf32>
    tpu.vector_store %arg10[%c0_50, %c0_51], %222 {strides = array<i32>} : memref<18x32xf32, #tpu.memory_space<vmem>>, vector<2x32xf32>,
    %224 = vector.extract_strided_slice %200 {offsets = [2, 0], sizes = [2, 128], strides = [1, 1]} : vector<18x128xf32> to vector<2x128xf32>
    %cst_52 = arith.constant dense<0.000000e+00> : vector<2x128xf32>
    %225 = tpu.matmul %222, %201, %cst_52 {dimension_numbers = #tpu.dot_dimension_numbers<[1], [0], [0], [1], [0, 0, 1, 1], [], []>} : vector<2x32xf32>, vector<32x128xf32>, vector<2x128xf32> -> vector<2x128xf32>
    %226 = arith.addf %224, %225 : vector<2x128xf32>
    %227 = math.tanh %226 : vector<2x128xf32>
    %228 = arith.negf %226 : vector<2x128xf32>
    %229 = math.exp %228 : vector<2x128xf32>
    %cst_53 = arith.constant 1.000000e+00 : f32
    %230 = vector.broadcast %cst_53 : f32 to vector<2x128xf32>
    %231 = arith.addf %230, %229 : vector<2x128xf32>
    %232 = arith.divf %230, %231 : vector<2x128xf32>
    %233 = arith.select %5, %227, %232 : vector<2x128xi1>, vector<2x128xf32>
    %234 = vector.extract_strided_slice %233 {offsets = [0, 0], sizes = [2, 32], strides = [1, 1]} : vector<2x128xf32> to vector<2x32xf32>
    %235 = vector.extract_strided_slice %233 {offsets = [0, 32], sizes = [2, 32], strides = [1, 1]} : vector<2x128xf32> to vector<2x32xf32>
    %236 = vector.extract_strided_slice %233 {offsets = [0, 64], sizes = [2, 32], strides = [1, 1]} : vector<2x128xf32> to vector<2x32xf32>
    %237 = vector.extract_strided_slice %233 {offsets = [0, 96], sizes = [2, 32], strides = [1, 1]} : vector<2x128xf32> to vector<2x32xf32>
    %238 = arith.mulf %235, %220 : vector<2x32xf32>
    %239 = arith.mulf %234, %236 : vector<2x32xf32>
    %240 = arith.addf %238, %239 : vector<2x32xf32>
    %241 = math.tanh %240 : vector<2x32xf32>
    %242 = arith.mulf %237, %241 : vector<2x32xf32>
    %c2_54 = arith.constant 2 : index
    %c0_55 = arith.constant 0 : index
    %243 = vector.load %arg10[%c2_54, %c0_55] : memref<18x32xf32, #tpu.memory_space<vmem>>, vector<2x32xf32>
    tpu.vector_store %arg10[%c2_54, %c0_55], %242 {strides = array<i32>} : memref<18x32xf32, #tpu.memory_space<vmem>>, vector<2x32xf32>,
    %244 = vector.extract_strided_slice %200 {offsets = [4, 0], sizes = [2, 128], strides = [1, 1]} : vector<18x128xf32> to vector<2x128xf32>
    %cst_56 = arith.constant dense<0.000000e+00> : vector<2x128xf32>
    %245 = tpu.matmul %242, %201, %cst_56 {dimension_numbers = #tpu.dot_dimension_numbers<[1], [0], [0], [1], [0, 0, 1, 1], [], []>} : vector<2x32xf32>, vector<32x128xf32>, vector<2x128xf32> -> vector<2x128xf32>
    %246 = arith.addf %244, %245 : vector<2x128xf32>
    %247 = math.tanh %246 : vector<2x128xf32>
    %248 = arith.negf %246 : vector<2x128xf32>
    %249 = math.exp %248 : vector<2x128xf32>
    %cst_57 = arith.constant 1.000000e+00 : f32
    %250 = vector.broadcast %cst_57 : f32 to vector<2x128xf32>
    %251 = arith.addf %250, %249 : vector<2x128xf32>
    %252 = arith.divf %250, %251 : vector<2x128xf32>
    %253 = arith.select %5, %247, %252 : vector<2x128xi1>, vector<2x128xf32>
    %254 = vector.extract_strided_slice %253 {offsets = [0, 0], sizes = [2, 32], strides = [1, 1]} : vector<2x128xf32> to vector<2x32xf32>
    %255 = vector.extract_strided_slice %253 {offsets = [0, 32], sizes = [2, 32], strides = [1, 1]} : vector<2x128xf32> to vector<2x32xf32>
    %256 = vector.extract_strided_slice %253 {offsets = [0, 64], sizes = [2, 32], strides = [1, 1]} : vector<2x128xf32> to vector<2x32xf32>
    %257 = vector.extract_strided_slice %253 {offsets = [0, 96], sizes = [2, 32], strides = [1, 1]} : vector<2x128xf32> to vector<2x32xf32>
    %258 = arith.mulf %255, %240 : vector<2x32xf32>
    %259 = arith.mulf %254, %256 : vector<2x32xf32>
    %260 = arith.addf %258, %259 : vector<2x32xf32>
    %261 = math.tanh %260 : vector<2x32xf32>
    %262 = arith.mulf %257, %261 : vector<2x32xf32>
    %c4_58 = arith.constant 4 : index
    %c0_59 = arith.constant 0 : index
    %263 = vector.load %arg10[%c4_58, %c0_59] : memref<18x32xf32, #tpu.memory_space<vmem>>, vector<2x32xf32>
    tpu.vector_store %arg10[%c4_58, %c0_59], %262 {strides = array<i32>} : memref<18x32xf32, #tpu.memory_space<vmem>>, vector<2x32xf32>,
    %264 = vector.extract_strided_slice %200 {offsets = [6, 0], sizes = [2, 128], strides = [1, 1]} : vector<18x128xf32> to vector<2x128xf32>
    %cst_60 = arith.constant dense<0.000000e+00> : vector<2x128xf32>
    %265 = tpu.matmul %262, %201, %cst_60 {dimension_numbers = #tpu.dot_dimension_numbers<[1], [0], [0], [1], [0, 0, 1, 1], [], []>} : vector<2x32xf32>, vector<32x128xf32>, vector<2x128xf32> -> vector<2x128xf32>
    %266 = arith.addf %264, %265 : vector<2x128xf32>
    %267 = math.tanh %266 : vector<2x128xf32>
    %268 = arith.negf %266 : vector<2x128xf32>
    %269 = math.exp %268 : vector<2x128xf32>
    %cst_61 = arith.constant 1.000000e+00 : f32
    %270 = vector.broadcast %cst_61 : f32 to vector<2x128xf32>
    %271 = arith.addf %270, %269 : vector<2x128xf32>
    %272 = arith.divf %270, %271 : vector<2x128xf32>
    %273 = arith.select %5, %267, %272 : vector<2x128xi1>, vector<2x128xf32>
    %274 = vector.extract_strided_slice %273 {offsets = [0, 0], sizes = [2, 32], strides = [1, 1]} : vector<2x128xf32> to vector<2x32xf32>
    %275 = vector.extract_strided_slice %273 {offsets = [0, 32], sizes = [2, 32], strides = [1, 1]} : vector<2x128xf32> to vector<2x32xf32>
    %276 = vector.extract_strided_slice %273 {offsets = [0, 64], sizes = [2, 32], strides = [1, 1]} : vector<2x128xf32> to vector<2x32xf32>
    %277 = vector.extract_strided_slice %273 {offsets = [0, 96], sizes = [2, 32], strides = [1, 1]} : vector<2x128xf32> to vector<2x32xf32>
    %278 = arith.mulf %275, %260 : vector<2x32xf32>
    %279 = arith.mulf %274, %276 : vector<2x32xf32>
    %280 = arith.addf %278, %279 : vector<2x32xf32>
    %281 = math.tanh %280 : vector<2x32xf32>
    %282 = arith.mulf %277, %281 : vector<2x32xf32>
    %c6_62 = arith.constant 6 : index
    %c0_63 = arith.constant 0 : index
    %283 = vector.load %arg10[%c6_62, %c0_63] : memref<18x32xf32, #tpu.memory_space<vmem>>, vector<2x32xf32>
    tpu.vector_store %arg10[%c6_62, %c0_63], %282 {strides = array<i32>} : memref<18x32xf32, #tpu.memory_space<vmem>>, vector<2x32xf32>,
    %284 = vector.extract_strided_slice %200 {offsets = [8, 0], sizes = [2, 128], strides = [1, 1]} : vector<18x128xf32> to vector<2x128xf32>
    %cst_64 = arith.constant dense<0.000000e+00> : vector<2x128xf32>
    %285 = tpu.matmul %282, %201, %cst_64 {dimension_numbers = #tpu.dot_dimension_numbers<[1], [0], [0], [1], [0, 0, 1, 1], [], []>} : vector<2x32xf32>, vector<32x128xf32>, vector<2x128xf32> -> vector<2x128xf32>
    %286 = arith.addf %284, %285 : vector<2x128xf32>
    %287 = math.tanh %286 : vector<2x128xf32>
    %288 = arith.negf %286 : vector<2x128xf32>
    %289 = math.exp %288 : vector<2x128xf32>
    %cst_65 = arith.constant 1.000000e+00 : f32
    %290 = vector.broadcast %cst_65 : f32 to vector<2x128xf32>
    %291 = arith.addf %290, %289 : vector<2x128xf32>
    %292 = arith.divf %290, %291 : vector<2x128xf32>
    %293 = arith.select %5, %287, %292 : vector<2x128xi1>, vector<2x128xf32>
    %294 = vector.extract_strided_slice %293 {offsets = [0, 0], sizes = [2, 32], strides = [1, 1]} : vector<2x128xf32> to vector<2x32xf32>
    %295 = vector.extract_strided_slice %293 {offsets = [0, 32], sizes = [2, 32], strides = [1, 1]} : vector<2x128xf32> to vector<2x32xf32>
    %296 = vector.extract_strided_slice %293 {offsets = [0, 64], sizes = [2, 32], strides = [1, 1]} : vector<2x128xf32> to vector<2x32xf32>
    %297 = vector.extract_strided_slice %293 {offsets = [0, 96], sizes = [2, 32], strides = [1, 1]} : vector<2x128xf32> to vector<2x32xf32>
    %298 = arith.mulf %295, %280 : vector<2x32xf32>
    %299 = arith.mulf %294, %296 : vector<2x32xf32>
    %300 = arith.addf %298, %299 : vector<2x32xf32>
    %301 = math.tanh %300 : vector<2x32xf32>
    %302 = arith.mulf %297, %301 : vector<2x32xf32>
    %c8_66 = arith.constant 8 : index
    %c0_67 = arith.constant 0 : index
    %303 = vector.load %arg10[%c8_66, %c0_67] : memref<18x32xf32, #tpu.memory_space<vmem>>, vector<2x32xf32>
    tpu.vector_store %arg10[%c8_66, %c0_67], %302 {strides = array<i32>} : memref<18x32xf32, #tpu.memory_space<vmem>>, vector<2x32xf32>,
    %304 = vector.extract_strided_slice %200 {offsets = [10, 0], sizes = [2, 128], strides = [1, 1]} : vector<18x128xf32> to vector<2x128xf32>
    %cst_68 = arith.constant dense<0.000000e+00> : vector<2x128xf32>
    %305 = tpu.matmul %302, %201, %cst_68 {dimension_numbers = #tpu.dot_dimension_numbers<[1], [0], [0], [1], [0, 0, 1, 1], [], []>} : vector<2x32xf32>, vector<32x128xf32>, vector<2x128xf32> -> vector<2x128xf32>
    %306 = arith.addf %304, %305 : vector<2x128xf32>
    %307 = math.tanh %306 : vector<2x128xf32>
    %308 = arith.negf %306 : vector<2x128xf32>
    %309 = math.exp %308 : vector<2x128xf32>
    %cst_69 = arith.constant 1.000000e+00 : f32
    %310 = vector.broadcast %cst_69 : f32 to vector<2x128xf32>
    %311 = arith.addf %310, %309 : vector<2x128xf32>
    %312 = arith.divf %310, %311 : vector<2x128xf32>
    %313 = arith.select %5, %307, %312 : vector<2x128xi1>, vector<2x128xf32>
    %314 = vector.extract_strided_slice %313 {offsets = [0, 0], sizes = [2, 32], strides = [1, 1]} : vector<2x128xf32> to vector<2x32xf32>
    %315 = vector.extract_strided_slice %313 {offsets = [0, 32], sizes = [2, 32], strides = [1, 1]} : vector<2x128xf32> to vector<2x32xf32>
    %316 = vector.extract_strided_slice %313 {offsets = [0, 64], sizes = [2, 32], strides = [1, 1]} : vector<2x128xf32> to vector<2x32xf32>
    %317 = vector.extract_strided_slice %313 {offsets = [0, 96], sizes = [2, 32], strides = [1, 1]} : vector<2x128xf32> to vector<2x32xf32>
    %318 = arith.mulf %315, %300 : vector<2x32xf32>
    %319 = arith.mulf %314, %316 : vector<2x32xf32>
    %320 = arith.addf %318, %319 : vector<2x32xf32>
    %321 = math.tanh %320 : vector<2x32xf32>
    %322 = arith.mulf %317, %321 : vector<2x32xf32>
    %c10_70 = arith.constant 10 : index
    %c0_71 = arith.constant 0 : index
    %323 = vector.load %arg10[%c10_70, %c0_71] : memref<18x32xf32, #tpu.memory_space<vmem>>, vector<2x32xf32>
    tpu.vector_store %arg10[%c10_70, %c0_71], %322 {strides = array<i32>} : memref<18x32xf32, #tpu.memory_space<vmem>>, vector<2x32xf32>,
    %324 = vector.extract_strided_slice %200 {offsets = [12, 0], sizes = [2, 128], strides = [1, 1]} : vector<18x128xf32> to vector<2x128xf32>
    %cst_72 = arith.constant dense<0.000000e+00> : vector<2x128xf32>
    %325 = tpu.matmul %322, %201, %cst_72 {dimension_numbers = #tpu.dot_dimension_numbers<[1], [0], [0], [1], [0, 0, 1, 1], [], []>} : vector<2x32xf32>, vector<32x128xf32>, vector<2x128xf32> -> vector<2x128xf32>
    %326 = arith.addf %324, %325 : vector<2x128xf32>
    %327 = math.tanh %326 : vector<2x128xf32>
    %328 = arith.negf %326 : vector<2x128xf32>
    %329 = math.exp %328 : vector<2x128xf32>
    %cst_73 = arith.constant 1.000000e+00 : f32
    %330 = vector.broadcast %cst_73 : f32 to vector<2x128xf32>
    %331 = arith.addf %330, %329 : vector<2x128xf32>
    %332 = arith.divf %330, %331 : vector<2x128xf32>
    %333 = arith.select %5, %327, %332 : vector<2x128xi1>, vector<2x128xf32>
    %334 = vector.extract_strided_slice %333 {offsets = [0, 0], sizes = [2, 32], strides = [1, 1]} : vector<2x128xf32> to vector<2x32xf32>
    %335 = vector.extract_strided_slice %333 {offsets = [0, 32], sizes = [2, 32], strides = [1, 1]} : vector<2x128xf32> to vector<2x32xf32>
    %336 = vector.extract_strided_slice %333 {offsets = [0, 64], sizes = [2, 32], strides = [1, 1]} : vector<2x128xf32> to vector<2x32xf32>
    %337 = vector.extract_strided_slice %333 {offsets = [0, 96], sizes = [2, 32], strides = [1, 1]} : vector<2x128xf32> to vector<2x32xf32>
    %338 = arith.mulf %335, %320 : vector<2x32xf32>
    %339 = arith.mulf %334, %336 : vector<2x32xf32>
    %340 = arith.addf %338, %339 : vector<2x32xf32>
    %341 = math.tanh %340 : vector<2x32xf32>
    %342 = arith.mulf %337, %341 : vector<2x32xf32>
    %c12_74 = arith.constant 12 : index
    %c0_75 = arith.constant 0 : index
    %343 = vector.load %arg10[%c12_74, %c0_75] : memref<18x32xf32, #tpu.memory_space<vmem>>, vector<2x32xf32>
    tpu.vector_store %arg10[%c12_74, %c0_75], %342 {strides = array<i32>} : memref<18x32xf32, #tpu.memory_space<vmem>>, vector<2x32xf32>,
    %344 = vector.extract_strided_slice %200 {offsets = [14, 0], sizes = [2, 128], strides = [1, 1]} : vector<18x128xf32> to vector<2x128xf32>
    %cst_76 = arith.constant dense<0.000000e+00> : vector<2x128xf32>
    %345 = tpu.matmul %342, %201, %cst_76 {dimension_numbers = #tpu.dot_dimension_numbers<[1], [0], [0], [1], [0, 0, 1, 1], [], []>} : vector<2x32xf32>, vector<32x128xf32>, vector<2x128xf32> -> vector<2x128xf32>
    %346 = arith.addf %344, %345 : vector<2x128xf32>
    %347 = math.tanh %346 : vector<2x128xf32>
    %348 = arith.negf %346 : vector<2x128xf32>
    %349 = math.exp %348 : vector<2x128xf32>
    %cst_77 = arith.constant 1.000000e+00 : f32
    %350 = vector.broadcast %cst_77 : f32 to vector<2x128xf32>
    %351 = arith.addf %350, %349 : vector<2x128xf32>
    %352 = arith.divf %350, %351 : vector<2x128xf32>
    %353 = arith.select %5, %347, %352 : vector<2x128xi1>, vector<2x128xf32>
    %354 = vector.extract_strided_slice %353 {offsets = [0, 0], sizes = [2, 32], strides = [1, 1]} : vector<2x128xf32> to vector<2x32xf32>
    %355 = vector.extract_strided_slice %353 {offsets = [0, 32], sizes = [2, 32], strides = [1, 1]} : vector<2x128xf32> to vector<2x32xf32>
    %356 = vector.extract_strided_slice %353 {offsets = [0, 64], sizes = [2, 32], strides = [1, 1]} : vector<2x128xf32> to vector<2x32xf32>
    %357 = vector.extract_strided_slice %353 {offsets = [0, 96], sizes = [2, 32], strides = [1, 1]} : vector<2x128xf32> to vector<2x32xf32>
    %358 = arith.mulf %355, %340 : vector<2x32xf32>
    %359 = arith.mulf %354, %356 : vector<2x32xf32>
    %360 = arith.addf %358, %359 : vector<2x32xf32>
    %361 = math.tanh %360 : vector<2x32xf32>
    %362 = arith.mulf %357, %361 : vector<2x32xf32>
    %c14_78 = arith.constant 14 : index
    %c0_79 = arith.constant 0 : index
    %363 = vector.load %arg10[%c14_78, %c0_79] : memref<18x32xf32, #tpu.memory_space<vmem>>, vector<2x32xf32>
    tpu.vector_store %arg10[%c14_78, %c0_79], %362 {strides = array<i32>} : memref<18x32xf32, #tpu.memory_space<vmem>>, vector<2x32xf32>,
    %364 = vector.extract_strided_slice %200 {offsets = [16, 0], sizes = [2, 128], strides = [1, 1]} : vector<18x128xf32> to vector<2x128xf32>
    %cst_80 = arith.constant dense<0.000000e+00> : vector<2x128xf32>
    %365 = tpu.matmul %362, %201, %cst_80 {dimension_numbers = #tpu.dot_dimension_numbers<[1], [0], [0], [1], [0, 0, 1, 1], [], []>} : vector<2x32xf32>, vector<32x128xf32>, vector<2x128xf32> -> vector<2x128xf32>
    %366 = arith.addf %364, %365 : vector<2x128xf32>
    %367 = math.tanh %366 : vector<2x128xf32>
    %368 = arith.negf %366 : vector<2x128xf32>
    %369 = math.exp %368 : vector<2x128xf32>
    %cst_81 = arith.constant 1.000000e+00 : f32
    %370 = vector.broadcast %cst_81 : f32 to vector<2x128xf32>
    %371 = arith.addf %370, %369 : vector<2x128xf32>
    %372 = arith.divf %370, %371 : vector<2x128xf32>
    %373 = arith.select %5, %367, %372 : vector<2x128xi1>, vector<2x128xf32>
    %374 = vector.extract_strided_slice %373 {offsets = [0, 0], sizes = [2, 32], strides = [1, 1]} : vector<2x128xf32> to vector<2x32xf32>
    %375 = vector.extract_strided_slice %373 {offsets = [0, 32], sizes = [2, 32], strides = [1, 1]} : vector<2x128xf32> to vector<2x32xf32>
    %376 = vector.extract_strided_slice %373 {offsets = [0, 64], sizes = [2, 32], strides = [1, 1]} : vector<2x128xf32> to vector<2x32xf32>
    %377 = vector.extract_strided_slice %373 {offsets = [0, 96], sizes = [2, 32], strides = [1, 1]} : vector<2x128xf32> to vector<2x32xf32>
    %378 = arith.mulf %375, %360 : vector<2x32xf32>
    %379 = arith.mulf %374, %376 : vector<2x32xf32>
    %380 = arith.addf %378, %379 : vector<2x32xf32>
    %381 = math.tanh %380 : vector<2x32xf32>
    %382 = arith.mulf %377, %381 : vector<2x32xf32>
    %c16_82 = arith.constant 16 : index
    %c0_83 = arith.constant 0 : index
    %383 = vector.load %arg10[%c16_82, %c0_83] : memref<18x32xf32, #tpu.memory_space<vmem>>, vector<2x32xf32>
    tpu.vector_store %arg10[%c16_82, %c0_83], %382 {strides = array<i32>} : memref<18x32xf32, #tpu.memory_space<vmem>>, vector<2x32xf32>,
    %c0_84 = arith.constant 0 : index
    %c0_85 = arith.constant 0 : index
    %384 = vector.load %arg10[%c0_84, %c0_85] : memref<18x32xf32, #tpu.memory_space<vmem>>, vector<18x32xf32>
    %c0_86 = arith.constant 0 : index
    %c0_87 = arith.constant 0 : index
    %385 = vector.load %arg7[%c0_86, %c0_87] : memref<32x128xf32, #tpu.memory_space<vmem>>, vector<32x128xf32>
    %cst_88 = arith.constant dense<0.000000e+00> : vector<18x128xf32>
    %386 = tpu.matmul %384, %385, %cst_88 {dimension_numbers = #tpu.dot_dimension_numbers<[1], [0], [0], [1], [0, 0, 1, 1], [], []>} : vector<18x32xf32>, vector<32x128xf32>, vector<18x128xf32> -> vector<18x128xf32>
    %c0_89 = arith.constant 0 : index
    %c0_90 = arith.constant 0 : index
    %387 = vector.load %arg8[%c0_89, %c0_90] : memref<1x128xf32, #tpu.memory_space<vmem>>, vector<1x128xf32>
    %388 = vector.broadcast %387 : vector<1x128xf32> to vector<18x128xf32>
    %389 = arith.addf %386, %388 : vector<18x128xf32>
    %c0_91 = arith.constant 0 : index
    %c0_92 = arith.constant 0 : index
    %390 = vector.load %arg9[%c0_91, %c0_92] : memref<18x128xf32, #tpu.memory_space<vmem>>, vector<18x128xf32>
    tpu.vector_store %arg9[%c0_91, %c0_92], %389 {strides = array<i32>} : memref<18x128xf32, #tpu.memory_space<vmem>>, vector<18x128xf32>,
    return
  }
}

</mosaic_0001>

<llo_original>
// kernel: cnn_to_lstm_forward.2
$region0: #{cnn_to_lstm_forward.2}
  #allocation0 [shape = 'u32[]', space=smem, size = 0x4, offset = 0x4, fixed_abs, tag = 'smem constant byte address 0x4 - core index']
  #allocation1 [shape = 'u32[144,128]{1,0:T(1,128)}', space=vmem, size = 0x12000, scoped, tag = 'internal scratch']
  %s0 = inlined_call_operand.vmem [shape: f32[512,4], index: 0, kind: input, shape index: {}]
  %s1 = inlined_call_operand.vmem [shape: f32[4,64], index: 1, kind: input, shape index: {}]
  %s2 = inlined_call_operand.vmem [shape: f32[1,64], index: 2, kind: input, shape index: {}]
  %s3 = inlined_call_operand.vmem [shape: f32[64,32], index: 3, kind: input, shape index: {}]
  %s4 = inlined_call_operand.vmem [shape: f32[1,32], index: 4, kind: input, shape index: {}]
  %s5 = inlined_call_operand.vmem [shape: f32[2,32], index: 5, kind: output, shape index: {}]
  %s6 = sld [smem:[#allocation0]]
  $region30: #{cnn_to_lstm_forward.2} parent=0
    _
  %s8 = ssub.s32 1, %s6
  %s9 = scalar_select 0, %s8, %s6
  // Predicated region
  $region2: #{cnn_to_lstm_forward.2} parent=0 // pred_check
    _
  $region3: #{cnn_to_lstm_forward.2} parent=0 // pred_check_branch
    %11 = sbr.rel (0) target = $region5
  $region4: #{cnn_to_lstm_forward.2} parent=0 // pred_region
    _
  $region5: #{cnn_to_lstm_forward.2} parent=0 // pred_fallthru
    _
  // Predicated region
  $region6: #{cnn_to_lstm_forward.2} parent=0 // pred_check
    _
  $region7: #{cnn_to_lstm_forward.2} parent=0 // pred_check_branch
    %13 = sbr.rel (0) target = $region9
  $region8: #{cnn_to_lstm_forward.2} parent=0 // pred_region
    _
  $region9: #{cnn_to_lstm_forward.2} parent=0 // pred_fallthru
    _
  // Predicated region
  $region10: #{cnn_to_lstm_forward.2} parent=0 // pred_check
    _
  $region11: #{cnn_to_lstm_forward.2} parent=0 // pred_check_branch
    %15 = sbr.rel (0) target = $region13
  $region12: #{cnn_to_lstm_forward.2} parent=0 // pred_region
    _
  $region13: #{cnn_to_lstm_forward.2} parent=0 // pred_fallthru
    _
  // Predicated region
  $region14: #{cnn_to_lstm_forward.2} parent=0 // pred_check
    _
  $region15: #{cnn_to_lstm_forward.2} parent=0 // pred_check_branch
    %17 = sbr.rel (0) target = $region17
  $region16: #{cnn_to_lstm_forward.2} parent=0 // pred_region
    _
  $region17: #{cnn_to_lstm_forward.2} parent=0 // pred_fallthru
    _
  // Predicated region
  $region18: #{cnn_to_lstm_forward.2} parent=0 // pred_check
    _
  $region19: #{cnn_to_lstm_forward.2} parent=0 // pred_check_branch
    %19 = sbr.rel (0) target = $region21
  $region20: #{cnn_to_lstm_forward.2} parent=0 // pred_region
    _
  $region21: #{cnn_to_lstm_forward.2} parent=0 // pred_fallthru
    _
  %v20 = vld [vmem:[%s0] sm:$0xff]
  %v21 = vld [vmem:[%s0 + $0x8] sm:$0xff]
  %v22 = vld [vmem:[%s0 + $0x10] sm:$0xff]
  %v23 = vld [vmem:[%s0 + $0x18] sm:$0xff]
  %v24 = vld [vmem:[%s0 + $0x20] sm:$0xff]
  %v25 = vld [vmem:[%s0 + $0x28] sm:$0xff]
  %v26 = vld [vmem:[%s0 + $0x30] sm:$0xff]
  %v27 = vld [vmem:[%s0 + $0x38] sm:$0xff]
  %v28 = vld [vmem:[%s0 + $0x40] sm:$0xff]
  %v29 = vld [vmem:[%s0 + $0x48] sm:$0xff]
  %v30 = vld [vmem:[%s0 + $0x50] sm:$0xff]
  %v31 = vld [vmem:[%s0 + $0x58] sm:$0xff]
  %v32 = vld [vmem:[%s0 + $0x60] sm:$0xff]
  %v33 = vld [vmem:[%s0 + $0x68] sm:$0xff]
  %v34 = vld [vmem:[%s0 + $0x70] sm:$0xff]
  %v35 = vld [vmem:[%s0 + $0x78] sm:$0xff]
  %v36 = vld [vmem:[%s0 + $0x80] sm:$0xff]
  %v37 = vld [vmem:[%s0 + $0x88] sm:$0xff]
  %v38 = vld [vmem:[%s0 + $0x90] sm:$0xff]
  %v39 = vld [vmem:[%s0 + $0x98] sm:$0xff]
  %v40 = vld [vmem:[%s0 + $0xa0] sm:$0xff]
  %v41 = vld [vmem:[%s0 + $0xa8] sm:$0xff]
  %v42 = vld [vmem:[%s0 + $0xb0] sm:$0xff]
  %v43 = vld [vmem:[%s0 + $0xb8] sm:$0xff]
  %v44 = vld [vmem:[%s0 + $0xc0] sm:$0xff]
  %v45 = vld [vmem:[%s0 + $0xc8] sm:$0xff]
  %v46 = vld [vmem:[%s0 + $0xd0] sm:$0xff]
  %v47 = vld [vmem:[%s0 + $0xd8] sm:$0xff]
  %v48 = vld [vmem:[%s0 + $0xe0] sm:$0xff]
  %v49 = vld [vmem:[%s0 + $0xe8] sm:$0xff]
  %v50 = vld [vmem:[%s0 + $0xf0] sm:$0xff]
  %v51 = vld [vmem:[%s0 + $0xf8] sm:$0xff]
  %v52 = vld [vmem:[%s0 + $0x100] sm:$0xff]
  %v53 = vld [vmem:[%s0 + $0x108] sm:$0xff]
  %v54 = vld [vmem:[%s0 + $0x110] sm:$0xff]
  %v55 = vld [vmem:[%s0 + $0x118] sm:$0xff]
  %v56 = vld [vmem:[%s0 + $0x120] sm:$0xff]
  %v57 = vld [vmem:[%s0 + $0x128] sm:$0xff]
  %v58 = vld [vmem:[%s0 + $0x130] sm:$0xff]
  %v59 = vld [vmem:[%s0 + $0x138] sm:$0xff]
  %v60 = vld [vmem:[%s0 + $0x140] sm:$0xff]
  %v61 = vld [vmem:[%s0 + $0x148] sm:$0xff]
  %v62 = vld [vmem:[%s0 + $0x150] sm:$0xff]
  %v63 = vld [vmem:[%s0 + $0x158] sm:$0xff]
  %v64 = vld [vmem:[%s0 + $0x160] sm:$0xff]
  %v65 = vld [vmem:[%s0 + $0x168] sm:$0xff]
  %v66 = vld [vmem:[%s0 + $0x170] sm:$0xff]
  %v67 = vld [vmem:[%s0 + $0x178] sm:$0xff]
  %v68 = vld [vmem:[%s0 + $0x180] sm:$0xff]
  %v69 = vld [vmem:[%s0 + $0x188] sm:$0xff]
  %v70 = vld [vmem:[%s0 + $0x190] sm:$0xff]
  %v71 = vld [vmem:[%s0 + $0x198] sm:$0xff]
  %v72 = vld [vmem:[%s0 + $0x1a0] sm:$0xff]
  %v73 = vld [vmem:[%s0 + $0x1a8] sm:$0xff]
  %v74 = vld [vmem:[%s0 + $0x1b0] sm:$0xff]
  %v75 = vld [vmem:[%s0 + $0x1b8] sm:$0xff]
  %v76 = vld [vmem:[%s0 + $0x1c0] sm:$0xff]
  %v77 = vld [vmem:[%s0 + $0x1c8] sm:$0xff]
  %v78 = vld [vmem:[%s0 + $0x1d0] sm:$0xff]
  %v79 = vld [vmem:[%s0 + $0x1d8] sm:$0xff]
  %v80 = vld [vmem:[%s0 + $0x1e0] sm:$0xff]
  %v81 = vld [vmem:[%s0 + $0x1e8] sm:$0xff]
  %v82 = vld [vmem:[%s0 + $0x1f0] sm:$0xff]
  %v83 = vld [vmem:[%s0 + $0x1f8] sm:$0xff]
  %v84 = vld [vmem:[%s1] sm:$0xf]
  %v85 = vld [vmem:[%s2] sm:$0x1]
  %v87 = vlaneseq
  %v88 = vshrl.u32 %v87, 7
  %v89 = vsub.s32 0, %v88
  %v90 = vrot.slane %v85, %v89
  %vm92 = vcmask 31744
  %v94 = vsel %vm92, %v20, 0
  %v97 = vsel %vm92, %v21, 0
  %v100 = vsel %vm92, %v22, 0
  %v103 = vsel %vm92, %v23, 0
  %v106 = vsel %vm92, %v24, 0
  %v109 = vsel %vm92, %v25, 0
  %v112 = vsel %vm92, %v26, 0
  %v115 = vsel %vm92, %v27, 0
  %v118 = vsel %vm92, %v28, 0
  %v121 = vsel %vm92, %v29, 0
  %v124 = vsel %vm92, %v30, 0
  %v127 = vsel %vm92, %v31, 0
  %v130 = vsel %vm92, %v32, 0
  %v133 = vsel %vm92, %v33, 0
  %v136 = vsel %vm92, %v34, 0
  %v139 = vsel %vm92, %v35, 0
  %v142 = vsel %vm92, %v36, 0
  %v145 = vsel %vm92, %v37, 0
  %v148 = vsel %vm92, %v38, 0
  %v151 = vsel %vm92, %v39, 0
  %v154 = vsel %vm92, %v40, 0
  %v157 = vsel %vm92, %v41, 0
  %v160 = vsel %vm92, %v42, 0
  %v163 = vsel %vm92, %v43, 0
  %v166 = vsel %vm92, %v44, 0
  %v169 = vsel %vm92, %v45, 0
  %v172 = vsel %vm92, %v46, 0
  %v175 = vsel %vm92, %v47, 0
  %v178 = vsel %vm92, %v48, 0
  %v181 = vsel %vm92, %v49, 0
  %v184 = vsel %vm92, %v50, 0
  %v187 = vsel %vm92, %v51, 0
  %v190 = vsel %vm92, %v52, 0
  %v193 = vsel %vm92, %v53, 0
  %v196 = vsel %vm92, %v54, 0
  %v199 = vsel %vm92, %v55, 0
  %v202 = vsel %vm92, %v56, 0
  %v205 = vsel %vm92, %v57, 0
  %v208 = vsel %vm92, %v58, 0
  %v211 = vsel %vm92, %v59, 0
  %v214 = vsel %vm92, %v60, 0
  %v217 = vsel %vm92, %v61, 0
  %v220 = vsel %vm92, %v62, 0
  %v223 = vsel %vm92, %v63, 0
  %v226 = vsel %vm92, %v64, 0
  %v229 = vsel %vm92, %v65, 0
  %v232 = vsel %vm92, %v66, 0
  %v235 = vsel %vm92, %v67, 0
  %v238 = vsel %vm92, %v68, 0
  %v241 = vsel %vm92, %v69, 0
  %v244 = vsel %vm92, %v70, 0
  %v247 = vsel %vm92, %v71, 0
  %v250 = vsel %vm92, %v72, 0
  %v253 = vsel %vm92, %v73, 0
  %v256 = vsel %vm92, %v74, 0
  %v259 = vsel %vm92, %v75, 0
  %v262 = vsel %vm92, %v76, 0
  %v265 = vsel %vm92, %v77, 0
  %v268 = vsel %vm92, %v78, 0
  %v271 = vsel %vm92, %v79, 0
  %v274 = vsel %vm92, %v80, 0
  %v277 = vsel %vm92, %v81, 0
  %v280 = vsel %vm92, %v82, 0
  %v283 = vsel %vm92, %v83, 0
  %vm285 = vcmask 1043456
  %v287 = vsel %vm285, %v84, 0
  %289 = vmatprep.subr.mxu0 0.0
  %290 = vmatpush1.msra.mxu0 %v287
  %291 = vmatprep.subr.mxu0 0.0
  %292 = vmatpush1.msra.mxu0 0.0
  %293 = vmatprep.subr.mxu0 0.0
  %294 = vmatpush1.msra.mxu0 0.0
  %295 = vmatprep.subr.mxu0 0.0
  %296 = vmatpush1.msra.mxu0 0.0
  %297 = vmatprep.subr.mxu0 0.0
  %298 = vmatpush1.msra.mxu0 0.0
  %299 = vmatprep.subr.mxu0 0.0
  %300 = vmatpush1.msra.mxu0 0.0
  %301 = vmatprep.subr.mxu0 0.0
  %302 = vmatpush1.msra.mxu0 0.0
  %303 = vmatprep.subr.mxu0 0.0
  %304 = vmatpush1.msra.mxu0 0.0
  %305 = vmatprep.subr.mxu0 0.0
  %306 = vmatpush1.msra.mxu0 0.0
  %307 = vmatprep.subr.mxu0 0.0
  %308 = vmatpush1.msra.mxu0 0.0
  %309 = vmatprep.subr.mxu0 0.0
  %310 = vmatpush1.msra.mxu0 0.0
  %311 = vmatprep.subr.mxu0 0.0
  %312 = vmatpush1.msra.mxu0 0.0
  %313 = vmatprep.subr.mxu0 0.0
  %314 = vmatpush1.msra.mxu0 0.0
  %315 = vmatprep.subr.mxu0 0.0
  %316 = vmatpush1.msra.mxu0 0.0
  %317 = vmatprep.subr.mxu0 0.0
  %318 = vmatpush1.msra.mxu0 0.0
  %319 = vmatprep.subr.mxu0 0.0
  %320 = vmatpush1.msra.mxu0 0.0
  %321 = vmatprep.subr.mxu0 0.0
  %322 = vmatpush1.msra.mxu0 0.0
  %323 = vmatprep.subr.mxu0 0.0
  %324 = vmatpush1.msra.mxu0 0.0
  %325 = vmatprep.subr.mxu0 0.0
  %326 = vmatpush1.msra.mxu0 0.0
  %327 = vmatprep.subr.mxu0 0.0
  %328 = vmatpush1.msra.mxu0 0.0
  %329 = vmatprep.subr.mxu0 0.0
  %330 = vmatpush1.msra.mxu0 0.0
  %331 = vmatprep.subr.mxu0 0.0
  %332 = vmatpush1.msra.mxu0 0.0
  %333 = vmatprep.subr.mxu0 0.0
  %334 = vmatpush1.msra.mxu0 0.0
  %335 = vmatprep.subr.mxu0 0.0
  %336 = vmatpush1.msra.mxu0 0.0
  %337 = vmatprep.subr.mxu0 0.0
  %338 = vmatpush1.msra.mxu0 0.0
  %339 = vmatprep.subr.mxu0 0.0
  %340 = vmatpush1.msra.mxu0 0.0
  %341 = vmatprep.subr.mxu0 0.0
  %342 = vmatpush1.msra.mxu0 0.0
  %343 = vmatprep.subr.mxu0 0.0
  %344 = vmatpush1.msra.mxu0 0.0
  %345 = vmatprep.subr.mxu0 0.0
  %346 = vmatpush1.msra.mxu0 0.0
  %347 = vmatprep.subr.mxu0 0.0
  %348 = vmatpush1.msra.mxu0 0.0
  %349 = vmatprep.subr.mxu0 0.0
  %350 = vmatpush1.msra.mxu0 0.0
  %351 = vmatprep.subr.mxu0 0.0
  %352 = vmatpush1.msra.mxu0 0.0
  %353 = vmatprep.mubr.f32.mxu0 0.0
  %354 = vmatmul.mubr.f32.gmra.mrb[0].mxu0 %v94
  %v355 = vpop.f32.mrb[0].mxu0
  %v356 = vadd.f32 %v90, %v355
  %v357 = vpop.f32.mrb[0].mxu0
  %358 = vmatprep.mubr.f32.mxu0 0.0
  %359 = vmatmul.mubr.f32.gmra.mrb[0].mxu0 %v97
  %v360 = vpop.f32.mrb[0].mxu0
  %v361 = vadd.f32 %v90, %v360
  %v362 = vpop.f32.mrb[0].mxu0
  %363 = vmatprep.mubr.f32.mxu0 0.0
  %364 = vmatmul.mubr.f32.gmra.mrb[0].mxu0 %v100
  %v365 = vpop.f32.mrb[0].mxu0
  %v366 = vadd.f32 %v90, %v365
  %v367 = vpop.f32.mrb[0].mxu0
  %368 = vmatprep.mubr.f32.mxu0 0.0
  %369 = vmatmul.mubr.f32.gmra.mrb[0].mxu0 %v103
  %v370 = vpop.f32.mrb[0].mxu0
  %v371 = vadd.f32 %v90, %v370
  %v372 = vpop.f32.mrb[0].mxu0
  %373 = vmatprep.mubr.f32.mxu0 0.0
  %374 = vmatmul.mubr.f32.gmra.mrb[0].mxu0 %v106
  %v375 = vpop.f32.mrb[0].mxu0
  %v376 = vadd.f32 %v90, %v375
  %v377 = vpop.f32.mrb[0].mxu0
  %378 = vmatprep.mubr.f32.mxu0 0.0
  %379 = vmatmul.mubr.f32.gmra.mrb[0].mxu0 %v109
  %v380 = vpop.f32.mrb[0].mxu0
  %v381 = vadd.f32 %v90, %v380
  %v382 = vpop.f32.mrb[0].mxu0
  %383 = vmatprep.mubr.f32.mxu0 0.0
  %384 = vmatmul.mubr.f32.gmra.mrb[0].mxu0 %v112
  %v385 = vpop.f32.mrb[0].mxu0
  %v386 = vadd.f32 %v90, %v385
  %v387 = vpop.f32.mrb[0].mxu0
  %388 = vmatprep.mubr.f32.mxu0 0.0
  %389 = vmatmul.mubr.f32.gmra.mrb[0].mxu0 %v115
  %v390 = vpop.f32.mrb[0].mxu0
  %v391 = vadd.f32 %v90, %v390
  %v392 = vpop.f32.mrb[0].mxu0
  %393 = vmatprep.mubr.f32.mxu0 0.0
  %394 = vmatmul.mubr.f32.gmra.mrb[0].mxu0 %v118
  %v395 = vpop.f32.mrb[0].mxu0
  %v396 = vadd.f32 %v90, %v395
  %v397 = vpop.f32.mrb[0].mxu0
  %398 = vmatprep.mubr.f32.mxu0 0.0
  %399 = vmatmul.mubr.f32.gmra.mrb[0].mxu0 %v121
  %v400 = vpop.f32.mrb[0].mxu0
  %v401 = vadd.f32 %v90, %v400
  %v402 = vpop.f32.mrb[0].mxu0
  %403 = vmatprep.mubr.f32.mxu0 0.0
  %404 = vmatmul.mubr.f32.gmra.mrb[0].mxu0 %v124
  %v405 = vpop.f32.mrb[0].mxu0
  %v406 = vadd.f32 %v90, %v405
  %v407 = vpop.f32.mrb[0].mxu0
  %408 = vmatprep.mubr.f32.mxu0 0.0
  %409 = vmatmul.mubr.f32.gmra.mrb[0].mxu0 %v127
  %v410 = vpop.f32.mrb[0].mxu0
  %v411 = vadd.f32 %v90, %v410
  %v412 = vpop.f32.mrb[0].mxu0
  %413 = vmatprep.mubr.f32.mxu0 0.0
  %414 = vmatmul.mubr.f32.gmra.mrb[0].mxu0 %v130
  %v415 = vpop.f32.mrb[0].mxu0
  %v416 = vadd.f32 %v90, %v415
  %v417 = vpop.f32.mrb[0].mxu0
  %418 = vmatprep.mubr.f32.mxu0 0.0
  %419 = vmatmul.mubr.f32.gmra.mrb[0].mxu0 %v133
  %v420 = vpop.f32.mrb[0].mxu0
  %v421 = vadd.f32 %v90, %v420
  %v422 = vpop.f32.mrb[0].mxu0
  %423 = vmatprep.mubr.f32.mxu0 0.0
  %424 = vmatmul.mubr.f32.gmra.mrb[0].mxu0 %v136
  %v425 = vpop.f32.mrb[0].mxu0
  %v426 = vadd.f32 %v90, %v425
  %v427 = vpop.f32.mrb[0].mxu0
  %428 = vmatprep.mubr.f32.mxu0 0.0
  %429 = vmatmul.mubr.f32.gmra.mrb[0].mxu0 %v139
  %v430 = vpop.f32.mrb[0].mxu0
  %v431 = vadd.f32 %v90, %v430
  %v432 = vpop.f32.mrb[0].mxu0
  %433 = vmatprep.mubr.f32.mxu0 0.0
  %434 = vmatmul.mubr.f32.gmra.mrb[0].mxu0 %v142
  %v435 = vpop.f32.mrb[0].mxu0
  %v436 = vadd.f32 %v90, %v435
  %v437 = vpop.f32.mrb[0].mxu0
  %438 = vmatprep.mubr.f32.mxu0 0.0
  %439 = vmatmul.mubr.f32.gmra.mrb[0].mxu0 %v145
  %v440 = vpop.f32.mrb[0].mxu0
  %v441 = vadd.f32 %v90, %v440
  %v442 = vpop.f32.mrb[0].mxu0
  %443 = vmatprep.mubr.f32.mxu0 0.0
  %444 = vmatmul.mubr.f32.gmra.mrb[0].mxu0 %v148
  %v445 = vpop.f32.mrb[0].mxu0
  %v446 = vadd.f32 %v90, %v445
  %v447 = vpop.f32.mrb[0].mxu0
  %448 = vmatprep.mubr.f32.mxu0 0.0
  %449 = vmatmul.mubr.f32.gmra.mrb[0].mxu0 %v151
  %v450 = vpop.f32.mrb[0].mxu0
  %v451 = vadd.f32 %v90, %v450
  %v452 = vpop.f32.mrb[0].mxu0
  %453 = vmatprep.mubr.f32.mxu0 0.0
  %454 = vmatmul.mubr.f32.gmra.mrb[0].mxu0 %v154
  %v455 = vpop.f32.mrb[0].mxu0
  %v456 = vadd.f32 %v90, %v455
  %v457 = vpop.f32.mrb[0].mxu0
  %458 = vmatprep.mubr.f32.mxu0 0.0
  %459 = vmatmul.mubr.f32.gmra.mrb[0].mxu0 %v157
  %v460 = vpop.f32.mrb[0].mxu0
  %v461 = vadd.f32 %v90, %v460
  %v462 = vpop.f32.mrb[0].mxu0
  %463 = vmatprep.mubr.f32.mxu0 0.0
  %464 = vmatmul.mubr.f32.gmra.mrb[0].mxu0 %v160
  %v465 = vpop.f32.mrb[0].mxu0
  %v466 = vadd.f32 %v90, %v465
  %v467 = vpop.f32.mrb[0].mxu0
  %468 = vmatprep.mubr.f32.mxu0 0.0
  %469 = vmatmul.mubr.f32.gmra.mrb[0].mxu0 %v163
  %v470 = vpop.f32.mrb[0].mxu0
  %v471 = vadd.f32 %v90, %v470
  %v472 = vpop.f32.mrb[0].mxu0
  %473 = vmatprep.mubr.f32.mxu0 0.0
  %474 = vmatmul.mubr.f32.gmra.mrb[0].mxu0 %v166
  %v475 = vpop.f32.mrb[0].mxu0
  %v476 = vadd.f32 %v90, %v475
  %v477 = vpop.f32.mrb[0].mxu0
  %478 = vmatprep.mubr.f32.mxu0 0.0
  %479 = vmatmul.mubr.f32.gmra.mrb[0].mxu0 %v169
  %v480 = vpop.f32.mrb[0].mxu0
  %v481 = vadd.f32 %v90, %v480
  %v482 = vpop.f32.mrb[0].mxu0
  %483 = vmatprep.mubr.f32.mxu0 0.0
  %484 = vmatmul.mubr.f32.gmra.mrb[0].mxu0 %v172
  %v485 = vpop.f32.mrb[0].mxu0
  %v486 = vadd.f32 %v90, %v485
  %v487 = vpop.f32.mrb[0].mxu0
  %488 = vmatprep.mubr.f32.mxu0 0.0
  %489 = vmatmul.mubr.f32.gmra.mrb[0].mxu0 %v175
  %v490 = vpop.f32.mrb[0].mxu0
  %v491 = vadd.f32 %v90, %v490
  %v492 = vpop.f32.mrb[0].mxu0
  %493 = vmatprep.mubr.f32.mxu0 0.0
  %494 = vmatmul.mubr.f32.gmra.mrb[0].mxu0 %v178
  %v495 = vpop.f32.mrb[0].mxu0
  %v496 = vadd.f32 %v90, %v495
  %v497 = vpop.f32.mrb[0].mxu0
  %498 = vmatprep.mubr.f32.mxu0 0.0
  %499 = vmatmul.mubr.f32.gmra.mrb[0].mxu0 %v181
  %v500 = vpop.f32.mrb[0].mxu0
  %v501 = vadd.f32 %v90, %v500
  %v502 = vpop.f32.mrb[0].mxu0
  %503 = vmatprep.mubr.f32.mxu0 0.0
  %504 = vmatmul.mubr.f32.gmra.mrb[0].mxu0 %v184
  %v505 = vpop.f32.mrb[0].mxu0
  %v506 = vadd.f32 %v90, %v505
  %v507 = vpop.f32.mrb[0].mxu0
  %508 = vmatprep.mubr.f32.mxu0 0.0
  %509 = vmatmul.mubr.f32.gmra.mrb[0].mxu0 %v187
  %v510 = vpop.f32.mrb[0].mxu0
  %v511 = vadd.f32 %v90, %v510
  %v512 = vpop.f32.mrb[0].mxu0
  %513 = vmatprep.mubr.f32.mxu0 0.0
  %514 = vmatmul.mubr.f32.gmra.mrb[0].mxu0 %v190
  %v515 = vpop.f32.mrb[0].mxu0
  %v516 = vadd.f32 %v90, %v515
  %v517 = vpop.f32.mrb[0].mxu0
  %518 = vmatprep.mubr.f32.mxu0 0.0
  %519 = vmatmul.mubr.f32.gmra.mrb[0].mxu0 %v193
  %v520 = vpop.f32.mrb[0].mxu0
  %v521 = vadd.f32 %v90, %v520
  %v522 = vpop.f32.mrb[0].mxu0
  %523 = vmatprep.mubr.f32.mxu0 0.0
  %524 = vmatmul.mubr.f32.gmra.mrb[0].mxu0 %v196
  %v525 = vpop.f32.mrb[0].mxu0
  %v526 = vadd.f32 %v90, %v525
  %v527 = vpop.f32.mrb[0].mxu0
  %528 = vmatprep.mubr.f32.mxu0 0.0
  %529 = vmatmul.mubr.f32.gmra.mrb[0].mxu0 %v199
  %v530 = vpop.f32.mrb[0].mxu0
  %v531 = vadd.f32 %v90, %v530
  %v532 = vpop.f32.mrb[0].mxu0
  %533 = vmatprep.mubr.f32.mxu0 0.0
  %534 = vmatmul.mubr.f32.gmra.mrb[0].mxu0 %v202
  %v535 = vpop.f32.mrb[0].mxu0
  %v536 = vadd.f32 %v90, %v535
  %v537 = vpop.f32.mrb[0].mxu0
  %538 = vmatprep.mubr.f32.mxu0 0.0
  %539 = vmatmul.mubr.f32.gmra.mrb[0].mxu0 %v205
  %v540 = vpop.f32.mrb[0].mxu0
  %v541 = vadd.f32 %v90, %v540
  %v542 = vpop.f32.mrb[0].mxu0
  %543 = vmatprep.mubr.f32.mxu0 0.0
  %544 = vmatmul.mubr.f32.gmra.mrb[0].mxu0 %v208
  %v545 = vpop.f32.mrb[0].mxu0
  %v546 = vadd.f32 %v90, %v545
  %v547 = vpop.f32.mrb[0].mxu0
  %548 = vmatprep.mubr.f32.mxu0 0.0
  %549 = vmatmul.mubr.f32.gmra.mrb[0].mxu0 %v211
  %v550 = vpop.f32.mrb[0].mxu0
  %v551 = vadd.f32 %v90, %v550
  %v552 = vpop.f32.mrb[0].mxu0
  %553 = vmatprep.mubr.f32.mxu0 0.0
  %554 = vmatmul.mubr.f32.gmra.mrb[0].mxu0 %v214
  %v555 = vpop.f32.mrb[0].mxu0
  %v556 = vadd.f32 %v90, %v555
  %v557 = vpop.f32.mrb[0].mxu0
  %558 = vmatprep.mubr.f32.mxu0 0.0
  %559 = vmatmul.mubr.f32.gmra.mrb[0].mxu0 %v217
  %v560 = vpop.f32.mrb[0].mxu0
  %v561 = vadd.f32 %v90, %v560
  %v562 = vpop.f32.mrb[0].mxu0
  %563 = vmatprep.mubr.f32.mxu0 0.0
  %564 = vmatmul.mubr.f32.gmra.mrb[0].mxu0 %v220
  %v565 = vpop.f32.mrb[0].mxu0
  %v566 = vadd.f32 %v90, %v565
  %v567 = vpop.f32.mrb[0].mxu0
  %568 = vmatprep.mubr.f32.mxu0 0.0
  %569 = vmatmul.mubr.f32.gmra.mrb[0].mxu0 %v223
  %v570 = vpop.f32.mrb[0].mxu0
  %v571 = vadd.f32 %v90, %v570
  %v572 = vpop.f32.mrb[0].mxu0
  %573 = vmatprep.mubr.f32.mxu0 0.0
  %574 = vmatmul.mubr.f32.gmra.mrb[0].mxu0 %v226
  %v575 = vpop.f32.mrb[0].mxu0
  %v576 = vadd.f32 %v90, %v575
  %v577 = vpop.f32.mrb[0].mxu0
  %578 = vmatprep.mubr.f32.mxu0 0.0
  %579 = vmatmul.mubr.f32.gmra.mrb[0].mxu0 %v229
  %v580 = vpop.f32.mrb[0].mxu0
  %v581 = vadd.f32 %v90, %v580
  %v582 = vpop.f32.mrb[0].mxu0
  %583 = vmatprep.mubr.f32.mxu0 0.0
  %584 = vmatmul.mubr.f32.gmra.mrb[0].mxu0 %v232
  %v585 = vpop.f32.mrb[0].mxu0
  %v586 = vadd.f32 %v90, %v585
  %v587 = vpop.f32.mrb[0].mxu0
  %588 = vmatprep.mubr.f32.mxu0 0.0
  %589 = vmatmul.mubr.f32.gmra.mrb[0].mxu0 %v235
  %v590 = vpop.f32.mrb[0].mxu0
  %v591 = vadd.f32 %v90, %v590
  %v592 = vpop.f32.mrb[0].mxu0
  %593 = vmatprep.mubr.f32.mxu0 0.0
  %594 = vmatmul.mubr.f32.gmra.mrb[0].mxu0 %v238
  %v595 = vpop.f32.mrb[0].mxu0
  %v596 = vadd.f32 %v90, %v595
  %v597 = vpop.f32.mrb[0].mxu0
  %598 = vmatprep.mubr.f32.mxu0 0.0
  %599 = vmatmul.mubr.f32.gmra.mrb[0].mxu0 %v241
  %v600 = vpop.f32.mrb[0].mxu0
  %v601 = vadd.f32 %v90, %v600
  %v602 = vpop.f32.mrb[0].mxu0
  %603 = vmatprep.mubr.f32.mxu0 0.0
  %604 = vmatmul.mubr.f32.gmra.mrb[0].mxu0 %v244
  %v605 = vpop.f32.mrb[0].mxu0
  %v606 = vadd.f32 %v90, %v605
  %v607 = vpop.f32.mrb[0].mxu0
  %608 = vmatprep.mubr.f32.mxu0 0.0
  %609 = vmatmul.mubr.f32.gmra.mrb[0].mxu0 %v247
  %v610 = vpop.f32.mrb[0].mxu0
  %v611 = vadd.f32 %v90, %v610
  %v612 = vpop.f32.mrb[0].mxu0
  %613 = vmatprep.mubr.f32.mxu0 0.0
  %614 = vmatmul.mubr.f32.gmra.mrb[0].mxu0 %v250
  %v615 = vpop.f32.mrb[0].mxu0
  %v616 = vadd.f32 %v90, %v615
  %v617 = vpop.f32.mrb[0].mxu0
  %618 = vmatprep.mubr.f32.mxu0 0.0
  %619 = vmatmul.mubr.f32.gmra.mrb[0].mxu0 %v253
  %v620 = vpop.f32.mrb[0].mxu0
  %v621 = vadd.f32 %v90, %v620
  %v622 = vpop.f32.mrb[0].mxu0
  %623 = vmatprep.mubr.f32.mxu0 0.0
  %624 = vmatmul.mubr.f32.gmra.mrb[0].mxu0 %v256
  %v625 = vpop.f32.mrb[0].mxu0
  %v626 = vadd.f32 %v90, %v625
  %v627 = vpop.f32.mrb[0].mxu0
  %628 = vmatprep.mubr.f32.mxu0 0.0
  %629 = vmatmul.mubr.f32.gmra.mrb[0].mxu0 %v259
  %v630 = vpop.f32.mrb[0].mxu0
  %v631 = vadd.f32 %v90, %v630
  %v632 = vpop.f32.mrb[0].mxu0
  %633 = vmatprep.mubr.f32.mxu0 0.0
  %634 = vmatmul.mubr.f32.gmra.mrb[0].mxu0 %v262
  %v635 = vpop.f32.mrb[0].mxu0
  %v636 = vadd.f32 %v90, %v635
  %v637 = vpop.f32.mrb[0].mxu0
  %638 = vmatprep.mubr.f32.mxu0 0.0
  %639 = vmatmul.mubr.f32.gmra.mrb[0].mxu0 %v265
  %v640 = vpop.f32.mrb[0].mxu0
  %v641 = vadd.f32 %v90, %v640
  %v642 = vpop.f32.mrb[0].mxu0
  %643 = vmatprep.mubr.f32.mxu0 0.0
  %644 = vmatmul.mubr.f32.gmra.mrb[0].mxu0 %v268
  %v645 = vpop.f32.mrb[0].mxu0
  %v646 = vadd.f32 %v90, %v645
  %v647 = vpop.f32.mrb[0].mxu0
  %648 = vmatprep.mubr.f32.mxu0 0.0
  %649 = vmatmul.mubr.f32.gmra.mrb[0].mxu0 %v271
  %v650 = vpop.f32.mrb[0].mxu0
  %v651 = vadd.f32 %v90, %v650
  %v652 = vpop.f32.mrb[0].mxu0
  %653 = vmatprep.mubr.f32.mxu0 0.0
  %654 = vmatmul.mubr.f32.gmra.mrb[0].mxu0 %v274
  %v655 = vpop.f32.mrb[0].mxu0
  %v656 = vadd.f32 %v90, %v655
  %v657 = vpop.f32.mrb[0].mxu0
  %658 = vmatprep.mubr.f32.mxu0 0.0
  %659 = vmatmul.mubr.f32.gmra.mrb[0].mxu0 %v277
  %v660 = vpop.f32.mrb[0].mxu0
  %v661 = vadd.f32 %v90, %v660
  %v662 = vpop.f32.mrb[0].mxu0
  %663 = vmatprep.mubr.f32.mxu0 0.0
  %664 = vmatmul.mubr.f32.gmra.mrb[0].mxu0 %v280
  %v665 = vpop.f32.mrb[0].mxu0
  %v666 = vadd.f32 %v90, %v665
  %v667 = vpop.f32.mrb[0].mxu0
  %668 = vmatprep.mubr.f32.mxu0 0.0
  %669 = vmatmul.mubr.f32.gmra.mrb[0].mxu0 %v283
  %v670 = vpop.f32.mrb[0].mxu0
  %v671 = vadd.f32 %v90, %v670
  %v672 = vpop.f32.mrb[0].mxu0
  %673 = vdwg.mxu0
  %v674 = vmax.f32 %v356, 0.0
  %v675 = vmax.f32 %v361, 0.0
  %v676 = vmax.f32 %v366, 0.0
  %v677 = vmax.f32 %v371, 0.0
  %v678 = vmax.f32 %v376, 0.0
  %v679 = vmax.f32 %v381, 0.0
  %v680 = vmax.f32 %v386, 0.0
  %v681 = vmax.f32 %v391, 0.0
  %v682 = vmax.f32 %v396, 0.0
  %v683 = vmax.f32 %v401, 0.0
  %v684 = vmax.f32 %v406, 0.0
  %v685 = vmax.f32 %v411, 0.0
  %v686 = vmax.f32 %v416, 0.0
  %v687 = vmax.f32 %v421, 0.0
  %v688 = vmax.f32 %v426, 0.0
  %v689 = vmax.f32 %v431, 0.0
  %v690 = vmax.f32 %v436, 0.0
  %v691 = vmax.f32 %v441, 0.0
  %v692 = vmax.f32 %v446, 0.0
  %v693 = vmax.f32 %v451, 0.0
  %v694 = vmax.f32 %v456, 0.0
  %v695 = vmax.f32 %v461, 0.0
  %v696 = vmax.f32 %v466, 0.0
  %v697 = vmax.f32 %v471, 0.0
  %v698 = vmax.f32 %v476, 0.0
  %v699 = vmax.f32 %v481, 0.0
  %v700 = vmax.f32 %v486, 0.0
  %v701 = vmax.f32 %v491, 0.0
  %v702 = vmax.f32 %v496, 0.0
  %v703 = vmax.f32 %v501, 0.0
  %v704 = vmax.f32 %v506, 0.0
  %v705 = vmax.f32 %v511, 0.0
  %v706 = vmax.f32 %v516, 0.0
  %v707 = vmax.f32 %v521, 0.0
  %v708 = vmax.f32 %v526, 0.0
  %v709 = vmax.f32 %v531, 0.0
  %v710 = vmax.f32 %v536, 0.0
  %v711 = vmax.f32 %v541, 0.0
  %v712 = vmax.f32 %v546, 0.0
  %v713 = vmax.f32 %v551, 0.0
  %v714 = vmax.f32 %v556, 0.0
  %v715 = vmax.f32 %v561, 0.0
  %v716 = vmax.f32 %v566, 0.0
  %v717 = vmax.f32 %v571, 0.0
  %v718 = vmax.f32 %v576, 0.0
  %v719 = vmax.f32 %v581, 0.0
  %v720 = vmax.f32 %v586, 0.0
  %v721 = vmax.f32 %v591, 0.0
  %v722 = vmax.f32 %v596, 0.0
  %v723 = vmax.f32 %v601, 0.0
  %v724 = vmax.f32 %v606, 0.0
  %v725 = vmax.f32 %v611, 0.0
  %v726 = vmax.f32 %v616, 0.0
  %v727 = vmax.f32 %v621, 0.0
  %v728 = vmax.f32 %v626, 0.0
  %v729 = vmax.f32 %v631, 0.0
  %v730 = vmax.f32 %v636, 0.0
  %v731 = vmax.f32 %v641, 0.0
  %v732 = vmax.f32 %v646, 0.0
  %v733 = vmax.f32 %v651, 0.0
  %v734 = vmax.f32 %v656, 0.0
  %v735 = vmax.f32 %v661, 0.0
  %v736 = vmax.f32 %v666, 0.0
  %v737 = vmax.f32 %v671, 0.0
  %vm738 = vcmask 523264
  %v739 = vsel %vm738, %v674, 0.0
  %v740 = vsel %vm738, %v675, 0.0
  %v741 = vadd.f32 %v739, %v740
  %v742 = vsel %vm738, %v676, 0.0
  %v743 = vadd.f32 %v741, %v742
  %v744 = vsel %vm738, %v677, 0.0
  %v745 = vadd.f32 %v743, %v744
  %v746 = vsel %vm738, %v678, 0.0
  %v747 = vadd.f32 %v745, %v746
  %v748 = vsel %vm738, %v679, 0.0
  %v749 = vadd.f32 %v747, %v748
  %v750 = vsel %vm738, %v680, 0.0
  %v751 = vadd.f32 %v749, %v750
  %v752 = vsel %vm738, %v681, 0.0
  %v753 = vadd.f32 %v751, %v752
  %v754 = vsel %vm738, %v682, 0.0
  %v755 = vadd.f32 %v753, %v754
  %v756 = vsel %vm738, %v683, 0.0
  %v757 = vadd.f32 %v755, %v756
  %v758 = vsel %vm738, %v684, 0.0
  %v759 = vadd.f32 %v757, %v758
  %v760 = vsel %vm738, %v685, 0.0
  %v761 = vadd.f32 %v759, %v760
  %v762 = vsel %vm738, %v686, 0.0
  %v763 = vadd.f32 %v761, %v762
  %v764 = vsel %vm738, %v687, 0.0
  %v765 = vadd.f32 %v763, %v764
  %v766 = vsel %vm738, %v688, 0.0
  %v767 = vadd.f32 %v765, %v766
  %v768 = vsel %vm738, %v689, 0.0
  %v769 = vadd.f32 %v767, %v768
  %v770 = vsel %vm738, %v690, 0.0
  %v771 = vadd.f32 %v769, %v770
  %v772 = vsel %vm738, %v691, 0.0
  %v773 = vadd.f32 %v771, %v772
  %v774 = vsel %vm738, %v692, 0.0
  %v775 = vadd.f32 %v773, %v774
  %v776 = vsel %vm738, %v693, 0.0
  %v777 = vadd.f32 %v775, %v776
  %v778 = vsel %vm738, %v694, 0.0
  %v779 = vadd.f32 %v777, %v778
  %v780 = vsel %vm738, %v695, 0.0
  %v781 = vadd.f32 %v779, %v780
  %v782 = vsel %vm738, %v696, 0.0
  %v783 = vadd.f32 %v781, %v782
  %v784 = vsel %vm738, %v697, 0.0
  %v785 = vadd.f32 %v783, %v784
  %v786 = vsel %vm738, %v698, 0.0
  %v787 = vadd.f32 %v785, %v786
  %v788 = vsel %vm738, %v699, 0.0
  %v789 = vadd.f32 %v787, %v788
  %v790 = vsel %vm738, %v700, 0.0
  %v791 = vadd.f32 %v789, %v790
  %v792 = vsel %vm738, %v701, 0.0
  %v793 = vadd.f32 %v791, %v792
  %v794 = vsel %vm738, %v702, 0.0
  %v795 = vadd.f32 %v793, %v794
  %v796 = vsel %vm738, %v703, 0.0
  %v797 = vadd.f32 %v795, %v796
  %v798 = vsel %vm738, %v704, 0.0
  %v799 = vadd.f32 %v797, %v798
  %v800 = vsel %vm738, %v705, 0.0
  %v801 = vadd.f32 %v799, %v800
  %v802 = vrot.slane %v801, 4
  %v803 = vadd.f32 %v801, %v802
  %v804 = vrot.slane %v803, 2
  %v805 = vadd.f32 %v803, %v804
  %v806 = vrot.slane %v805, 1
  %v807 = vadd.f32 %v805, %v806
  %v808 = vrcp.pop 256.0
  %v809 = vmul.f32 %v807, %v808
  %v810 = vsel %vm738, %v706, 0.0
  %v811 = vsel %vm738, %v707, 0.0
  %v812 = vadd.f32 %v810, %v811
  %v813 = vsel %vm738, %v708, 0.0
  %v814 = vadd.f32 %v812, %v813
  %v815 = vsel %vm738, %v709, 0.0
  %v816 = vadd.f32 %v814, %v815
  %v817 = vsel %vm738, %v710, 0.0
  %v818 = vadd.f32 %v816, %v817
  %v819 = vsel %vm738, %v711, 0.0
  %v820 = vadd.f32 %v818, %v819
  %v821 = vsel %vm738, %v712, 0.0
  %v822 = vadd.f32 %v820, %v821
  %v823 = vsel %vm738, %v713, 0.0
  %v824 = vadd.f32 %v822, %v823
  %v825 = vsel %vm738, %v714, 0.0
  %v826 = vadd.f32 %v824, %v825
  %v827 = vsel %vm738, %v715, 0.0
  %v828 = vadd.f32 %v826, %v827
  %v829 = vsel %vm738, %v716, 0.0
  %v830 = vadd.f32 %v828, %v829
  %v831 = vsel %vm738, %v717, 0.0
  %v832 = vadd.f32 %v830, %v831
  %v833 = vsel %vm738, %v718, 0.0
  %v834 = vadd.f32 %v832, %v833
  %v835 = vsel %vm738, %v719, 0.0
  %v836 = vadd.f32 %v834, %v835
  %v837 = vsel %vm738, %v720, 0.0
  %v838 = vadd.f32 %v836, %v837
  %v839 = vsel %vm738, %v721, 0.0
  %v840 = vadd.f32 %v838, %v839
  %v841 = vsel %vm738, %v722, 0.0
  %v842 = vadd.f32 %v840, %v841
  %v843 = vsel %vm738, %v723, 0.0
  %v844 = vadd.f32 %v842, %v843
  %v845 = vsel %vm738, %v724, 0.0
  %v846 = vadd.f32 %v844, %v845
  %v847 = vsel %vm738, %v725, 0.0
  %v848 = vadd.f32 %v846, %v847
  %v849 = vsel %vm738, %v726, 0.0
  %v850 = vadd.f32 %v848, %v849
  %v851 = vsel %vm738, %v727, 0.0
  %v852 = vadd.f32 %v850, %v851
  %v853 = vsel %vm738, %v728, 0.0
  %v854 = vadd.f32 %v852, %v853
  %v855 = vsel %vm738, %v729, 0.0
  %v856 = vadd.f32 %v854, %v855
  %v857 = vsel %vm738, %v730, 0.0
  %v858 = vadd.f32 %v856, %v857
  %v859 = vsel %vm738, %v731, 0.0
  %v860 = vadd.f32 %v858, %v859
  %v861 = vsel %vm738, %v732, 0.0
  %v862 = vadd.f32 %v860, %v861
  %v863 = vsel %vm738, %v733, 0.0
  %v864 = vadd.f32 %v862, %v863
  %v865 = vsel %vm738, %v734, 0.0
  %v866 = vadd.f32 %v864, %v865
  %v867 = vsel %vm738, %v735, 0.0
  %v868 = vadd.f32 %v866, %v867
  %v869 = vsel %vm738, %v736, 0.0
  %v870 = vadd.f32 %v868, %v869
  %v871 = vsel %vm738, %v737, 0.0
  %v872 = vadd.f32 %v870, %v871
  %v873 = vrot.slane %v872, 4
  %v874 = vadd.f32 %v872, %v873
  %v875 = vrot.slane %v874, 2
  %v876 = vadd.f32 %v874, %v875
  %v877 = vrot.slane %v876, 1
  %v878 = vadd.f32 %v876, %v877
  %v879 = vmul.f32 %v878, %v808
  %vm880 = vcmask 1040384
  %v881 = vsel %vm880, %v809, %v879
  %v882 = vld [vmem:[%s3] sm:$0xff]
  %v883 = vld [vmem:[%s3 + $0x8] sm:$0xff]
  %v884 = vld [vmem:[%s3 + $0x10] sm:$0xff]
  %v885 = vld [vmem:[%s3 + $0x18] sm:$0xff]
  %v886 = vld [vmem:[%s3 + $0x20] sm:$0xff]
  %v887 = vld [vmem:[%s3 + $0x28] sm:$0xff]
  %v888 = vld [vmem:[%s3 + $0x30] sm:$0xff]
  %v889 = vld [vmem:[%s3 + $0x38] sm:$0xff]
  %v890 = vld [vmem:[%s4] sm:$0x1]
  %v892 = vlaneseq
  %v893 = vshrl.u32 %v892, 7
  %v894 = vsub.s32 0, %v893
  %v895 = vrot.slane %v890, %v894
  %v898 = vsel %vm738, %v881, 0
  %900 = vmatprep.subr.mxu0 0.0
  %901 = vmatpush1.msra.mxu0 %v882
  %902 = vmatprep.subr.mxu0 0.0
  %903 = vmatpush1.msra.mxu0 %v883
  %904 = vmatprep.subr.mxu0 0.0
  %905 = vmatpush1.msra.mxu0 %v884
  %906 = vmatprep.subr.mxu0 0.0
  %907 = vmatpush1.msra.mxu0 %v885
  %908 = vmatprep.subr.mxu0 0.0
  %909 = vmatpush1.msra.mxu0 %v886
  %910 = vmatprep.subr.mxu0 0.0
  %911 = vmatpush1.msra.mxu0 %v887
  %912 = vmatprep.subr.mxu0 0.0
  %913 = vmatpush1.msra.mxu0 %v888
  %914 = vmatprep.subr.mxu0 0.0
  %915 = vmatpush1.msra.mxu0 %v889
  %916 = vmatprep.subr.mxu0 0.0
  %917 = vmatpush1.msra.mxu0 0.0
  %918 = vmatprep.subr.mxu0 0.0
  %919 = vmatpush1.msra.mxu0 0.0
  %920 = vmatprep.subr.mxu0 0.0
  %921 = vmatpush1.msra.mxu0 0.0
  %922 = vmatprep.subr.mxu0 0.0
  %923 = vmatpush1.msra.mxu0 0.0
  %924 = vmatprep.subr.mxu0 0.0
  %925 = vmatpush1.msra.mxu0 0.0
  %926 = vmatprep.subr.mxu0 0.0
  %927 = vmatpush1.msra.mxu0 0.0
  %928 = vmatprep.subr.mxu0 0.0
  %929 = vmatpush1.msra.mxu0 0.0
  %930 = vmatprep.subr.mxu0 0.0
  %931 = vmatpush1.msra.mxu0 0.0
  %932 = vmatprep.subr.mxu0 0.0
  %933 = vmatpush1.msra.mxu0 0.0
  %934 = vmatprep.subr.mxu0 0.0
  %935 = vmatpush1.msra.mxu0 0.0
  %936 = vmatprep.subr.mxu0 0.0
  %937 = vmatpush1.msra.mxu0 0.0
  %938 = vmatprep.subr.mxu0 0.0
  %939 = vmatpush1.msra.mxu0 0.0
  %940 = vmatprep.subr.mxu0 0.0
  %941 = vmatpush1.msra.mxu0 0.0
  %942 = vmatprep.subr.mxu0 0.0
  %943 = vmatpush1.msra.mxu0 0.0
  %944 = vmatprep.subr.mxu0 0.0
  %945 = vmatpush1.msra.mxu0 0.0
  %946 = vmatprep.subr.mxu0 0.0
  %947 = vmatpush1.msra.mxu0 0.0
  %948 = vmatprep.subr.mxu0 0.0
  %949 = vmatpush1.msra.mxu0 0.0
  %950 = vmatprep.subr.mxu0 0.0
  %951 = vmatpush1.msra.mxu0 0.0
  %952 = vmatprep.subr.mxu0 0.0
  %953 = vmatpush1.msra.mxu0 0.0
  %954 = vmatprep.subr.mxu0 0.0
  %955 = vmatpush1.msra.mxu0 0.0
  %956 = vmatprep.subr.mxu0 0.0
  %957 = vmatpush1.msra.mxu0 0.0
  %958 = vmatprep.subr.mxu0 0.0
  %959 = vmatpush1.msra.mxu0 0.0
  %960 = vmatprep.subr.mxu0 0.0
  %961 = vmatpush1.msra.mxu0 0.0
  %962 = vmatprep.subr.mxu0 0.0
  %963 = vmatpush1.msra.mxu0 0.0
  %964 = vmatprep.mubr.f32.mxu0 0.0
  %965 = vmatmul.mubr.f32.gmra.mrb[0].mxu0 %v898
  %v966 = vpop.f32.mrb[0].mxu0
  %v967 = vadd.f32 %v895, %v966
  %v968 = vpop.f32.mrb[0].mxu0
  %969 = vdwg.mxu0
  %vm970 = vcmask 254976
  %971 = vst.msk [vmem:[%s5] sm:$0x3] %vm970, %v967
  // Predicated region
  $region22: #{cnn_to_lstm_forward.2} parent=0 // pred_check
    _
  $region23: #{cnn_to_lstm_forward.2} parent=0 // pred_check_branch
    %973 = sbr.rel (0) target = $region25
  $region24: #{cnn_to_lstm_forward.2} parent=0 // pred_region
    _
  $region25: #{cnn_to_lstm_forward.2} parent=0 // pred_fallthru
    _
  // Predicated region
  $region26: #{cnn_to_lstm_forward.2} parent=0 // pred_check
    _
  $region27: #{cnn_to_lstm_forward.2} parent=0 // pred_check_branch
    %975 = sbr.rel (0) target = $region29
  $region28: #{cnn_to_lstm_forward.2} parent=0 // pred_region
    _
  $region29: #{cnn_to_lstm_forward.2} parent=0 // pred_fallthru
    _

// kernel: cnn_to_lstm_forward.3
$region0: #{cnn_to_lstm_forward.3}
  #allocation0 [shape = 'u32[]', space=smem, size = 0x4, offset = 0x4, fixed_abs, tag = 'smem constant byte address 0x4 - core index']
  #allocation1 [shape = 'u32[144,128]{1,0:T(1,128)}', space=vmem, size = 0x12000, scoped, tag = 'internal scratch']
  #allocation2 [shape = 'f32[18,32]{1,0:T(8,128)}', space=vmem, size = 0x3000, scoped, tag = 'scratch operand']
  %s0 = inlined_call_operand.vmem [shape: f32[18,32], index: 0, kind: input, shape index: {}]
  %s1 = inlined_call_operand.vmem [shape: f32[32,128], index: 1, kind: input, shape index: {}]
  %s2 = inlined_call_operand.vmem [shape: f32[32,128], index: 2, kind: input, shape index: {}]
  %s3 = inlined_call_operand.vmem [shape: f32[1,128], index: 3, kind: input, shape index: {}]
  %s4 = inlined_call_operand.vmem [shape: f32[32,128], index: 4, kind: input, shape index: {}]
  %s5 = inlined_call_operand.vmem [shape: f32[32,128], index: 5, kind: input, shape index: {}]
  %s6 = inlined_call_operand.vmem [shape: f32[1,128], index: 6, kind: input, shape index: {}]
  %s7 = inlined_call_operand.vmem [shape: f32[32,128], index: 7, kind: input, shape index: {}]
  %s8 = inlined_call_operand.vmem [shape: f32[1,128], index: 8, kind: input, shape index: {}]
  %s9 = inlined_call_operand.vmem [shape: f32[18,128], index: 9, kind: output, shape index: {}]
  %s10 = sld [smem:[#allocation0]]
  $region46: #{cnn_to_lstm_forward.3} parent=0
    _
  %s12 = ssub.s32 1, %s10
  %s13 = scalar_select 0, %s12, %s10
  // Predicated region
  $region2: #{cnn_to_lstm_forward.3} parent=0 // pred_check
    _
  $region3: #{cnn_to_lstm_forward.3} parent=0 // pred_check_branch
    %15 = sbr.rel (0) target = $region5
  $region4: #{cnn_to_lstm_forward.3} parent=0 // pred_region
    _
  $region5: #{cnn_to_lstm_forward.3} parent=0 // pred_fallthru
    _
  // Predicated region
  $region6: #{cnn_to_lstm_forward.3} parent=0 // pred_check
    _
  $region7: #{cnn_to_lstm_forward.3} parent=0 // pred_check_branch
    %17 = sbr.rel (0) target = $region9
  $region8: #{cnn_to_lstm_forward.3} parent=0 // pred_region
    _
  $region9: #{cnn_to_lstm_forward.3} parent=0 // pred_fallthru
    _
  // Predicated region
  $region10: #{cnn_to_lstm_forward.3} parent=0 // pred_check
    _
  $region11: #{cnn_to_lstm_forward.3} parent=0 // pred_check_branch
    %19 = sbr.rel (0) target = $region13
  $region12: #{cnn_to_lstm_forward.3} parent=0 // pred_region
    _
  $region13: #{cnn_to_lstm_forward.3} parent=0 // pred_fallthru
    _
  // Predicated region
  $region14: #{cnn_to_lstm_forward.3} parent=0 // pred_check
    _
  $region15: #{cnn_to_lstm_forward.3} parent=0 // pred_check_branch
    %21 = sbr.rel (0) target = $region17
  $region16: #{cnn_to_lstm_forward.3} parent=0 // pred_region
    _
  $region17: #{cnn_to_lstm_forward.3} parent=0 // pred_fallthru
    _
  // Predicated region
  $region18: #{cnn_to_lstm_forward.3} parent=0 // pred_check
    _
  $region19: #{cnn_to_lstm_forward.3} parent=0 // pred_check_branch
    %23 = sbr.rel (0) target = $region21
  $region20: #{cnn_to_lstm_forward.3} parent=0 // pred_region
    _
  $region21: #{cnn_to_lstm_forward.3} parent=0 // pred_fallthru
    _
  // Predicated region
  $region22: #{cnn_to_lstm_forward.3} parent=0 // pred_check
    _
  $region23: #{cnn_to_lstm_forward.3} parent=0 // pred_check_branch
    %25 = sbr.rel (0) target = $region25
  $region24: #{cnn_to_lstm_forward.3} parent=0 // pred_region
    _
  $region25: #{cnn_to_lstm_forward.3} parent=0 // pred_fallthru
    _
  // Predicated region
  $region26: #{cnn_to_lstm_forward.3} parent=0 // pred_check
    _
  $region27: #{cnn_to_lstm_forward.3} parent=0 // pred_check_branch
    %27 = sbr.rel (0) target = $region29
  $region28: #{cnn_to_lstm_forward.3} parent=0 // pred_region
    _
  $region29: #{cnn_to_lstm_forward.3} parent=0 // pred_fallthru
    _
  // Predicated region
  $region30: #{cnn_to_lstm_forward.3} parent=0 // pred_check
    _
  $region31: #{cnn_to_lstm_forward.3} parent=0 // pred_check_branch
    %29 = sbr.rel (0) target = $region33
  $region32: #{cnn_to_lstm_forward.3} parent=0 // pred_region
    _
  $region33: #{cnn_to_lstm_forward.3} parent=0 // pred_fallthru
    _
  // Predicated region
  $region34: #{cnn_to_lstm_forward.3} parent=0 // pred_check
    _
  $region35: #{cnn_to_lstm_forward.3} parent=0 // pred_check_branch
    %31 = sbr.rel (0) target = $region37
  $region36: #{cnn_to_lstm_forward.3} parent=0 // pred_region
    _
  $region37: #{cnn_to_lstm_forward.3} parent=0 // pred_fallthru
    _
  %v32 = vlaneseq
  %v33 = vand.u32 %v32, 127
  %vm34 = vcmp.ge.s32.totalorder %v33, 64
  %vm35 = vcmp.lt.s32.totalorder %v33, 96
  %vm36 = vmand %vm34, %vm35
  %v37 = vld [vmem:[%s0] sm:$0xff]
  %v38 = vld [vmem:[%s0 + $0x8] sm:$0xff]
  %v39 = vld [vmem:[%s0 + $0x10] sm:$0x3]
  %v40 = vld [vmem:[%s1] sm:$0xff]
  %v41 = vld [vmem:[%s1 + $0x8] sm:$0xff]
  %v42 = vld [vmem:[%s1 + $0x10] sm:$0xff]
  %v43 = vld [vmem:[%s1 + $0x18] sm:$0xff]
  %v44 = vld [vmem:[%s3] sm:$0x1]
  %v46 = vlaneseq
  %v47 = vshrl.u32 %v46, 7
  %v48 = vsub.s32 0, %v47
  %v49 = vrot.slane %v44, %v48
  %vm51 = vcmask 261120
  %v53 = vsel %vm51, %v37, 0
  %v56 = vsel %vm51, %v38, 0
  %v59 = vsel %vm51, %v39, 0
  %61 = vmatprep.subr.mxu0 0.0
  %62 = vmatpush1.msra.mxu0 %v40
  %63 = vmatprep.subr.mxu0 0.0
  %64 = vmatpush1.msra.mxu0 %v41
  %65 = vmatprep.subr.mxu0 0.0
  %66 = vmatpush1.msra.mxu0 %v42
  %67 = vmatprep.subr.mxu0 0.0
  %68 = vmatpush1.msra.mxu0 %v43
  %69 = vmatprep.subr.mxu0 0.0
  %70 = vmatpush1.msra.mxu0 0.0
  %71 = vmatprep.subr.mxu0 0.0
  %72 = vmatpush1.msra.mxu0 0.0
  %73 = vmatprep.subr.mxu0 0.0
  %74 = vmatpush1.msra.mxu0 0.0
  %75 = vmatprep.subr.mxu0 0.0
  %76 = vmatpush1.msra.mxu0 0.0
  %77 = vmatprep.subr.mxu0 0.0
  %78 = vmatpush1.msra.mxu0 0.0
  %79 = vmatprep.subr.mxu0 0.0
  %80 = vmatpush1.msra.mxu0 0.0
  %81 = vmatprep.subr.mxu0 0.0
  %82 = vmatpush1.msra.mxu0 0.0
  %83 = vmatprep.subr.mxu0 0.0
  %84 = vmatpush1.msra.mxu0 0.0
  %85 = vmatprep.subr.mxu0 0.0
  %86 = vmatpush1.msra.mxu0 0.0
  %87 = vmatprep.subr.mxu0 0.0
  %88 = vmatpush1.msra.mxu0 0.0
  %89 = vmatprep.subr.mxu0 0.0
  %90 = vmatpush1.msra.mxu0 0.0
  %91 = vmatprep.subr.mxu0 0.0
  %92 = vmatpush1.msra.mxu0 0.0
  %93 = vmatprep.subr.mxu0 0.0
  %94 = vmatpush1.msra.mxu0 0.0
  %95 = vmatprep.subr.mxu0 0.0
  %96 = vmatpush1.msra.mxu0 0.0
  %97 = vmatprep.subr.mxu0 0.0
  %98 = vmatpush1.msra.mxu0 0.0
  %99 = vmatprep.subr.mxu0 0.0
  %100 = vmatpush1.msra.mxu0 0.0
  %101 = vmatprep.subr.mxu0 0.0
  %102 = vmatpush1.msra.mxu0 0.0
  %103 = vmatprep.subr.mxu0 0.0
  %104 = vmatpush1.msra.mxu0 0.0
  %105 = vmatprep.subr.mxu0 0.0
  %106 = vmatpush1.msra.mxu0 0.0
  %107 = vmatprep.subr.mxu0 0.0
  %108 = vmatpush1.msra.mxu0 0.0
  %109 = vmatprep.subr.mxu0 0.0
  %110 = vmatpush1.msra.mxu0 0.0
  %111 = vmatprep.subr.mxu0 0.0
  %112 = vmatpush1.msra.mxu0 0.0
  %113 = vmatprep.subr.mxu0 0.0
  %114 = vmatpush1.msra.mxu0 0.0
  %115 = vmatprep.subr.mxu0 0.0
  %116 = vmatpush1.msra.mxu0 0.0
  %117 = vmatprep.subr.mxu0 0.0
  %118 = vmatpush1.msra.mxu0 0.0
  %119 = vmatprep.subr.mxu0 0.0
  %120 = vmatpush1.msra.mxu0 0.0
  %121 = vmatprep.subr.mxu0 0.0
  %122 = vmatpush1.msra.mxu0 0.0
  %123 = vmatprep.subr.mxu0 0.0
  %124 = vmatpush1.msra.mxu0 0.0
  %125 = vmatprep.mubr.f32.mxu0 0.0
  %126 = vmatmul.mubr.f32.gmra.mrb[0].mxu0 %v53
  %v127 = vpop.f32.mrb[0].mxu0
  %v128 = vadd.f32 %v49, %v127
  %v129 = vpop.f32.mrb[0].mxu0
  %130 = vmatprep.mubr.f32.mxu0 0.0
  %131 = vmatmul.mubr.f32.gmra.mrb[0].mxu0 %v56
  %v132 = vpop.f32.mrb[0].mxu0
  %v133 = vadd.f32 %v49, %v132
  %v134 = vpop.f32.mrb[0].mxu0
  %135 = vmatprep.mubr.f32.mxu0 0.0
  %136 = vmatmul.mubr.f32.gmra.mrb[0].mxu0 %v59
  %v137 = vpop.f32.mrb[0].mxu0
  %v138 = vadd.f32 %v49, %v137
  %v139 = vpop.f32.mrb[0].mxu0
  %140 = vdwg.mxu0
  %v141 = vld [vmem:[%s2] sm:$0xff]
  %v142 = vld [vmem:[%s2 + $0x8] sm:$0xff]
  %v143 = vld [vmem:[%s2 + $0x10] sm:$0xff]
  %v144 = vld [vmem:[%s2 + $0x18] sm:$0xff]
  %v146 = vsel %vm51, 0.0, 0
  %148 = vmatprep.subr.mxu0 0.0
  %149 = vmatpush1.msra.mxu0 %v141
  %150 = vmatprep.subr.mxu0 0.0
  %151 = vmatpush1.msra.mxu0 %v142
  %152 = vmatprep.subr.mxu0 0.0
  %153 = vmatpush1.msra.mxu0 %v143
  %154 = vmatprep.subr.mxu0 0.0
  %155 = vmatpush1.msra.mxu0 %v144
  %156 = vmatprep.subr.mxu0 0.0
  %157 = vmatpush1.msra.mxu0 0.0
  %158 = vmatprep.subr.mxu0 0.0
  %159 = vmatpush1.msra.mxu0 0.0
  %160 = vmatprep.subr.mxu0 0.0
  %161 = vmatpush1.msra.mxu0 0.0
  %162 = vmatprep.subr.mxu0 0.0
  %163 = vmatpush1.msra.mxu0 0.0
  %164 = vmatprep.subr.mxu0 0.0
  %165 = vmatpush1.msra.mxu0 0.0
  %166 = vmatprep.subr.mxu0 0.0
  %167 = vmatpush1.msra.mxu0 0.0
  %168 = vmatprep.subr.mxu0 0.0
  %169 = vmatpush1.msra.mxu0 0.0
  %170 = vmatprep.subr.mxu0 0.0
  %171 = vmatpush1.msra.mxu0 0.0
  %172 = vmatprep.subr.mxu0 0.0
  %173 = vmatpush1.msra.mxu0 0.0
  %174 = vmatprep.subr.mxu0 0.0
  %175 = vmatpush1.msra.mxu0 0.0
  %176 = vmatprep.subr.mxu0 0.0
  %177 = vmatpush1.msra.mxu0 0.0
  %178 = vmatprep.subr.mxu0 0.0
  %179 = vmatpush1.msra.mxu0 0.0
  %180 = vmatprep.subr.mxu0 0.0
  %181 = vmatpush1.msra.mxu0 0.0
  %182 = vmatprep.subr.mxu0 0.0
  %183 = vmatpush1.msra.mxu0 0.0
  %184 = vmatprep.subr.mxu0 0.0
  %185 = vmatpush1.msra.mxu0 0.0
  %186 = vmatprep.subr.mxu0 0.0
  %187 = vmatpush1.msra.mxu0 0.0
  %188 = vmatprep.subr.mxu0 0.0
  %189 = vmatpush1.msra.mxu0 0.0
  %190 = vmatprep.subr.mxu0 0.0
  %191 = vmatpush1.msra.mxu0 0.0
  %192 = vmatprep.subr.mxu0 0.0
  %193 = vmatpush1.msra.mxu0 0.0
  %194 = vmatprep.subr.mxu0 0.0
  %195 = vmatpush1.msra.mxu0 0.0
  %196 = vmatprep.subr.mxu0 0.0
  %197 = vmatpush1.msra.mxu0 0.0
  %198 = vmatprep.subr.mxu0 0.0
  %199 = vmatpush1.msra.mxu0 0.0
  %200 = vmatprep.subr.mxu0 0.0
  %201 = vmatpush1.msra.mxu0 0.0
  %202 = vmatprep.subr.mxu0 0.0
  %203 = vmatpush1.msra.mxu0 0.0
  %204 = vmatprep.subr.mxu0 0.0
  %205 = vmatpush1.msra.mxu0 0.0
  %206 = vmatprep.subr.mxu0 0.0
  %207 = vmatpush1.msra.mxu0 0.0
  %208 = vmatprep.subr.mxu0 0.0
  %209 = vmatpush1.msra.mxu0 0.0
  %210 = vmatprep.subr.mxu0 0.0
  %211 = vmatpush1.msra.mxu0 0.0
  %212 = vmatprep.mubr.f32.mxu0 0.0
  %213 = vmatmul.mubr.f32.gmra.mrb[0].mxu0 %v146
  %v214 = vpop.f32.mrb[0].mxu0
  %v215 = vadd.f32 0.0, %v214
  %v216 = vpop.f32.mrb[0].mxu0
  %217 = vdwg.mxu0
  %v218 = vadd.f32 %v128, %v215
  %v219 = vtanh.pop %v218
  %v220 = vxor.u32 %v218, 2147483648
  %v221 = vmul.f32 %v220, 1.442695
  %v222 = vpow.pop %v221
  %v223 = vadd.f32 %v222, 1.0
  %v224 = vrcp.pop %v223
  %v225 = vmul.f32 1.0, %v224
  %v226 = vsel %vm36, %v219, %v225
  %v227 = vmul.f32 %v226, 0.0
  %229 = vrot.lane.b32.xlu0 %v226, 64
  %v230 = vpop.permute.xlu0 %229
  %v232 = vmul.f32 %v226, %v230
  %234 = vrot.lane.b32.xlu0 %v232, 32
  %v235 = vpop.permute.xlu0 %234
  %v237 = vadd.f32 %v227, %v235
  %v238 = vtanh.pop %v237
  %240 = vrot.lane.b32.xlu0 %v238, 64
  %v241 = vpop.permute.xlu0 %240
  %v243 = vmul.f32 %v226, %v241
  %245 = vrot.lane.b32.xlu0 %v243, 32
  %v246 = vpop.permute.xlu0 %245
  %vm248 = vcmask 254976
  %249 = vst.msk [vmem:[#allocation2] sm:$0x3] %vm248, %v246
  %v250 = vsel %vm51, %v246, 0
  %252 = vmatprep.subr.mxu0 0.0
  %253 = vmatpush1.msra.mxu0 %v141
  %254 = vmatprep.subr.mxu0 0.0
  %255 = vmatpush1.msra.mxu0 %v142
  %256 = vmatprep.subr.mxu0 0.0
  %257 = vmatpush1.msra.mxu0 %v143
  %258 = vmatprep.subr.mxu0 0.0
  %259 = vmatpush1.msra.mxu0 %v144
  %260 = vmatprep.subr.mxu0 0.0
  %261 = vmatpush1.msra.mxu0 0.0
  %262 = vmatprep.subr.mxu0 0.0
  %263 = vmatpush1.msra.mxu0 0.0
  %264 = vmatprep.subr.mxu0 0.0
  %265 = vmatpush1.msra.mxu0 0.0
  %266 = vmatprep.subr.mxu0 0.0
  %267 = vmatpush1.msra.mxu0 0.0
  %268 = vmatprep.subr.mxu0 0.0
  %269 = vmatpush1.msra.mxu0 0.0
  %270 = vmatprep.subr.mxu0 0.0
  %271 = vmatpush1.msra.mxu0 0.0
  %272 = vmatprep.subr.mxu0 0.0
  %273 = vmatpush1.msra.mxu0 0.0
  %274 = vmatprep.subr.mxu0 0.0
  %275 = vmatpush1.msra.mxu0 0.0
  %276 = vmatprep.subr.mxu0 0.0
  %277 = vmatpush1.msra.mxu0 0.0
  %278 = vmatprep.subr.mxu0 0.0
  %279 = vmatpush1.msra.mxu0 0.0
  %280 = vmatprep.subr.mxu0 0.0
  %281 = vmatpush1.msra.mxu0 0.0
  %282 = vmatprep.subr.mxu0 0.0
  %283 = vmatpush1.msra.mxu0 0.0
  %284 = vmatprep.subr.mxu0 0.0
  %285 = vmatpush1.msra.mxu0 0.0
  %286 = vmatprep.subr.mxu0 0.0
  %287 = vmatpush1.msra.mxu0 0.0
  %288 = vmatprep.subr.mxu0 0.0
  %289 = vmatpush1.msra.mxu0 0.0
  %290 = vmatprep.subr.mxu0 0.0
  %291 = vmatpush1.msra.mxu0 0.0
  %292 = vmatprep.subr.mxu0 0.0
  %293 = vmatpush1.msra.mxu0 0.0
  %294 = vmatprep.subr.mxu0 0.0
  %295 = vmatpush1.msra.mxu0 0.0
  %296 = vmatprep.subr.mxu0 0.0
  %297 = vmatpush1.msra.mxu0 0.0
  %298 = vmatprep.subr.mxu0 0.0
  %299 = vmatpush1.msra.mxu0 0.0
  %300 = vmatprep.subr.mxu0 0.0
  %301 = vmatpush1.msra.mxu0 0.0
  %302 = vmatprep.subr.mxu0 0.0
  %303 = vmatpush1.msra.mxu0 0.0
  %304 = vmatprep.subr.mxu0 0.0
  %305 = vmatpush1.msra.mxu0 0.0
  %306 = vmatprep.subr.mxu0 0.0
  %307 = vmatpush1.msra.mxu0 0.0
  %308 = vmatprep.subr.mxu0 0.0
  %309 = vmatpush1.msra.mxu0 0.0
  %310 = vmatprep.subr.mxu0 0.0
  %311 = vmatpush1.msra.mxu0 0.0
  %312 = vmatprep.subr.mxu0 0.0
  %313 = vmatpush1.msra.mxu0 0.0
  %314 = vmatprep.subr.mxu0 0.0
  %315 = vmatpush1.msra.mxu0 0.0
  %316 = vmatprep.mubr.f32.mxu0 0.0
  %317 = vmatmul.mubr.f32.gmra.mrb[0].mxu0 %v250
  %v318 = vpop.f32.mrb[0].mxu0
  %v319 = vadd.f32 0.0, %v318
  %v320 = vpop.f32.mrb[0].mxu0
  %321 = vdwg.mxu0
  %v323 = vrot.slane %v319, 6
  %v325 = vadd.f32 %v128, %v323
  %v326 = vtanh.pop %v325
  %v327 = vxor.u32 %v325, 2147483648
  %v328 = vmul.f32 %v327, 1.442695
  %v329 = vpow.pop %v328
  %v330 = vadd.f32 %v329, 1.0
  %v331 = vrcp.pop %v330
  %v332 = vmul.f32 1.0, %v331
  %v333 = vsel %vm36, %v326, %v332
  %v335 = vrot.slane %v237, 6
  %v337 = vmul.f32 %v333, %v335
  %339 = vrot.lane.b32.xlu0 %v333, 64
  %v340 = vpop.permute.xlu0 %339
  %v342 = vmul.f32 %v333, %v340
  %344 = vrot.lane.b32.xlu0 %v342, 32
  %v345 = vpop.permute.xlu0 %344
  %v347 = vadd.f32 %v337, %v345
  %v348 = vtanh.pop %v347
  %350 = vrot.lane.b32.xlu0 %v348, 64
  %v351 = vpop.permute.xlu0 %350
  %v353 = vmul.f32 %v333, %v351
  %355 = vrot.lane.b32.xlu0 %v353, 32
  %v356 = vpop.permute.xlu0 %355
  %vm358 = vcmask 257026
  %359 = vst.msk [vmem:[#allocation2] sm:$0xc] %vm358, %v356
  %v360 = vrot.slane %v353, 2
  %361 = vrot.lane.b32.xlu0 %v360, 32
  %v362 = vpop.permute.xlu0 %361
  %v363 = vsel %vm51, %v362, 0
  %365 = vmatprep.subr.mxu0 0.0
  %366 = vmatpush1.msra.mxu0 %v141
  %367 = vmatprep.subr.mxu0 0.0
  %368 = vmatpush1.msra.mxu0 %v142
  %369 = vmatprep.subr.mxu0 0.0
  %370 = vmatpush1.msra.mxu0 %v143
  %371 = vmatprep.subr.mxu0 0.0
  %372 = vmatpush1.msra.mxu0 %v144
  %373 = vmatprep.subr.mxu0 0.0
  %374 = vmatpush1.msra.mxu0 0.0
  %375 = vmatprep.subr.mxu0 0.0
  %376 = vmatpush1.msra.mxu0 0.0
  %377 = vmatprep.subr.mxu0 0.0
  %378 = vmatpush1.msra.mxu0 0.0
  %379 = vmatprep.subr.mxu0 0.0
  %380 = vmatpush1.msra.mxu0 0.0
  %381 = vmatprep.subr.mxu0 0.0
  %382 = vmatpush1.msra.mxu0 0.0
  %383 = vmatprep.subr.mxu0 0.0
  %384 = vmatpush1.msra.mxu0 0.0
  %385 = vmatprep.subr.mxu0 0.0
  %386 = vmatpush1.msra.mxu0 0.0
  %387 = vmatprep.subr.mxu0 0.0
  %388 = vmatpush1.msra.mxu0 0.0
  %389 = vmatprep.subr.mxu0 0.0
  %390 = vmatpush1.msra.mxu0 0.0
  %391 = vmatprep.subr.mxu0 0.0
  %392 = vmatpush1.msra.mxu0 0.0
  %393 = vmatprep.subr.mxu0 0.0
  %394 = vmatpush1.msra.mxu0 0.0
  %395 = vmatprep.subr.mxu0 0.0
  %396 = vmatpush1.msra.mxu0 0.0
  %397 = vmatprep.subr.mxu0 0.0
  %398 = vmatpush1.msra.mxu0 0.0
  %399 = vmatprep.subr.mxu0 0.0
  %400 = vmatpush1.msra.mxu0 0.0
  %401 = vmatprep.subr.mxu0 0.0
  %402 = vmatpush1.msra.mxu0 0.0
  %403 = vmatprep.subr.mxu0 0.0
  %404 = vmatpush1.msra.mxu0 0.0
  %405 = vmatprep.subr.mxu0 0.0
  %406 = vmatpush1.msra.mxu0 0.0
  %407 = vmatprep.subr.mxu0 0.0
  %408 = vmatpush1.msra.mxu0 0.0
  %409 = vmatprep.subr.mxu0 0.0
  %410 = vmatpush1.msra.mxu0 0.0
  %411 = vmatprep.subr.mxu0 0.0
  %412 = vmatpush1.msra.mxu0 0.0
  %413 = vmatprep.subr.mxu0 0.0
  %414 = vmatpush1.msra.mxu0 0.0
  %415 = vmatprep.subr.mxu0 0.0
  %416 = vmatpush1.msra.mxu0 0.0
  %417 = vmatprep.subr.mxu0 0.0
  %418 = vmatpush1.msra.mxu0 0.0
  %419 = vmatprep.subr.mxu0 0.0
  %420 = vmatpush1.msra.mxu0 0.0
  %421 = vmatprep.subr.mxu0 0.0
  %422 = vmatpush1.msra.mxu0 0.0
  %423 = vmatprep.subr.mxu0 0.0
  %424 = vmatpush1.msra.mxu0 0.0
  %425 = vmatprep.subr.mxu0 0.0
  %426 = vmatpush1.msra.mxu0 0.0
  %427 = vmatprep.subr.mxu0 0.0
  %428 = vmatpush1.msra.mxu0 0.0
  %429 = vmatprep.mubr.f32.mxu0 0.0
  %430 = vmatmul.mubr.f32.gmra.mrb[0].mxu0 %v363
  %v431 = vpop.f32.mrb[0].mxu0
  %v432 = vadd.f32 0.0, %v431
  %v433 = vpop.f32.mrb[0].mxu0
  %434 = vdwg.mxu0
  %v436 = vrot.slane %v432, 4
  %v438 = vadd.f32 %v128, %v436
  %v439 = vtanh.pop %v438
  %v440 = vxor.u32 %v438, 2147483648
  %v441 = vmul.f32 %v440, 1.442695
  %v442 = vpow.pop %v441
  %v443 = vadd.f32 %v442, 1.0
  %v444 = vrcp.pop %v443
  %v445 = vmul.f32 1.0, %v444
  %v446 = vsel %vm36, %v439, %v445
  %v448 = vrot.slane %v347, 6
  %v450 = vmul.f32 %v446, %v448
  %452 = vrot.lane.b32.xlu0 %v446, 64
  %v453 = vpop.permute.xlu0 %452
  %v455 = vmul.f32 %v446, %v453
  %457 = vrot.lane.b32.xlu0 %v455, 32
  %v458 = vpop.permute.xlu0 %457
  %v460 = vadd.f32 %v450, %v458
  %v461 = vtanh.pop %v460
  %463 = vrot.lane.b32.xlu0 %v461, 64
  %v464 = vpop.permute.xlu0 %463
  %v466 = vmul.f32 %v446, %v464
  %468 = vrot.lane.b32.xlu0 %v466, 32
  %v469 = vpop.permute.xlu0 %468
  %vm471 = vcmask 259076
  %472 = vst.msk [vmem:[#allocation2] sm:$0x30] %vm471, %v469
  %v473 = vrot.slane %v466, 4
  %474 = vrot.lane.b32.xlu0 %v473, 32
  %v475 = vpop.permute.xlu0 %474
  %v476 = vsel %vm51, %v475, 0
  %478 = vmatprep.subr.mxu0 0.0
  %479 = vmatpush1.msra.mxu0 %v141
  %480 = vmatprep.subr.mxu0 0.0
  %481 = vmatpush1.msra.mxu0 %v142
  %482 = vmatprep.subr.mxu0 0.0
  %483 = vmatpush1.msra.mxu0 %v143
  %484 = vmatprep.subr.mxu0 0.0
  %485 = vmatpush1.msra.mxu0 %v144
  %486 = vmatprep.subr.mxu0 0.0
  %487 = vmatpush1.msra.mxu0 0.0
  %488 = vmatprep.subr.mxu0 0.0
  %489 = vmatpush1.msra.mxu0 0.0
  %490 = vmatprep.subr.mxu0 0.0
  %491 = vmatpush1.msra.mxu0 0.0
  %492 = vmatprep.subr.mxu0 0.0
  %493 = vmatpush1.msra.mxu0 0.0
  %494 = vmatprep.subr.mxu0 0.0
  %495 = vmatpush1.msra.mxu0 0.0
  %496 = vmatprep.subr.mxu0 0.0
  %497 = vmatpush1.msra.mxu0 0.0
  %498 = vmatprep.subr.mxu0 0.0
  %499 = vmatpush1.msra.mxu0 0.0
  %500 = vmatprep.subr.mxu0 0.0
  %501 = vmatpush1.msra.mxu0 0.0
  %502 = vmatprep.subr.mxu0 0.0
  %503 = vmatpush1.msra.mxu0 0.0
  %504 = vmatprep.subr.mxu0 0.0
  %505 = vmatpush1.msra.mxu0 0.0
  %506 = vmatprep.subr.mxu0 0.0
  %507 = vmatpush1.msra.mxu0 0.0
  %508 = vmatprep.subr.mxu0 0.0
  %509 = vmatpush1.msra.mxu0 0.0
  %510 = vmatprep.subr.mxu0 0.0
  %511 = vmatpush1.msra.mxu0 0.0
  %512 = vmatprep.subr.mxu0 0.0
  %513 = vmatpush1.msra.mxu0 0.0
  %514 = vmatprep.subr.mxu0 0.0
  %515 = vmatpush1.msra.mxu0 0.0
  %516 = vmatprep.subr.mxu0 0.0
  %517 = vmatpush1.msra.mxu0 0.0
  %518 = vmatprep.subr.mxu0 0.0
  %519 = vmatpush1.msra.mxu0 0.0
  %520 = vmatprep.subr.mxu0 0.0
  %521 = vmatpush1.msra.mxu0 0.0
  %522 = vmatprep.subr.mxu0 0.0
  %523 = vmatpush1.msra.mxu0 0.0
  %524 = vmatprep.subr.mxu0 0.0
  %525 = vmatpush1.msra.mxu0 0.0
  %526 = vmatprep.subr.mxu0 0.0
  %527 = vmatpush1.msra.mxu0 0.0
  %528 = vmatprep.subr.mxu0 0.0
  %529 = vmatpush1.msra.mxu0 0.0
  %530 = vmatprep.subr.mxu0 0.0
  %531 = vmatpush1.msra.mxu0 0.0
  %532 = vmatprep.subr.mxu0 0.0
  %533 = vmatpush1.msra.mxu0 0.0
  %534 = vmatprep.subr.mxu0 0.0
  %535 = vmatpush1.msra.mxu0 0.0
  %536 = vmatprep.subr.mxu0 0.0
  %537 = vmatpush1.msra.mxu0 0.0
  %538 = vmatprep.subr.mxu0 0.0
  %539 = vmatpush1.msra.mxu0 0.0
  %540 = vmatprep.subr.mxu0 0.0
  %541 = vmatpush1.msra.mxu0 0.0
  %542 = vmatprep.mubr.f32.mxu0 0.0
  %543 = vmatmul.mubr.f32.gmra.mrb[0].mxu0 %v476
  %v544 = vpop.f32.mrb[0].mxu0
  %v545 = vadd.f32 0.0, %v544
  %v546 = vpop.f32.mrb[0].mxu0
  %547 = vdwg.mxu0
  %v549 = vrot.slane %v545, 2
  %v551 = vadd.f32 %v128, %v549
  %v552 = vtanh.pop %v551
  %v553 = vxor.u32 %v551, 2147483648
  %v554 = vmul.f32 %v553, 1.442695
  %v555 = vpow.pop %v554
  %v556 = vadd.f32 %v555, 1.0
  %v557 = vrcp.pop %v556
  %v558 = vmul.f32 1.0, %v557
  %v559 = vsel %vm36, %v552, %v558
  %v561 = vrot.slane %v460, 6
  %v563 = vmul.f32 %v559, %v561
  %565 = vrot.lane.b32.xlu0 %v559, 64
  %v566 = vpop.permute.xlu0 %565
  %v568 = vmul.f32 %v559, %v566
  %570 = vrot.lane.b32.xlu0 %v568, 32
  %v571 = vpop.permute.xlu0 %570
  %v573 = vadd.f32 %v563, %v571
  %v574 = vtanh.pop %v573
  %576 = vrot.lane.b32.xlu0 %v574, 64
  %v577 = vpop.permute.xlu0 %576
  %v579 = vmul.f32 %v559, %v577
  %581 = vrot.lane.b32.xlu0 %v579, 32
  %v582 = vpop.permute.xlu0 %581
  %vm584 = vcmask 261126
  %585 = vst.msk [vmem:[#allocation2] sm:$0xc0] %vm584, %v582
  %v586 = vrot.slane %v579, 6
  %587 = vrot.lane.b32.xlu0 %v586, 32
  %v588 = vpop.permute.xlu0 %587
  %v589 = vsel %vm51, %v588, 0
  %591 = vmatprep.subr.mxu0 0.0
  %592 = vmatpush1.msra.mxu0 %v141
  %593 = vmatprep.subr.mxu0 0.0
  %594 = vmatpush1.msra.mxu0 %v142
  %595 = vmatprep.subr.mxu0 0.0
  %596 = vmatpush1.msra.mxu0 %v143
  %597 = vmatprep.subr.mxu0 0.0
  %598 = vmatpush1.msra.mxu0 %v144
  %599 = vmatprep.subr.mxu0 0.0
  %600 = vmatpush1.msra.mxu0 0.0
  %601 = vmatprep.subr.mxu0 0.0
  %602 = vmatpush1.msra.mxu0 0.0
  %603 = vmatprep.subr.mxu0 0.0
  %604 = vmatpush1.msra.mxu0 0.0
  %605 = vmatprep.subr.mxu0 0.0
  %606 = vmatpush1.msra.mxu0 0.0
  %607 = vmatprep.subr.mxu0 0.0
  %608 = vmatpush1.msra.mxu0 0.0
  %609 = vmatprep.subr.mxu0 0.0
  %610 = vmatpush1.msra.mxu0 0.0
  %611 = vmatprep.subr.mxu0 0.0
  %612 = vmatpush1.msra.mxu0 0.0
  %613 = vmatprep.subr.mxu0 0.0
  %614 = vmatpush1.msra.mxu0 0.0
  %615 = vmatprep.subr.mxu0 0.0
  %616 = vmatpush1.msra.mxu0 0.0
  %617 = vmatprep.subr.mxu0 0.0
  %618 = vmatpush1.msra.mxu0 0.0
  %619 = vmatprep.subr.mxu0 0.0
  %620 = vmatpush1.msra.mxu0 0.0
  %621 = vmatprep.subr.mxu0 0.0
  %622 = vmatpush1.msra.mxu0 0.0
  %623 = vmatprep.subr.mxu0 0.0
  %624 = vmatpush1.msra.mxu0 0.0
  %625 = vmatprep.subr.mxu0 0.0
  %626 = vmatpush1.msra.mxu0 0.0
  %627 = vmatprep.subr.mxu0 0.0
  %628 = vmatpush1.msra.mxu0 0.0
  %629 = vmatprep.subr.mxu0 0.0
  %630 = vmatpush1.msra.mxu0 0.0
  %631 = vmatprep.subr.mxu0 0.0
  %632 = vmatpush1.msra.mxu0 0.0
  %633 = vmatprep.subr.mxu0 0.0
  %634 = vmatpush1.msra.mxu0 0.0
  %635 = vmatprep.subr.mxu0 0.0
  %636 = vmatpush1.msra.mxu0 0.0
  %637 = vmatprep.subr.mxu0 0.0
  %638 = vmatpush1.msra.mxu0 0.0
  %639 = vmatprep.subr.mxu0 0.0
  %640 = vmatpush1.msra.mxu0 0.0
  %641 = vmatprep.subr.mxu0 0.0
  %642 = vmatpush1.msra.mxu0 0.0
  %643 = vmatprep.subr.mxu0 0.0
  %644 = vmatpush1.msra.mxu0 0.0
  %645 = vmatprep.subr.mxu0 0.0
  %646 = vmatpush1.msra.mxu0 0.0
  %647 = vmatprep.subr.mxu0 0.0
  %648 = vmatpush1.msra.mxu0 0.0
  %649 = vmatprep.subr.mxu0 0.0
  %650 = vmatpush1.msra.mxu0 0.0
  %651 = vmatprep.subr.mxu0 0.0
  %652 = vmatpush1.msra.mxu0 0.0
  %653 = vmatprep.subr.mxu0 0.0
  %654 = vmatpush1.msra.mxu0 0.0
  %655 = vmatprep.mubr.f32.mxu0 0.0
  %656 = vmatmul.mubr.f32.gmra.mrb[0].mxu0 %v589
  %v657 = vpop.f32.mrb[0].mxu0
  %v658 = vadd.f32 0.0, %v657
  %v659 = vpop.f32.mrb[0].mxu0
  %660 = vdwg.mxu0
  %v661 = vadd.f32 %v133, %v658
  %v662 = vtanh.pop %v661
  %v663 = vxor.u32 %v661, 2147483648
  %v664 = vmul.f32 %v663, 1.442695
  %v665 = vpow.pop %v664
  %v666 = vadd.f32 %v665, 1.0
  %v667 = vrcp.pop %v666
  %v668 = vmul.f32 1.0, %v667
  %v669 = vsel %vm36, %v662, %v668
  %v671 = vrot.slane %v573, 6
  %v673 = vmul.f32 %v669, %v671
  %675 = vrot.lane.b32.xlu0 %v669, 64
  %v676 = vpop.permute.xlu0 %675
  %v678 = vmul.f32 %v669, %v676
  %680 = vrot.lane.b32.xlu0 %v678, 32
  %v681 = vpop.permute.xlu0 %680
  %v683 = vadd.f32 %v673, %v681
  %v684 = vtanh.pop %v683
  %686 = vrot.lane.b32.xlu0 %v684, 64
  %v687 = vpop.permute.xlu0 %686
  %v689 = vmul.f32 %v669, %v687
  %691 = vrot.lane.b32.xlu0 %v689, 32
  %v692 = vpop.permute.xlu0 %691
  %694 = vst.msk [vmem:[#allocation2 + $0x8] sm:$0x3] %vm248, %v692
  %v695 = vsel %vm51, %v692, 0
  %697 = vmatprep.subr.mxu0 0.0
  %698 = vmatpush1.msra.mxu0 %v141
  %699 = vmatprep.subr.mxu0 0.0
  %700 = vmatpush1.msra.mxu0 %v142
  %701 = vmatprep.subr.mxu0 0.0
  %702 = vmatpush1.msra.mxu0 %v143
  %703 = vmatprep.subr.mxu0 0.0
  %704 = vmatpush1.msra.mxu0 %v144
  %705 = vmatprep.subr.mxu0 0.0
  %706 = vmatpush1.msra.mxu0 0.0
  %707 = vmatprep.subr.mxu0 0.0
  %708 = vmatpush1.msra.mxu0 0.0
  %709 = vmatprep.subr.mxu0 0.0
  %710 = vmatpush1.msra.mxu0 0.0
  %711 = vmatprep.subr.mxu0 0.0
  %712 = vmatpush1.msra.mxu0 0.0
  %713 = vmatprep.subr.mxu0 0.0
  %714 = vmatpush1.msra.mxu0 0.0
  %715 = vmatprep.subr.mxu0 0.0
  %716 = vmatpush1.msra.mxu0 0.0
  %717 = vmatprep.subr.mxu0 0.0
  %718 = vmatpush1.msra.mxu0 0.0
  %719 = vmatprep.subr.mxu0 0.0
  %720 = vmatpush1.msra.mxu0 0.0
  %721 = vmatprep.subr.mxu0 0.0
  %722 = vmatpush1.msra.mxu0 0.0
  %723 = vmatprep.subr.mxu0 0.0
  %724 = vmatpush1.msra.mxu0 0.0
  %725 = vmatprep.subr.mxu0 0.0
  %726 = vmatpush1.msra.mxu0 0.0
  %727 = vmatprep.subr.mxu0 0.0
  %728 = vmatpush1.msra.mxu0 0.0
  %729 = vmatprep.subr.mxu0 0.0
  %730 = vmatpush1.msra.mxu0 0.0
  %731 = vmatprep.subr.mxu0 0.0
  %732 = vmatpush1.msra.mxu0 0.0
  %733 = vmatprep.subr.mxu0 0.0
  %734 = vmatpush1.msra.mxu0 0.0
  %735 = vmatprep.subr.mxu0 0.0
  %736 = vmatpush1.msra.mxu0 0.0
  %737 = vmatprep.subr.mxu0 0.0
  %738 = vmatpush1.msra.mxu0 0.0
  %739 = vmatprep.subr.mxu0 0.0
  %740 = vmatpush1.msra.mxu0 0.0
  %741 = vmatprep.subr.mxu0 0.0
  %742 = vmatpush1.msra.mxu0 0.0
  %743 = vmatprep.subr.mxu0 0.0
  %744 = vmatpush1.msra.mxu0 0.0
  %745 = vmatprep.subr.mxu0 0.0
  %746 = vmatpush1.msra.mxu0 0.0
  %747 = vmatprep.subr.mxu0 0.0
  %748 = vmatpush1.msra.mxu0 0.0
  %749 = vmatprep.subr.mxu0 0.0
  %750 = vmatpush1.msra.mxu0 0.0
  %751 = vmatprep.subr.mxu0 0.0
  %752 = vmatpush1.msra.mxu0 0.0
  %753 = vmatprep.subr.mxu0 0.0
  %754 = vmatpush1.msra.mxu0 0.0
  %755 = vmatprep.subr.mxu0 0.0
  %756 = vmatpush1.msra.mxu0 0.0
  %757 = vmatprep.subr.mxu0 0.0
  %758 = vmatpush1.msra.mxu0 0.0
  %759 = vmatprep.subr.mxu0 0.0
  %760 = vmatpush1.msra.mxu0 0.0
  %761 = vmatprep.mubr.f32.mxu0 0.0
  %762 = vmatmul.mubr.f32.gmra.mrb[0].mxu0 %v695
  %v763 = vpop.f32.mrb[0].mxu0
  %v764 = vadd.f32 0.0, %v763
  %v765 = vpop.f32.mrb[0].mxu0
  %766 = vdwg.mxu0
  %v768 = vrot.slane %v764, 6
  %v770 = vadd.f32 %v133, %v768
  %v771 = vtanh.pop %v770
  %v772 = vxor.u32 %v770, 2147483648
  %v773 = vmul.f32 %v772, 1.442695
  %v774 = vpow.pop %v773
  %v775 = vadd.f32 %v774, 1.0
  %v776 = vrcp.pop %v775
  %v777 = vmul.f32 1.0, %v776
  %v778 = vsel %vm36, %v771, %v777
  %v780 = vrot.slane %v683, 6
  %v782 = vmul.f32 %v778, %v780
  %784 = vrot.lane.b32.xlu0 %v778, 64
  %v785 = vpop.permute.xlu0 %784
  %v787 = vmul.f32 %v778, %v785
  %789 = vrot.lane.b32.xlu0 %v787, 32
  %v790 = vpop.permute.xlu0 %789
  %v792 = vadd.f32 %v782, %v790
  %v793 = vtanh.pop %v792
  %795 = vrot.lane.b32.xlu0 %v793, 64
  %v796 = vpop.permute.xlu0 %795
  %v798 = vmul.f32 %v778, %v796
  %800 = vrot.lane.b32.xlu0 %v798, 32
  %v801 = vpop.permute.xlu0 %800
  %803 = vst.msk [vmem:[#allocation2 + $0x8] sm:$0xc] %vm358, %v801
  %v804 = vrot.slane %v798, 2
  %805 = vrot.lane.b32.xlu0 %v804, 32
  %v806 = vpop.permute.xlu0 %805
  %v807 = vsel %vm51, %v806, 0
  %809 = vmatprep.subr.mxu0 0.0
  %810 = vmatpush1.msra.mxu0 %v141
  %811 = vmatprep.subr.mxu0 0.0
  %812 = vmatpush1.msra.mxu0 %v142
  %813 = vmatprep.subr.mxu0 0.0
  %814 = vmatpush1.msra.mxu0 %v143
  %815 = vmatprep.subr.mxu0 0.0
  %816 = vmatpush1.msra.mxu0 %v144
  %817 = vmatprep.subr.mxu0 0.0
  %818 = vmatpush1.msra.mxu0 0.0
  %819 = vmatprep.subr.mxu0 0.0
  %820 = vmatpush1.msra.mxu0 0.0
  %821 = vmatprep.subr.mxu0 0.0
  %822 = vmatpush1.msra.mxu0 0.0
  %823 = vmatprep.subr.mxu0 0.0
  %824 = vmatpush1.msra.mxu0 0.0
  %825 = vmatprep.subr.mxu0 0.0
  %826 = vmatpush1.msra.mxu0 0.0
  %827 = vmatprep.subr.mxu0 0.0
  %828 = vmatpush1.msra.mxu0 0.0
  %829 = vmatprep.subr.mxu0 0.0
  %830 = vmatpush1.msra.mxu0 0.0
  %831 = vmatprep.subr.mxu0 0.0
  %832 = vmatpush1.msra.mxu0 0.0
  %833 = vmatprep.subr.mxu0 0.0
  %834 = vmatpush1.msra.mxu0 0.0
  %835 = vmatprep.subr.mxu0 0.0
  %836 = vmatpush1.msra.mxu0 0.0
  %837 = vmatprep.subr.mxu0 0.0
  %838 = vmatpush1.msra.mxu0 0.0
  %839 = vmatprep.subr.mxu0 0.0
  %840 = vmatpush1.msra.mxu0 0.0
  %841 = vmatprep.subr.mxu0 0.0
  %842 = vmatpush1.msra.mxu0 0.0
  %843 = vmatprep.subr.mxu0 0.0
  %844 = vmatpush1.msra.mxu0 0.0
  %845 = vmatprep.subr.mxu0 0.0
  %846 = vmatpush1.msra.mxu0 0.0
  %847 = vmatprep.subr.mxu0 0.0
  %848 = vmatpush1.msra.mxu0 0.0
  %849 = vmatprep.subr.mxu0 0.0
  %850 = vmatpush1.msra.mxu0 0.0
  %851 = vmatprep.subr.mxu0 0.0
  %852 = vmatpush1.msra.mxu0 0.0
  %853 = vmatprep.subr.mxu0 0.0
  %854 = vmatpush1.msra.mxu0 0.0
  %855 = vmatprep.subr.mxu0 0.0
  %856 = vmatpush1.msra.mxu0 0.0
  %857 = vmatprep.subr.mxu0 0.0
  %858 = vmatpush1.msra.mxu0 0.0
  %859 = vmatprep.subr.mxu0 0.0
  %860 = vmatpush1.msra.mxu0 0.0
  %861 = vmatprep.subr.mxu0 0.0
  %862 = vmatpush1.msra.mxu0 0.0
  %863 = vmatprep.subr.mxu0 0.0
  %864 = vmatpush1.msra.mxu0 0.0
  %865 = vmatprep.subr.mxu0 0.0
  %866 = vmatpush1.msra.mxu0 0.0
  %867 = vmatprep.subr.mxu0 0.0
  %868 = vmatpush1.msra.mxu0 0.0
  %869 = vmatprep.subr.mxu0 0.0
  %870 = vmatpush1.msra.mxu0 0.0
  %871 = vmatprep.subr.mxu0 0.0
  %872 = vmatpush1.msra.mxu0 0.0
  %873 = vmatprep.mubr.f32.mxu0 0.0
  %874 = vmatmul.mubr.f32.gmra.mrb[0].mxu0 %v807
  %v875 = vpop.f32.mrb[0].mxu0
  %v876 = vadd.f32 0.0, %v875
  %v877 = vpop.f32.mrb[0].mxu0
  %878 = vdwg.mxu0
  %v880 = vrot.slane %v876, 4
  %v882 = vadd.f32 %v133, %v880
  %v883 = vtanh.pop %v882
  %v884 = vxor.u32 %v882, 2147483648
  %v885 = vmul.f32 %v884, 1.442695
  %v886 = vpow.pop %v885
  %v887 = vadd.f32 %v886, 1.0
  %v888 = vrcp.pop %v887
  %v889 = vmul.f32 1.0, %v888
  %v890 = vsel %vm36, %v883, %v889
  %v892 = vrot.slane %v792, 6
  %v894 = vmul.f32 %v890, %v892
  %896 = vrot.lane.b32.xlu0 %v890, 64
  %v897 = vpop.permute.xlu0 %896
  %v899 = vmul.f32 %v890, %v897
  %901 = vrot.lane.b32.xlu0 %v899, 32
  %v902 = vpop.permute.xlu0 %901
  %v904 = vadd.f32 %v894, %v902
  %v905 = vtanh.pop %v904
  %907 = vrot.lane.b32.xlu0 %v905, 64
  %v908 = vpop.permute.xlu0 %907
  %v910 = vmul.f32 %v890, %v908
  %912 = vrot.lane.b32.xlu0 %v910, 32
  %v913 = vpop.permute.xlu0 %912
  %915 = vst.msk [vmem:[#allocation2 + $0x8] sm:$0x30] %vm471, %v913
  %v916 = vrot.slane %v910, 4
  %917 = vrot.lane.b32.xlu0 %v916, 32
  %v918 = vpop.permute.xlu0 %917
  %v919 = vsel %vm51, %v918, 0
  %921 = vmatprep.subr.mxu0 0.0
  %922 = vmatpush1.msra.mxu0 %v141
  %923 = vmatprep.subr.mxu0 0.0
  %924 = vmatpush1.msra.mxu0 %v142
  %925 = vmatprep.subr.mxu0 0.0
  %926 = vmatpush1.msra.mxu0 %v143
  %927 = vmatprep.subr.mxu0 0.0
  %928 = vmatpush1.msra.mxu0 %v144
  %929 = vmatprep.subr.mxu0 0.0
  %930 = vmatpush1.msra.mxu0 0.0
  %931 = vmatprep.subr.mxu0 0.0
  %932 = vmatpush1.msra.mxu0 0.0
  %933 = vmatprep.subr.mxu0 0.0
  %934 = vmatpush1.msra.mxu0 0.0
  %935 = vmatprep.subr.mxu0 0.0
  %936 = vmatpush1.msra.mxu0 0.0
  %937 = vmatprep.subr.mxu0 0.0
  %938 = vmatpush1.msra.mxu0 0.0
  %939 = vmatprep.subr.mxu0 0.0
  %940 = vmatpush1.msra.mxu0 0.0
  %941 = vmatprep.subr.mxu0 0.0
  %942 = vmatpush1.msra.mxu0 0.0
  %943 = vmatprep.subr.mxu0 0.0
  %944 = vmatpush1.msra.mxu0 0.0
  %945 = vmatprep.subr.mxu0 0.0
  %946 = vmatpush1.msra.mxu0 0.0
  %947 = vmatprep.subr.mxu0 0.0
  %948 = vmatpush1.msra.mxu0 0.0
  %949 = vmatprep.subr.mxu0 0.0
  %950 = vmatpush1.msra.mxu0 0.0
  %951 = vmatprep.subr.mxu0 0.0
  %952 = vmatpush1.msra.mxu0 0.0
  %953 = vmatprep.subr.mxu0 0.0
  %954 = vmatpush1.msra.mxu0 0.0
  %955 = vmatprep.subr.mxu0 0.0
  %956 = vmatpush1.msra.mxu0 0.0
  %957 = vmatprep.subr.mxu0 0.0
  %958 = vmatpush1.msra.mxu0 0.0
  %959 = vmatprep.subr.mxu0 0.0
  %960 = vmatpush1.msra.mxu0 0.0
  %961 = vmatprep.subr.mxu0 0.0
  %962 = vmatpush1.msra.mxu0 0.0
  %963 = vmatprep.subr.mxu0 0.0
  %964 = vmatpush1.msra.mxu0 0.0
  %965 = vmatprep.subr.mxu0 0.0
  %966 = vmatpush1.msra.mxu0 0.0
  %967 = vmatprep.subr.mxu0 0.0
  %968 = vmatpush1.msra.mxu0 0.0
  %969 = vmatprep.subr.mxu0 0.0
  %970 = vmatpush1.msra.mxu0 0.0
  %971 = vmatprep.subr.mxu0 0.0
  %972 = vmatpush1.msra.mxu0 0.0
  %973 = vmatprep.subr.mxu0 0.0
  %974 = vmatpush1.msra.mxu0 0.0
  %975 = vmatprep.subr.mxu0 0.0
  %976 = vmatpush1.msra.mxu0 0.0
  %977 = vmatprep.subr.mxu0 0.0
  %978 = vmatpush1.msra.mxu0 0.0
  %979 = vmatprep.subr.mxu0 0.0
  %980 = vmatpush1.msra.mxu0 0.0
  %981 = vmatprep.subr.mxu0 0.0
  %982 = vmatpush1.msra.mxu0 0.0
  %983 = vmatprep.subr.mxu0 0.0
  %984 = vmatpush1.msra.mxu0 0.0
  %985 = vmatprep.mubr.f32.mxu0 0.0
  %986 = vmatmul.mubr.f32.gmra.mrb[0].mxu0 %v919
  %v987 = vpop.f32.mrb[0].mxu0
  %v988 = vadd.f32 0.0, %v987
  %v989 = vpop.f32.mrb[0].mxu0
  %990 = vdwg.mxu0
  %v992 = vrot.slane %v988, 2
  %v994 = vadd.f32 %v133, %v992
  %v995 = vtanh.pop %v994
  %v996 = vxor.u32 %v994, 2147483648
  %v997 = vmul.f32 %v996, 1.442695
  %v998 = vpow.pop %v997
  %v999 = vadd.f32 %v998, 1.0
  %v1000 = vrcp.pop %v999
  %v1001 = vmul.f32 1.0, %v1000
  %v1002 = vsel %vm36, %v995, %v1001
  %v1004 = vrot.slane %v904, 6
  %v1006 = vmul.f32 %v1002, %v1004
  %1008 = vrot.lane.b32.xlu0 %v1002, 64
  %v1009 = vpop.permute.xlu0 %1008
  %v1011 = vmul.f32 %v1002, %v1009
  %1013 = vrot.lane.b32.xlu0 %v1011, 32
  %v1014 = vpop.permute.xlu0 %1013
  %v1016 = vadd.f32 %v1006, %v1014
  %v1017 = vtanh.pop %v1016
  %1019 = vrot.lane.b32.xlu0 %v1017, 64
  %v1020 = vpop.permute.xlu0 %1019
  %v1022 = vmul.f32 %v1002, %v1020
  %1024 = vrot.lane.b32.xlu0 %v1022, 32
  %v1025 = vpop.permute.xlu0 %1024
  %1027 = vst.msk [vmem:[#allocation2 + $0x8] sm:$0xc0] %vm584, %v1025
  %v1028 = vrot.slane %v1022, 6
  %1029 = vrot.lane.b32.xlu0 %v1028, 32
  %v1030 = vpop.permute.xlu0 %1029
  %v1031 = vsel %vm51, %v1030, 0
  %1033 = vmatprep.subr.mxu0 0.0
  %1034 = vmatpush1.msra.mxu0 %v141
  %1035 = vmatprep.subr.mxu0 0.0
  %1036 = vmatpush1.msra.mxu0 %v142
  %1037 = vmatprep.subr.mxu0 0.0
  %1038 = vmatpush1.msra.mxu0 %v143
  %1039 = vmatprep.subr.mxu0 0.0
  %1040 = vmatpush1.msra.mxu0 %v144
  %1041 = vmatprep.subr.mxu0 0.0
  %1042 = vmatpush1.msra.mxu0 0.0
  %1043 = vmatprep.subr.mxu0 0.0
  %1044 = vmatpush1.msra.mxu0 0.0
  %1045 = vmatprep.subr.mxu0 0.0
  %1046 = vmatpush1.msra.mxu0 0.0
  %1047 = vmatprep.subr.mxu0 0.0
  %1048 = vmatpush1.msra.mxu0 0.0
  %1049 = vmatprep.subr.mxu0 0.0
  %1050 = vmatpush1.msra.mxu0 0.0
  %1051 = vmatprep.subr.mxu0 0.0
  %1052 = vmatpush1.msra.mxu0 0.0
  %1053 = vmatprep.subr.mxu0 0.0
  %1054 = vmatpush1.msra.mxu0 0.0
  %1055 = vmatprep.subr.mxu0 0.0
  %1056 = vmatpush1.msra.mxu0 0.0
  %1057 = vmatprep.subr.mxu0 0.0
  %1058 = vmatpush1.msra.mxu0 0.0
  %1059 = vmatprep.subr.mxu0 0.0
  %1060 = vmatpush1.msra.mxu0 0.0
  %1061 = vmatprep.subr.mxu0 0.0
  %1062 = vmatpush1.msra.mxu0 0.0
  %1063 = vmatprep.subr.mxu0 0.0
  %1064 = vmatpush1.msra.mxu0 0.0
  %1065 = vmatprep.subr.mxu0 0.0
  %1066 = vmatpush1.msra.mxu0 0.0
  %1067 = vmatprep.subr.mxu0 0.0
  %1068 = vmatpush1.msra.mxu0 0.0
  %1069 = vmatprep.subr.mxu0 0.0
  %1070 = vmatpush1.msra.mxu0 0.0
  %1071 = vmatprep.subr.mxu0 0.0
  %1072 = vmatpush1.msra.mxu0 0.0
  %1073 = vmatprep.subr.mxu0 0.0
  %1074 = vmatpush1.msra.mxu0 0.0
  %1075 = vmatprep.subr.mxu0 0.0
  %1076 = vmatpush1.msra.mxu0 0.0
  %1077 = vmatprep.subr.mxu0 0.0
  %1078 = vmatpush1.msra.mxu0 0.0
  %1079 = vmatprep.subr.mxu0 0.0
  %1080 = vmatpush1.msra.mxu0 0.0
  %1081 = vmatprep.subr.mxu0 0.0
  %1082 = vmatpush1.msra.mxu0 0.0
  %1083 = vmatprep.subr.mxu0 0.0
  %1084 = vmatpush1.msra.mxu0 0.0
  %1085 = vmatprep.subr.mxu0 0.0
  %1086 = vmatpush1.msra.mxu0 0.0
  %1087 = vmatprep.subr.mxu0 0.0
  %1088 = vmatpush1.msra.mxu0 0.0
  %1089 = vmatprep.subr.mxu0 0.0
  %1090 = vmatpush1.msra.mxu0 0.0
  %1091 = vmatprep.subr.mxu0 0.0
  %1092 = vmatpush1.msra.mxu0 0.0
  %1093 = vmatprep.subr.mxu0 0.0
  %1094 = vmatpush1.msra.mxu0 0.0
  %1095 = vmatprep.subr.mxu0 0.0
  %1096 = vmatpush1.msra.mxu0 0.0
  %1097 = vmatprep.mubr.f32.mxu0 0.0
  %1098 = vmatmul.mubr.f32.gmra.mrb[0].mxu0 %v1031
  %v1099 = vpop.f32.mrb[0].mxu0
  %v1100 = vadd.f32 0.0, %v1099
  %v1101 = vpop.f32.mrb[0].mxu0
  %1102 = vdwg.mxu0
  %v1103 = vadd.f32 %v138, %v1100
  %v1104 = vtanh.pop %v1103
  %v1105 = vxor.u32 %v1103, 2147483648
  %v1106 = vmul.f32 %v1105, 1.442695
  %v1107 = vpow.pop %v1106
  %v1108 = vadd.f32 %v1107, 1.0
  %v1109 = vrcp.pop %v1108
  %v1110 = vmul.f32 1.0, %v1109
  %v1111 = vsel %vm36, %v1104, %v1110
  %v1113 = vrot.slane %v1016, 6
  %v1115 = vmul.f32 %v1111, %v1113
  %1117 = vrot.lane.b32.xlu0 %v1111, 64
  %v1118 = vpop.permute.xlu0 %1117
  %v1120 = vmul.f32 %v1111, %v1118
  %1122 = vrot.lane.b32.xlu0 %v1120, 32
  %v1123 = vpop.permute.xlu0 %1122
  %v1125 = vadd.f32 %v1115, %v1123
  %v1126 = vtanh.pop %v1125
  %1128 = vrot.lane.b32.xlu0 %v1126, 64
  %v1129 = vpop.permute.xlu0 %1128
  %v1131 = vmul.f32 %v1111, %v1129
  %1133 = vrot.lane.b32.xlu0 %v1131, 32
  %v1134 = vpop.permute.xlu0 %1133
  %1136 = vst.msk [vmem:[#allocation2 + $0x10] sm:$0x3] %vm248, %v1134
  %v1137 = vld [vmem:[#allocation2] sm:$0xff]
  %v1138 = vld [vmem:[#allocation2 + $0x8] sm:$0xff]
  %v1139 = vld [vmem:[#allocation2 + $0x10] sm:$0x3]
  %v1140 = vld [vmem:[%s4] sm:$0xff]
  %v1141 = vld [vmem:[%s4 + $0x8] sm:$0xff]
  %v1142 = vld [vmem:[%s4 + $0x10] sm:$0xff]
  %v1143 = vld [vmem:[%s4 + $0x18] sm:$0xff]
  %v1144 = vld [vmem:[%s6] sm:$0x1]
  %v1146 = vlaneseq
  %v1147 = vshrl.u32 %v1146, 7
  %v1148 = vsub.s32 0, %v1147
  %v1149 = vrot.slane %v1144, %v1148
  %v1152 = vsel %vm51, %v1137, 0
  %v1155 = vsel %vm51, %v1138, 0
  %v1158 = vsel %vm51, %v1139, 0
  %1160 = vmatprep.subr.mxu0 0.0
  %1161 = vmatpush1.msra.mxu0 %v1140
  %1162 = vmatprep.subr.mxu0 0.0
  %1163 = vmatpush1.msra.mxu0 %v1141
  %1164 = vmatprep.subr.mxu0 0.0
  %1165 = vmatpush1.msra.mxu0 %v1142
  %1166 = vmatprep.subr.mxu0 0.0
  %1167 = vmatpush1.msra.mxu0 %v1143
  %1168 = vmatprep.subr.mxu0 0.0
  %1169 = vmatpush1.msra.mxu0 0.0
  %1170 = vmatprep.subr.mxu0 0.0
  %1171 = vmatpush1.msra.mxu0 0.0
  %1172 = vmatprep.subr.mxu0 0.0
  %1173 = vmatpush1.msra.mxu0 0.0
  %1174 = vmatprep.subr.mxu0 0.0
  %1175 = vmatpush1.msra.mxu0 0.0
  %1176 = vmatprep.subr.mxu0 0.0
  %1177 = vmatpush1.msra.mxu0 0.0
  %1178 = vmatprep.subr.mxu0 0.0
  %1179 = vmatpush1.msra.mxu0 0.0
  %1180 = vmatprep.subr.mxu0 0.0
  %1181 = vmatpush1.msra.mxu0 0.0
  %1182 = vmatprep.subr.mxu0 0.0
  %1183 = vmatpush1.msra.mxu0 0.0
  %1184 = vmatprep.subr.mxu0 0.0
  %1185 = vmatpush1.msra.mxu0 0.0
  %1186 = vmatprep.subr.mxu0 0.0
  %1187 = vmatpush1.msra.mxu0 0.0
  %1188 = vmatprep.subr.mxu0 0.0
  %1189 = vmatpush1.msra.mxu0 0.0
  %1190 = vmatprep.subr.mxu0 0.0
  %1191 = vmatpush1.msra.mxu0 0.0
  %1192 = vmatprep.subr.mxu0 0.0
  %1193 = vmatpush1.msra.mxu0 0.0
  %1194 = vmatprep.subr.mxu0 0.0
  %1195 = vmatpush1.msra.mxu0 0.0
  %1196 = vmatprep.subr.mxu0 0.0
  %1197 = vmatpush1.msra.mxu0 0.0
  %1198 = vmatprep.subr.mxu0 0.0
  %1199 = vmatpush1.msra.mxu0 0.0
  %1200 = vmatprep.subr.mxu0 0.0
  %1201 = vmatpush1.msra.mxu0 0.0
  %1202 = vmatprep.subr.mxu0 0.0
  %1203 = vmatpush1.msra.mxu0 0.0
  %1204 = vmatprep.subr.mxu0 0.0
  %1205 = vmatpush1.msra.mxu0 0.0
  %1206 = vmatprep.subr.mxu0 0.0
  %1207 = vmatpush1.msra.mxu0 0.0
  %1208 = vmatprep.subr.mxu0 0.0
  %1209 = vmatpush1.msra.mxu0 0.0
  %1210 = vmatprep.subr.mxu0 0.0
  %1211 = vmatpush1.msra.mxu0 0.0
  %1212 = vmatprep.subr.mxu0 0.0
  %1213 = vmatpush1.msra.mxu0 0.0
  %1214 = vmatprep.subr.mxu0 0.0
  %1215 = vmatpush1.msra.mxu0 0.0
  %1216 = vmatprep.subr.mxu0 0.0
  %1217 = vmatpush1.msra.mxu0 0.0
  %1218 = vmatprep.subr.mxu0 0.0
  %1219 = vmatpush1.msra.mxu0 0.0
  %1220 = vmatprep.subr.mxu0 0.0
  %1221 = vmatpush1.msra.mxu0 0.0
  %1222 = vmatprep.subr.mxu0 0.0
  %1223 = vmatpush1.msra.mxu0 0.0
  %1224 = vmatprep.mubr.f32.mxu0 0.0
  %1225 = vmatmul.mubr.f32.gmra.mrb[0].mxu0 %v1152
  %v1226 = vpop.f32.mrb[0].mxu0
  %v1227 = vadd.f32 %v1149, %v1226
  %v1228 = vpop.f32.mrb[0].mxu0
  %1229 = vmatprep.mubr.f32.mxu0 0.0
  %1230 = vmatmul.mubr.f32.gmra.mrb[0].mxu0 %v1155
  %v1231 = vpop.f32.mrb[0].mxu0
  %v1232 = vadd.f32 %v1149, %v1231
  %v1233 = vpop.f32.mrb[0].mxu0
  %1234 = vmatprep.mubr.f32.mxu0 0.0
  %1235 = vmatmul.mubr.f32.gmra.mrb[0].mxu0 %v1158
  %v1236 = vpop.f32.mrb[0].mxu0
  %v1237 = vadd.f32 %v1149, %v1236
  %v1238 = vpop.f32.mrb[0].mxu0
  %1239 = vdwg.mxu0
  %v1240 = vld [vmem:[%s5] sm:$0xff]
  %v1241 = vld [vmem:[%s5 + $0x8] sm:$0xff]
  %v1242 = vld [vmem:[%s5 + $0x10] sm:$0xff]
  %v1243 = vld [vmem:[%s5 + $0x18] sm:$0xff]
  %1244 = vmatprep.subr.mxu0 0.0
  %1245 = vmatpush1.msra.mxu0 %v1240
  %1246 = vmatprep.subr.mxu0 0.0
  %1247 = vmatpush1.msra.mxu0 %v1241
  %1248 = vmatprep.subr.mxu0 0.0
  %1249 = vmatpush1.msra.mxu0 %v1242
  %1250 = vmatprep.subr.mxu0 0.0
  %1251 = vmatpush1.msra.mxu0 %v1243
  %1252 = vmatprep.subr.mxu0 0.0
  %1253 = vmatpush1.msra.mxu0 0.0
  %1254 = vmatprep.subr.mxu0 0.0
  %1255 = vmatpush1.msra.mxu0 0.0
  %1256 = vmatprep.subr.mxu0 0.0
  %1257 = vmatpush1.msra.mxu0 0.0
  %1258 = vmatprep.subr.mxu0 0.0
  %1259 = vmatpush1.msra.mxu0 0.0
  %1260 = vmatprep.subr.mxu0 0.0
  %1261 = vmatpush1.msra.mxu0 0.0
  %1262 = vmatprep.subr.mxu0 0.0
  %1263 = vmatpush1.msra.mxu0 0.0
  %1264 = vmatprep.subr.mxu0 0.0
  %1265 = vmatpush1.msra.mxu0 0.0
  %1266 = vmatprep.subr.mxu0 0.0
  %1267 = vmatpush1.msra.mxu0 0.0
  %1268 = vmatprep.subr.mxu0 0.0
  %1269 = vmatpush1.msra.mxu0 0.0
  %1270 = vmatprep.subr.mxu0 0.0
  %1271 = vmatpush1.msra.mxu0 0.0
  %1272 = vmatprep.subr.mxu0 0.0
  %1273 = vmatpush1.msra.mxu0 0.0
  %1274 = vmatprep.subr.mxu0 0.0
  %1275 = vmatpush1.msra.mxu0 0.0
  %1276 = vmatprep.subr.mxu0 0.0
  %1277 = vmatpush1.msra.mxu0 0.0
  %1278 = vmatprep.subr.mxu0 0.0
  %1279 = vmatpush1.msra.mxu0 0.0
  %1280 = vmatprep.subr.mxu0 0.0
  %1281 = vmatpush1.msra.mxu0 0.0
  %1282 = vmatprep.subr.mxu0 0.0
  %1283 = vmatpush1.msra.mxu0 0.0
  %1284 = vmatprep.subr.mxu0 0.0
  %1285 = vmatpush1.msra.mxu0 0.0
  %1286 = vmatprep.subr.mxu0 0.0
  %1287 = vmatpush1.msra.mxu0 0.0
  %1288 = vmatprep.subr.mxu0 0.0
  %1289 = vmatpush1.msra.mxu0 0.0
  %1290 = vmatprep.subr.mxu0 0.0
  %1291 = vmatpush1.msra.mxu0 0.0
  %1292 = vmatprep.subr.mxu0 0.0
  %1293 = vmatpush1.msra.mxu0 0.0
  %1294 = vmatprep.subr.mxu0 0.0
  %1295 = vmatpush1.msra.mxu0 0.0
  %1296 = vmatprep.subr.mxu0 0.0
  %1297 = vmatpush1.msra.mxu0 0.0
  %1298 = vmatprep.subr.mxu0 0.0
  %1299 = vmatpush1.msra.mxu0 0.0
  %1300 = vmatprep.subr.mxu0 0.0
  %1301 = vmatpush1.msra.mxu0 0.0
  %1302 = vmatprep.subr.mxu0 0.0
  %1303 = vmatpush1.msra.mxu0 0.0
  %1304 = vmatprep.subr.mxu0 0.0
  %1305 = vmatpush1.msra.mxu0 0.0
  %1306 = vmatprep.subr.mxu0 0.0
  %1307 = vmatpush1.msra.mxu0 0.0
  %1308 = vmatprep.mubr.f32.mxu0 0.0
  %1309 = vmatmul.mubr.f32.gmra.mrb[0].mxu0 %v146
  %v1310 = vpop.f32.mrb[0].mxu0
  %v1311 = vadd.f32 0.0, %v1310
  %v1312 = vpop.f32.mrb[0].mxu0
  %1313 = vdwg.mxu0
  %v1314 = vadd.f32 %v1227, %v1311
  %v1315 = vtanh.pop %v1314
  %v1316 = vxor.u32 %v1314, 2147483648
  %v1317 = vmul.f32 %v1316, 1.442695
  %v1318 = vpow.pop %v1317
  %v1319 = vadd.f32 %v1318, 1.0
  %v1320 = vrcp.pop %v1319
  %v1321 = vmul.f32 1.0, %v1320
  %v1322 = vsel %vm36, %v1315, %v1321
  %v1323 = vmul.f32 %v1322, 0.0
  %1325 = vrot.lane.b32.xlu0 %v1322, 64
  %v1326 = vpop.permute.xlu0 %1325
  %v1328 = vmul.f32 %v1322, %v1326
  %1330 = vrot.lane.b32.xlu0 %v1328, 32
  %v1331 = vpop.permute.xlu0 %1330
  %v1333 = vadd.f32 %v1323, %v1331
  %v1334 = vtanh.pop %v1333
  %1336 = vrot.lane.b32.xlu0 %v1334, 64
  %v1337 = vpop.permute.xlu0 %1336
  %v1339 = vmul.f32 %v1322, %v1337
  %1341 = vrot.lane.b32.xlu0 %v1339, 32
  %v1342 = vpop.permute.xlu0 %1341
  %1344 = vst.msk [vmem:[#allocation2] sm:$0x3] %vm248, %v1342
  %v1345 = vsel %vm51, %v1342, 0
  %1347 = vmatprep.subr.mxu0 0.0
  %1348 = vmatpush1.msra.mxu0 %v1240
  %1349 = vmatprep.subr.mxu0 0.0
  %1350 = vmatpush1.msra.mxu0 %v1241
  %1351 = vmatprep.subr.mxu0 0.0
  %1352 = vmatpush1.msra.mxu0 %v1242
  %1353 = vmatprep.subr.mxu0 0.0
  %1354 = vmatpush1.msra.mxu0 %v1243
  %1355 = vmatprep.subr.mxu0 0.0
  %1356 = vmatpush1.msra.mxu0 0.0
  %1357 = vmatprep.subr.mxu0 0.0
  %1358 = vmatpush1.msra.mxu0 0.0
  %1359 = vmatprep.subr.mxu0 0.0
  %1360 = vmatpush1.msra.mxu0 0.0
  %1361 = vmatprep.subr.mxu0 0.0
  %1362 = vmatpush1.msra.mxu0 0.0
  %1363 = vmatprep.subr.mxu0 0.0
  %1364 = vmatpush1.msra.mxu0 0.0
  %1365 = vmatprep.subr.mxu0 0.0
  %1366 = vmatpush1.msra.mxu0 0.0
  %1367 = vmatprep.subr.mxu0 0.0
  %1368 = vmatpush1.msra.mxu0 0.0
  %1369 = vmatprep.subr.mxu0 0.0
  %1370 = vmatpush1.msra.mxu0 0.0
  %1371 = vmatprep.subr.mxu0 0.0
  %1372 = vmatpush1.msra.mxu0 0.0
  %1373 = vmatprep.subr.mxu0 0.0
  %1374 = vmatpush1.msra.mxu0 0.0
  %1375 = vmatprep.subr.mxu0 0.0
  %1376 = vmatpush1.msra.mxu0 0.0
  %1377 = vmatprep.subr.mxu0 0.0
  %1378 = vmatpush1.msra.mxu0 0.0
  %1379 = vmatprep.subr.mxu0 0.0
  %1380 = vmatpush1.msra.mxu0 0.0
  %1381 = vmatprep.subr.mxu0 0.0
  %1382 = vmatpush1.msra.mxu0 0.0
  %1383 = vmatprep.subr.mxu0 0.0
  %1384 = vmatpush1.msra.mxu0 0.0
  %1385 = vmatprep.subr.mxu0 0.0
  %1386 = vmatpush1.msra.mxu0 0.0
  %1387 = vmatprep.subr.mxu0 0.0
  %1388 = vmatpush1.msra.mxu0 0.0
  %1389 = vmatprep.subr.mxu0 0.0
  %1390 = vmatpush1.msra.mxu0 0.0
  %1391 = vmatprep.subr.mxu0 0.0
  %1392 = vmatpush1.msra.mxu0 0.0
  %1393 = vmatprep.subr.mxu0 0.0
  %1394 = vmatpush1.msra.mxu0 0.0
  %1395 = vmatprep.subr.mxu0 0.0
  %1396 = vmatpush1.msra.mxu0 0.0
  %1397 = vmatprep.subr.mxu0 0.0
  %1398 = vmatpush1.msra.mxu0 0.0
  %1399 = vmatprep.subr.mxu0 0.0
  %1400 = vmatpush1.msra.mxu0 0.0
  %1401 = vmatprep.subr.mxu0 0.0
  %1402 = vmatpush1.msra.mxu0 0.0
  %1403 = vmatprep.subr.mxu0 0.0
  %1404 = vmatpush1.msra.mxu0 0.0
  %1405 = vmatprep.subr.mxu0 0.0
  %1406 = vmatpush1.msra.mxu0 0.0
  %1407 = vmatprep.subr.mxu0 0.0
  %1408 = vmatpush1.msra.mxu0 0.0
  %1409 = vmatprep.subr.mxu0 0.0
  %1410 = vmatpush1.msra.mxu0 0.0
  %1411 = vmatprep.mubr.f32.mxu0 0.0
  %1412 = vmatmul.mubr.f32.gmra.mrb[0].mxu0 %v1345
  %v1413 = vpop.f32.mrb[0].mxu0
  %v1414 = vadd.f32 0.0, %v1413
  %v1415 = vpop.f32.mrb[0].mxu0
  %1416 = vdwg.mxu0
  %v1418 = vrot.slane %v1414, 6
  %v1420 = vadd.f32 %v1227, %v1418
  %v1421 = vtanh.pop %v1420
  %v1422 = vxor.u32 %v1420, 2147483648
  %v1423 = vmul.f32 %v1422, 1.442695
  %v1424 = vpow.pop %v1423
  %v1425 = vadd.f32 %v1424, 1.0
  %v1426 = vrcp.pop %v1425
  %v1427 = vmul.f32 1.0, %v1426
  %v1428 = vsel %vm36, %v1421, %v1427
  %v1430 = vrot.slane %v1333, 6
  %v1432 = vmul.f32 %v1428, %v1430
  %1434 = vrot.lane.b32.xlu0 %v1428, 64
  %v1435 = vpop.permute.xlu0 %1434
  %v1437 = vmul.f32 %v1428, %v1435
  %1439 = vrot.lane.b32.xlu0 %v1437, 32
  %v1440 = vpop.permute.xlu0 %1439
  %v1442 = vadd.f32 %v1432, %v1440
  %v1443 = vtanh.pop %v1442
  %1445 = vrot.lane.b32.xlu0 %v1443, 64
  %v1446 = vpop.permute.xlu0 %1445
  %v1448 = vmul.f32 %v1428, %v1446
  %1450 = vrot.lane.b32.xlu0 %v1448, 32
  %v1451 = vpop.permute.xlu0 %1450
  %1453 = vst.msk [vmem:[#allocation2] sm:$0xc] %vm358, %v1451
  %v1454 = vrot.slane %v1448, 2
  %1455 = vrot.lane.b32.xlu0 %v1454, 32
  %v1456 = vpop.permute.xlu0 %1455
  %v1457 = vsel %vm51, %v1456, 0
  %1459 = vmatprep.subr.mxu0 0.0
  %1460 = vmatpush1.msra.mxu0 %v1240
  %1461 = vmatprep.subr.mxu0 0.0
  %1462 = vmatpush1.msra.mxu0 %v1241
  %1463 = vmatprep.subr.mxu0 0.0
  %1464 = vmatpush1.msra.mxu0 %v1242
  %1465 = vmatprep.subr.mxu0 0.0
  %1466 = vmatpush1.msra.mxu0 %v1243
  %1467 = vmatprep.subr.mxu0 0.0
  %1468 = vmatpush1.msra.mxu0 0.0
  %1469 = vmatprep.subr.mxu0 0.0
  %1470 = vmatpush1.msra.mxu0 0.0
  %1471 = vmatprep.subr.mxu0 0.0
  %1472 = vmatpush1.msra.mxu0 0.0
  %1473 = vmatprep.subr.mxu0 0.0
  %1474 = vmatpush1.msra.mxu0 0.0
  %1475 = vmatprep.subr.mxu0 0.0
  %1476 = vmatpush1.msra.mxu0 0.0
  %1477 = vmatprep.subr.mxu0 0.0
  %1478 = vmatpush1.msra.mxu0 0.0
  %1479 = vmatprep.subr.mxu0 0.0
  %1480 = vmatpush1.msra.mxu0 0.0
  %1481 = vmatprep.subr.mxu0 0.0
  %1482 = vmatpush1.msra.mxu0 0.0
  %1483 = vmatprep.subr.mxu0 0.0
  %1484 = vmatpush1.msra.mxu0 0.0
  %1485 = vmatprep.subr.mxu0 0.0
  %1486 = vmatpush1.msra.mxu0 0.0
  %1487 = vmatprep.subr.mxu0 0.0
  %1488 = vmatpush1.msra.mxu0 0.0
  %1489 = vmatprep.subr.mxu0 0.0
  %1490 = vmatpush1.msra.mxu0 0.0
  %1491 = vmatprep.subr.mxu0 0.0
  %1492 = vmatpush1.msra.mxu0 0.0
  %1493 = vmatprep.subr.mxu0 0.0
  %1494 = vmatpush1.msra.mxu0 0.0
  %1495 = vmatprep.subr.mxu0 0.0
  %1496 = vmatpush1.msra.mxu0 0.0
  %1497 = vmatprep.subr.mxu0 0.0
  %1498 = vmatpush1.msra.mxu0 0.0
  %1499 = vmatprep.subr.mxu0 0.0
  %1500 = vmatpush1.msra.mxu0 0.0
  %1501 = vmatprep.subr.mxu0 0.0
  %1502 = vmatpush1.msra.mxu0 0.0
  %1503 = vmatprep.subr.mxu0 0.0
  %1504 = vmatpush1.msra.mxu0 0.0
  %1505 = vmatprep.subr.mxu0 0.0
  %1506 = vmatpush1.msra.mxu0 0.0
  %1507 = vmatprep.subr.mxu0 0.0
  %1508 = vmatpush1.msra.mxu0 0.0
  %1509 = vmatprep.subr.mxu0 0.0
  %1510 = vmatpush1.msra.mxu0 0.0
  %1511 = vmatprep.subr.mxu0 0.0
  %1512 = vmatpush1.msra.mxu0 0.0
  %1513 = vmatprep.subr.mxu0 0.0
  %1514 = vmatpush1.msra.mxu0 0.0
  %1515 = vmatprep.subr.mxu0 0.0
  %1516 = vmatpush1.msra.mxu0 0.0
  %1517 = vmatprep.subr.mxu0 0.0
  %1518 = vmatpush1.msra.mxu0 0.0
  %1519 = vmatprep.subr.mxu0 0.0
  %1520 = vmatpush1.msra.mxu0 0.0
  %1521 = vmatprep.subr.mxu0 0.0
  %1522 = vmatpush1.msra.mxu0 0.0
  %1523 = vmatprep.mubr.f32.mxu0 0.0
  %1524 = vmatmul.mubr.f32.gmra.mrb[0].mxu0 %v1457
  %v1525 = vpop.f32.mrb[0].mxu0
  %v1526 = vadd.f32 0.0, %v1525
  %v1527 = vpop.f32.mrb[0].mxu0
  %1528 = vdwg.mxu0
  %v1530 = vrot.slane %v1526, 4
  %v1532 = vadd.f32 %v1227, %v1530
  %v1533 = vtanh.pop %v1532
  %v1534 = vxor.u32 %v1532, 2147483648
  %v1535 = vmul.f32 %v1534, 1.442695
  %v1536 = vpow.pop %v1535
  %v1537 = vadd.f32 %v1536, 1.0
  %v1538 = vrcp.pop %v1537
  %v1539 = vmul.f32 1.0, %v1538
  %v1540 = vsel %vm36, %v1533, %v1539
  %v1542 = vrot.slane %v1442, 6
  %v1544 = vmul.f32 %v1540, %v1542
  %1546 = vrot.lane.b32.xlu0 %v1540, 64
  %v1547 = vpop.permute.xlu0 %1546
  %v1549 = vmul.f32 %v1540, %v1547
  %1551 = vrot.lane.b32.xlu0 %v1549, 32
  %v1552 = vpop.permute.xlu0 %1551
  %v1554 = vadd.f32 %v1544, %v1552
  %v1555 = vtanh.pop %v1554
  %1557 = vrot.lane.b32.xlu0 %v1555, 64
  %v1558 = vpop.permute.xlu0 %1557
  %v1560 = vmul.f32 %v1540, %v1558
  %1562 = vrot.lane.b32.xlu0 %v1560, 32
  %v1563 = vpop.permute.xlu0 %1562
  %1565 = vst.msk [vmem:[#allocation2] sm:$0x30] %vm471, %v1563
  %v1566 = vrot.slane %v1560, 4
  %1567 = vrot.lane.b32.xlu0 %v1566, 32
  %v1568 = vpop.permute.xlu0 %1567
  %v1569 = vsel %vm51, %v1568, 0
  %1571 = vmatprep.subr.mxu0 0.0
  %1572 = vmatpush1.msra.mxu0 %v1240
  %1573 = vmatprep.subr.mxu0 0.0
  %1574 = vmatpush1.msra.mxu0 %v1241
  %1575 = vmatprep.subr.mxu0 0.0
  %1576 = vmatpush1.msra.mxu0 %v1242
  %1577 = vmatprep.subr.mxu0 0.0
  %1578 = vmatpush1.msra.mxu0 %v1243
  %1579 = vmatprep.subr.mxu0 0.0
  %1580 = vmatpush1.msra.mxu0 0.0
  %1581 = vmatprep.subr.mxu0 0.0
  %1582 = vmatpush1.msra.mxu0 0.0
  %1583 = vmatprep.subr.mxu0 0.0
  %1584 = vmatpush1.msra.mxu0 0.0
  %1585 = vmatprep.subr.mxu0 0.0
  %1586 = vmatpush1.msra.mxu0 0.0
  %1587 = vmatprep.subr.mxu0 0.0
  %1588 = vmatpush1.msra.mxu0 0.0
  %1589 = vmatprep.subr.mxu0 0.0
  %1590 = vmatpush1.msra.mxu0 0.0
  %1591 = vmatprep.subr.mxu0 0.0
  %1592 = vmatpush1.msra.mxu0 0.0
  %1593 = vmatprep.subr.mxu0 0.0
  %1594 = vmatpush1.msra.mxu0 0.0
  %1595 = vmatprep.subr.mxu0 0.0
  %1596 = vmatpush1.msra.mxu0 0.0
  %1597 = vmatprep.subr.mxu0 0.0
  %1598 = vmatpush1.msra.mxu0 0.0
  %1599 = vmatprep.subr.mxu0 0.0
  %1600 = vmatpush1.msra.mxu0 0.0
  %1601 = vmatprep.subr.mxu0 0.0
  %1602 = vmatpush1.msra.mxu0 0.0
  %1603 = vmatprep.subr.mxu0 0.0
  %1604 = vmatpush1.msra.mxu0 0.0
  %1605 = vmatprep.subr.mxu0 0.0
  %1606 = vmatpush1.msra.mxu0 0.0
  %1607 = vmatprep.subr.mxu0 0.0
  %1608 = vmatpush1.msra.mxu0 0.0
  %1609 = vmatprep.subr.mxu0 0.0
  %1610 = vmatpush1.msra.mxu0 0.0
  %1611 = vmatprep.subr.mxu0 0.0
  %1612 = vmatpush1.msra.mxu0 0.0
  %1613 = vmatprep.subr.mxu0 0.0
  %1614 = vmatpush1.msra.mxu0 0.0
  %1615 = vmatprep.subr.mxu0 0.0
  %1616 = vmatpush1.msra.mxu0 0.0
  %1617 = vmatprep.subr.mxu0 0.0
  %1618 = vmatpush1.msra.mxu0 0.0
  %1619 = vmatprep.subr.mxu0 0.0
  %1620 = vmatpush1.msra.mxu0 0.0
  %1621 = vmatprep.subr.mxu0 0.0
  %1622 = vmatpush1.msra.mxu0 0.0
  %1623 = vmatprep.subr.mxu0 0.0
  %1624 = vmatpush1.msra.mxu0 0.0
  %1625 = vmatprep.subr.mxu0 0.0
  %1626 = vmatpush1.msra.mxu0 0.0
  %1627 = vmatprep.subr.mxu0 0.0
  %1628 = vmatpush1.msra.mxu0 0.0
  %1629 = vmatprep.subr.mxu0 0.0
  %1630 = vmatpush1.msra.mxu0 0.0
  %1631 = vmatprep.subr.mxu0 0.0
  %1632 = vmatpush1.msra.mxu0 0.0
  %1633 = vmatprep.subr.mxu0 0.0
  %1634 = vmatpush1.msra.mxu0 0.0
  %1635 = vmatprep.mubr.f32.mxu0 0.0
  %1636 = vmatmul.mubr.f32.gmra.mrb[0].mxu0 %v1569
  %v1637 = vpop.f32.mrb[0].mxu0
  %v1638 = vadd.f32 0.0, %v1637
  %v1639 = vpop.f32.mrb[0].mxu0
  %1640 = vdwg.mxu0
  %v1642 = vrot.slane %v1638, 2
  %v1644 = vadd.f32 %v1227, %v1642
  %v1645 = vtanh.pop %v1644
  %v1646 = vxor.u32 %v1644, 2147483648
  %v1647 = vmul.f32 %v1646, 1.442695
  %v1648 = vpow.pop %v1647
  %v1649 = vadd.f32 %v1648, 1.0
  %v1650 = vrcp.pop %v1649
  %v1651 = vmul.f32 1.0, %v1650
  %v1652 = vsel %vm36, %v1645, %v1651
  %v1654 = vrot.slane %v1554, 6
  %v1656 = vmul.f32 %v1652, %v1654
  %1658 = vrot.lane.b32.xlu0 %v1652, 64
  %v1659 = vpop.permute.xlu0 %1658
  %v1661 = vmul.f32 %v1652, %v1659
  %1663 = vrot.lane.b32.xlu0 %v1661, 32
  %v1664 = vpop.permute.xlu0 %1663
  %v1666 = vadd.f32 %v1656, %v1664
  %v1667 = vtanh.pop %v1666
  %1669 = vrot.lane.b32.xlu0 %v1667, 64
  %v1670 = vpop.permute.xlu0 %1669
  %v1672 = vmul.f32 %v1652, %v1670
  %1674 = vrot.lane.b32.xlu0 %v1672, 32
  %v1675 = vpop.permute.xlu0 %1674
  %1677 = vst.msk [vmem:[#allocation2] sm:$0xc0] %vm584, %v1675
  %v1678 = vrot.slane %v1672, 6
  %1679 = vrot.lane.b32.xlu0 %v1678, 32
  %v1680 = vpop.permute.xlu0 %1679
  %v1681 = vsel %vm51, %v1680, 0
  %1683 = vmatprep.subr.mxu0 0.0
  %1684 = vmatpush1.msra.mxu0 %v1240
  %1685 = vmatprep.subr.mxu0 0.0
  %1686 = vmatpush1.msra.mxu0 %v1241
  %1687 = vmatprep.subr.mxu0 0.0
  %1688 = vmatpush1.msra.mxu0 %v1242
  %1689 = vmatprep.subr.mxu0 0.0
  %1690 = vmatpush1.msra.mxu0 %v1243
  %1691 = vmatprep.subr.mxu0 0.0
  %1692 = vmatpush1.msra.mxu0 0.0
  %1693 = vmatprep.subr.mxu0 0.0
  %1694 = vmatpush1.msra.mxu0 0.0
  %1695 = vmatprep.subr.mxu0 0.0
  %1696 = vmatpush1.msra.mxu0 0.0
  %1697 = vmatprep.subr.mxu0 0.0
  %1698 = vmatpush1.msra.mxu0 0.0
  %1699 = vmatprep.subr.mxu0 0.0
  %1700 = vmatpush1.msra.mxu0 0.0
  %1701 = vmatprep.subr.mxu0 0.0
  %1702 = vmatpush1.msra.mxu0 0.0
  %1703 = vmatprep.subr.mxu0 0.0
  %1704 = vmatpush1.msra.mxu0 0.0
  %1705 = vmatprep.subr.mxu0 0.0
  %1706 = vmatpush1.msra.mxu0 0.0
  %1707 = vmatprep.subr.mxu0 0.0
  %1708 = vmatpush1.msra.mxu0 0.0
  %1709 = vmatprep.subr.mxu0 0.0
  %1710 = vmatpush1.msra.mxu0 0.0
  %1711 = vmatprep.subr.mxu0 0.0
  %1712 = vmatpush1.msra.mxu0 0.0
  %1713 = vmatprep.subr.mxu0 0.0
  %1714 = vmatpush1.msra.mxu0 0.0
  %1715 = vmatprep.subr.mxu0 0.0
  %1716 = vmatpush1.msra.mxu0 0.0
  %1717 = vmatprep.subr.mxu0 0.0
  %1718 = vmatpush1.msra.mxu0 0.0
  %1719 = vmatprep.subr.mxu0 0.0
  %1720 = vmatpush1.msra.mxu0 0.0
  %1721 = vmatprep.subr.mxu0 0.0
  %1722 = vmatpush1.msra.mxu0 0.0
  %1723 = vmatprep.subr.mxu0 0.0
  %1724 = vmatpush1.msra.mxu0 0.0
  %1725 = vmatprep.subr.mxu0 0.0
  %1726 = vmatpush1.msra.mxu0 0.0
  %1727 = vmatprep.subr.mxu0 0.0
  %1728 = vmatpush1.msra.mxu0 0.0
  %1729 = vmatprep.subr.mxu0 0.0
  %1730 = vmatpush1.msra.mxu0 0.0
  %1731 = vmatprep.subr.mxu0 0.0
  %1732 = vmatpush1.msra.mxu0 0.0
  %1733 = vmatprep.subr.mxu0 0.0
  %1734 = vmatpush1.msra.mxu0 0.0
  %1735 = vmatprep.subr.mxu0 0.0
  %1736 = vmatpush1.msra.mxu0 0.0
  %1737 = vmatprep.subr.mxu0 0.0
  %1738 = vmatpush1.msra.mxu0 0.0
  %1739 = vmatprep.subr.mxu0 0.0
  %1740 = vmatpush1.msra.mxu0 0.0
  %1741 = vmatprep.subr.mxu0 0.0
  %1742 = vmatpush1.msra.mxu0 0.0
  %1743 = vmatprep.subr.mxu0 0.0
  %1744 = vmatpush1.msra.mxu0 0.0
  %1745 = vmatprep.subr.mxu0 0.0
  %1746 = vmatpush1.msra.mxu0 0.0
  %1747 = vmatprep.mubr.f32.mxu0 0.0
  %1748 = vmatmul.mubr.f32.gmra.mrb[0].mxu0 %v1681
  %v1749 = vpop.f32.mrb[0].mxu0
  %v1750 = vadd.f32 0.0, %v1749
  %v1751 = vpop.f32.mrb[0].mxu0
  %1752 = vdwg.mxu0
  %v1753 = vadd.f32 %v1232, %v1750
  %v1754 = vtanh.pop %v1753
  %v1755 = vxor.u32 %v1753, 2147483648
  %v1756 = vmul.f32 %v1755, 1.442695
  %v1757 = vpow.pop %v1756
  %v1758 = vadd.f32 %v1757, 1.0
  %v1759 = vrcp.pop %v1758
  %v1760 = vmul.f32 1.0, %v1759
  %v1761 = vsel %vm36, %v1754, %v1760
  %v1763 = vrot.slane %v1666, 6
  %v1765 = vmul.f32 %v1761, %v1763
  %1767 = vrot.lane.b32.xlu0 %v1761, 64
  %v1768 = vpop.permute.xlu0 %1767
  %v1770 = vmul.f32 %v1761, %v1768
  %1772 = vrot.lane.b32.xlu0 %v1770, 32
  %v1773 = vpop.permute.xlu0 %1772
  %v1775 = vadd.f32 %v1765, %v1773
  %v1776 = vtanh.pop %v1775
  %1778 = vrot.lane.b32.xlu0 %v1776, 64
  %v1779 = vpop.permute.xlu0 %1778
  %v1781 = vmul.f32 %v1761, %v1779
  %1783 = vrot.lane.b32.xlu0 %v1781, 32
  %v1784 = vpop.permute.xlu0 %1783
  %1786 = vst.msk [vmem:[#allocation2 + $0x8] sm:$0x3] %vm248, %v1784
  %v1787 = vsel %vm51, %v1784, 0
  %1789 = vmatprep.subr.mxu0 0.0
  %1790 = vmatpush1.msra.mxu0 %v1240
  %1791 = vmatprep.subr.mxu0 0.0
  %1792 = vmatpush1.msra.mxu0 %v1241
  %1793 = vmatprep.subr.mxu0 0.0
  %1794 = vmatpush1.msra.mxu0 %v1242
  %1795 = vmatprep.subr.mxu0 0.0
  %1796 = vmatpush1.msra.mxu0 %v1243
  %1797 = vmatprep.subr.mxu0 0.0
  %1798 = vmatpush1.msra.mxu0 0.0
  %1799 = vmatprep.subr.mxu0 0.0
  %1800 = vmatpush1.msra.mxu0 0.0
  %1801 = vmatprep.subr.mxu0 0.0
  %1802 = vmatpush1.msra.mxu0 0.0
  %1803 = vmatprep.subr.mxu0 0.0
  %1804 = vmatpush1.msra.mxu0 0.0
  %1805 = vmatprep.subr.mxu0 0.0
  %1806 = vmatpush1.msra.mxu0 0.0
  %1807 = vmatprep.subr.mxu0 0.0
  %1808 = vmatpush1.msra.mxu0 0.0
  %1809 = vmatprep.subr.mxu0 0.0
  %1810 = vmatpush1.msra.mxu0 0.0
  %1811 = vmatprep.subr.mxu0 0.0
  %1812 = vmatpush1.msra.mxu0 0.0
  %1813 = vmatprep.subr.mxu0 0.0
  %1814 = vmatpush1.msra.mxu0 0.0
  %1815 = vmatprep.subr.mxu0 0.0
  %1816 = vmatpush1.msra.mxu0 0.0
  %1817 = vmatprep.subr.mxu0 0.0
  %1818 = vmatpush1.msra.mxu0 0.0
  %1819 = vmatprep.subr.mxu0 0.0
  %1820 = vmatpush1.msra.mxu0 0.0
  %1821 = vmatprep.subr.mxu0 0.0
  %1822 = vmatpush1.msra.mxu0 0.0
  %1823 = vmatprep.subr.mxu0 0.0
  %1824 = vmatpush1.msra.mxu0 0.0
  %1825 = vmatprep.subr.mxu0 0.0
  %1826 = vmatpush1.msra.mxu0 0.0
  %1827 = vmatprep.subr.mxu0 0.0
  %1828 = vmatpush1.msra.mxu0 0.0
  %1829 = vmatprep.subr.mxu0 0.0
  %1830 = vmatpush1.msra.mxu0 0.0
  %1831 = vmatprep.subr.mxu0 0.0
  %1832 = vmatpush1.msra.mxu0 0.0
  %1833 = vmatprep.subr.mxu0 0.0
  %1834 = vmatpush1.msra.mxu0 0.0
  %1835 = vmatprep.subr.mxu0 0.0
  %1836 = vmatpush1.msra.mxu0 0.0
  %1837 = vmatprep.subr.mxu0 0.0
  %1838 = vmatpush1.msra.mxu0 0.0
  %1839 = vmatprep.subr.mxu0 0.0
  %1840 = vmatpush1.msra.mxu0 0.0
  %1841 = vmatprep.subr.mxu0 0.0
  %1842 = vmatpush1.msra.mxu0 0.0
  %1843 = vmatprep.subr.mxu0 0.0
  %1844 = vmatpush1.msra.mxu0 0.0
  %1845 = vmatprep.subr.mxu0 0.0
  %1846 = vmatpush1.msra.mxu0 0.0
  %1847 = vmatprep.subr.mxu0 0.0
  %1848 = vmatpush1.msra.mxu0 0.0
  %1849 = vmatprep.subr.mxu0 0.0
  %1850 = vmatpush1.msra.mxu0 0.0
  %1851 = vmatprep.subr.mxu0 0.0
  %1852 = vmatpush1.msra.mxu0 0.0
  %1853 = vmatprep.mubr.f32.mxu0 0.0
  %1854 = vmatmul.mubr.f32.gmra.mrb[0].mxu0 %v1787
  %v1855 = vpop.f32.mrb[0].mxu0
  %v1856 = vadd.f32 0.0, %v1855
  %v1857 = vpop.f32.mrb[0].mxu0
  %1858 = vdwg.mxu0
  %v1860 = vrot.slane %v1856, 6
  %v1862 = vadd.f32 %v1232, %v1860
  %v1863 = vtanh.pop %v1862
  %v1864 = vxor.u32 %v1862, 2147483648
  %v1865 = vmul.f32 %v1864, 1.442695
  %v1866 = vpow.pop %v1865
  %v1867 = vadd.f32 %v1866, 1.0
  %v1868 = vrcp.pop %v1867
  %v1869 = vmul.f32 1.0, %v1868
  %v1870 = vsel %vm36, %v1863, %v1869
  %v1872 = vrot.slane %v1775, 6
  %v1874 = vmul.f32 %v1870, %v1872
  %1876 = vrot.lane.b32.xlu0 %v1870, 64
  %v1877 = vpop.permute.xlu0 %1876
  %v1879 = vmul.f32 %v1870, %v1877
  %1881 = vrot.lane.b32.xlu0 %v1879, 32
  %v1882 = vpop.permute.xlu0 %1881
  %v1884 = vadd.f32 %v1874, %v1882
  %v1885 = vtanh.pop %v1884
  %1887 = vrot.lane.b32.xlu0 %v1885, 64
  %v1888 = vpop.permute.xlu0 %1887
  %v1890 = vmul.f32 %v1870, %v1888
  %1892 = vrot.lane.b32.xlu0 %v1890, 32
  %v1893 = vpop.permute.xlu0 %1892
  %1895 = vst.msk [vmem:[#allocation2 + $0x8] sm:$0xc] %vm358, %v1893
  %v1896 = vrot.slane %v1890, 2
  %1897 = vrot.lane.b32.xlu0 %v1896, 32
  %v1898 = vpop.permute.xlu0 %1897
  %v1899 = vsel %vm51, %v1898, 0
  %1901 = vmatprep.subr.mxu0 0.0
  %1902 = vmatpush1.msra.mxu0 %v1240
  %1903 = vmatprep.subr.mxu0 0.0
  %1904 = vmatpush1.msra.mxu0 %v1241
  %1905 = vmatprep.subr.mxu0 0.0
  %1906 = vmatpush1.msra.mxu0 %v1242
  %1907 = vmatprep.subr.mxu0 0.0
  %1908 = vmatpush1.msra.mxu0 %v1243
  %1909 = vmatprep.subr.mxu0 0.0
  %1910 = vmatpush1.msra.mxu0 0.0
  %1911 = vmatprep.subr.mxu0 0.0
  %1912 = vmatpush1.msra.mxu0 0.0
  %1913 = vmatprep.subr.mxu0 0.0
  %1914 = vmatpush1.msra.mxu0 0.0
  %1915 = vmatprep.subr.mxu0 0.0
  %1916 = vmatpush1.msra.mxu0 0.0
  %1917 = vmatprep.subr.mxu0 0.0
  %1918 = vmatpush1.msra.mxu0 0.0
  %1919 = vmatprep.subr.mxu0 0.0
  %1920 = vmatpush1.msra.mxu0 0.0
  %1921 = vmatprep.subr.mxu0 0.0
  %1922 = vmatpush1.msra.mxu0 0.0
  %1923 = vmatprep.subr.mxu0 0.0
  %1924 = vmatpush1.msra.mxu0 0.0
  %1925 = vmatprep.subr.mxu0 0.0
  %1926 = vmatpush1.msra.mxu0 0.0
  %1927 = vmatprep.subr.mxu0 0.0
  %1928 = vmatpush1.msra.mxu0 0.0
  %1929 = vmatprep.subr.mxu0 0.0
  %1930 = vmatpush1.msra.mxu0 0.0
  %1931 = vmatprep.subr.mxu0 0.0
  %1932 = vmatpush1.msra.mxu0 0.0
  %1933 = vmatprep.subr.mxu0 0.0
  %1934 = vmatpush1.msra.mxu0 0.0
  %1935 = vmatprep.subr.mxu0 0.0
  %1936 = vmatpush1.msra.mxu0 0.0
  %1937 = vmatprep.subr.mxu0 0.0
  %1938 = vmatpush1.msra.mxu0 0.0
  %1939 = vmatprep.subr.mxu0 0.0
  %1940 = vmatpush1.msra.mxu0 0.0
  %1941 = vmatprep.subr.mxu0 0.0
  %1942 = vmatpush1.msra.mxu0 0.0
  %1943 = vmatprep.subr.mxu0 0.0
  %1944 = vmatpush1.msra.mxu0 0.0
  %1945 = vmatprep.subr.mxu0 0.0
  %1946 = vmatpush1.msra.mxu0 0.0
  %1947 = vmatprep.subr.mxu0 0.0
  %1948 = vmatpush1.msra.mxu0 0.0
  %1949 = vmatprep.subr.mxu0 0.0
  %1950 = vmatpush1.msra.mxu0 0.0
  %1951 = vmatprep.subr.mxu0 0.0
  %1952 = vmatpush1.msra.mxu0 0.0
  %1953 = vmatprep.subr.mxu0 0.0
  %1954 = vmatpush1.msra.mxu0 0.0
  %1955 = vmatprep.subr.mxu0 0.0
  %1956 = vmatpush1.msra.mxu0 0.0
  %1957 = vmatprep.subr.mxu0 0.0
  %1958 = vmatpush1.msra.mxu0 0.0
  %1959 = vmatprep.subr.mxu0 0.0
  %1960 = vmatpush1.msra.mxu0 0.0
  %1961 = vmatprep.subr.mxu0 0.0
  %1962 = vmatpush1.msra.mxu0 0.0
  %1963 = vmatprep.subr.mxu0 0.0
  %1964 = vmatpush1.msra.mxu0 0.0
  %1965 = vmatprep.mubr.f32.mxu0 0.0
  %1966 = vmatmul.mubr.f32.gmra.mrb[0].mxu0 %v1899
  %v1967 = vpop.f32.mrb[0].mxu0
  %v1968 = vadd.f32 0.0, %v1967
  %v1969 = vpop.f32.mrb[0].mxu0
  %1970 = vdwg.mxu0
  %v1972 = vrot.slane %v1968, 4
  %v1974 = vadd.f32 %v1232, %v1972
  %v1975 = vtanh.pop %v1974
  %v1976 = vxor.u32 %v1974, 2147483648
  %v1977 = vmul.f32 %v1976, 1.442695
  %v1978 = vpow.pop %v1977
  %v1979 = vadd.f32 %v1978, 1.0
  %v1980 = vrcp.pop %v1979
  %v1981 = vmul.f32 1.0, %v1980
  %v1982 = vsel %vm36, %v1975, %v1981
  %v1984 = vrot.slane %v1884, 6
  %v1986 = vmul.f32 %v1982, %v1984
  %1988 = vrot.lane.b32.xlu0 %v1982, 64
  %v1989 = vpop.permute.xlu0 %1988
  %v1991 = vmul.f32 %v1982, %v1989
  %1993 = vrot.lane.b32.xlu0 %v1991, 32
  %v1994 = vpop.permute.xlu0 %1993
  %v1996 = vadd.f32 %v1986, %v1994
  %v1997 = vtanh.pop %v1996
  %1999 = vrot.lane.b32.xlu0 %v1997, 64
  %v2000 = vpop.permute.xlu0 %1999
  %v2002 = vmul.f32 %v1982, %v2000
  %2004 = vrot.lane.b32.xlu0 %v2002, 32
  %v2005 = vpop.permute.xlu0 %2004
  %2007 = vst.msk [vmem:[#allocation2 + $0x8] sm:$0x30] %vm471, %v2005
  %v2008 = vrot.slane %v2002, 4
  %2009 = vrot.lane.b32.xlu0 %v2008, 32
  %v2010 = vpop.permute.xlu0 %2009
  %v2011 = vsel %vm51, %v2010, 0
  %2013 = vmatprep.subr.mxu0 0.0
  %2014 = vmatpush1.msra.mxu0 %v1240
  %2015 = vmatprep.subr.mxu0 0.0
  %2016 = vmatpush1.msra.mxu0 %v1241
  %2017 = vmatprep.subr.mxu0 0.0
  %2018 = vmatpush1.msra.mxu0 %v1242
  %2019 = vmatprep.subr.mxu0 0.0
  %2020 = vmatpush1.msra.mxu0 %v1243
  %2021 = vmatprep.subr.mxu0 0.0
  %2022 = vmatpush1.msra.mxu0 0.0
  %2023 = vmatprep.subr.mxu0 0.0
  %2024 = vmatpush1.msra.mxu0 0.0
  %2025 = vmatprep.subr.mxu0 0.0
  %2026 = vmatpush1.msra.mxu0 0.0
  %2027 = vmatprep.subr.mxu0 0.0
  %2028 = vmatpush1.msra.mxu0 0.0
  %2029 = vmatprep.subr.mxu0 0.0
  %2030 = vmatpush1.msra.mxu0 0.0
  %2031 = vmatprep.subr.mxu0 0.0
  %2032 = vmatpush1.msra.mxu0 0.0
  %2033 = vmatprep.subr.mxu0 0.0
  %2034 = vmatpush1.msra.mxu0 0.0
  %2035 = vmatprep.subr.mxu0 0.0
  %2036 = vmatpush1.msra.mxu0 0.0
  %2037 = vmatprep.subr.mxu0 0.0
  %2038 = vmatpush1.msra.mxu0 0.0
  %2039 = vmatprep.subr.mxu0 0.0
  %2040 = vmatpush1.msra.mxu0 0.0
  %2041 = vmatprep.subr.mxu0 0.0
  %2042 = vmatpush1.msra.mxu0 0.0
  %2043 = vmatprep.subr.mxu0 0.0
  %2044 = vmatpush1.msra.mxu0 0.0
  %2045 = vmatprep.subr.mxu0 0.0
  %2046 = vmatpush1.msra.mxu0 0.0
  %2047 = vmatprep.subr.mxu0 0.0
  %2048 = vmatpush1.msra.mxu0 0.0
  %2049 = vmatprep.subr.mxu0 0.0
  %2050 = vmatpush1.msra.mxu0 0.0
  %2051 = vmatprep.subr.mxu0 0.0
  %2052 = vmatpush1.msra.mxu0 0.0
  %2053 = vmatprep.subr.mxu0 0.0
  %2054 = vmatpush1.msra.mxu0 0.0
  %2055 = vmatprep.subr.mxu0 0.0
  %2056 = vmatpush1.msra.mxu0 0.0
  %2057 = vmatprep.subr.mxu0 0.0
  %2058 = vmatpush1.msra.mxu0 0.0
  %2059 = vmatprep.subr.mxu0 0.0
  %2060 = vmatpush1.msra.mxu0 0.0
  %2061 = vmatprep.subr.mxu0 0.0
  %2062 = vmatpush1.msra.mxu0 0.0
  %2063 = vmatprep.subr.mxu0 0.0
  %2064 = vmatpush1.msra.mxu0 0.0
  %2065 = vmatprep.subr.mxu0 0.0
  %2066 = vmatpush1.msra.mxu0 0.0
  %2067 = vmatprep.subr.mxu0 0.0
  %2068 = vmatpush1.msra.mxu0 0.0
  %2069 = vmatprep.subr.mxu0 0.0
  %2070 = vmatpush1.msra.mxu0 0.0
  %2071 = vmatprep.subr.mxu0 0.0
  %2072 = vmatpush1.msra.mxu0 0.0
  %2073 = vmatprep.subr.mxu0 0.0
  %2074 = vmatpush1.msra.mxu0 0.0
  %2075 = vmatprep.subr.mxu0 0.0
  %2076 = vmatpush1.msra.mxu0 0.0
  %2077 = vmatprep.mubr.f32.mxu0 0.0
  %2078 = vmatmul.mubr.f32.gmra.mrb[0].mxu0 %v2011
  %v2079 = vpop.f32.mrb[0].mxu0
  %v2080 = vadd.f32 0.0, %v2079
  %v2081 = vpop.f32.mrb[0].mxu0
  %2082 = vdwg.mxu0
  %v2084 = vrot.slane %v2080, 2
  %v2086 = vadd.f32 %v1232, %v2084
  %v2087 = vtanh.pop %v2086
  %v2088 = vxor.u32 %v2086, 2147483648
  %v2089 = vmul.f32 %v2088, 1.442695
  %v2090 = vpow.pop %v2089
  %v2091 = vadd.f32 %v2090, 1.0
  %v2092 = vrcp.pop %v2091
  %v2093 = vmul.f32 1.0, %v2092
  %v2094 = vsel %vm36, %v2087, %v2093
  %v2096 = vrot.slane %v1996, 6
  %v2098 = vmul.f32 %v2094, %v2096
  %2100 = vrot.lane.b32.xlu0 %v2094, 64
  %v2101 = vpop.permute.xlu0 %2100
  %v2103 = vmul.f32 %v2094, %v2101
  %2105 = vrot.lane.b32.xlu0 %v2103, 32
  %v2106 = vpop.permute.xlu0 %2105
  %v2108 = vadd.f32 %v2098, %v2106
  %v2109 = vtanh.pop %v2108
  %2111 = vrot.lane.b32.xlu0 %v2109, 64
  %v2112 = vpop.permute.xlu0 %2111
  %v2114 = vmul.f32 %v2094, %v2112
  %2116 = vrot.lane.b32.xlu0 %v2114, 32
  %v2117 = vpop.permute.xlu0 %2116
  %2119 = vst.msk [vmem:[#allocation2 + $0x8] sm:$0xc0] %vm584, %v2117
  %v2120 = vrot.slane %v2114, 6
  %2121 = vrot.lane.b32.xlu0 %v2120, 32
  %v2122 = vpop.permute.xlu0 %2121
  %v2123 = vsel %vm51, %v2122, 0
  %2125 = vmatprep.subr.mxu0 0.0
  %2126 = vmatpush1.msra.mxu0 %v1240
  %2127 = vmatprep.subr.mxu0 0.0
  %2128 = vmatpush1.msra.mxu0 %v1241
  %2129 = vmatprep.subr.mxu0 0.0
  %2130 = vmatpush1.msra.mxu0 %v1242
  %2131 = vmatprep.subr.mxu0 0.0
  %2132 = vmatpush1.msra.mxu0 %v1243
  %2133 = vmatprep.subr.mxu0 0.0
  %2134 = vmatpush1.msra.mxu0 0.0
  %2135 = vmatprep.subr.mxu0 0.0
  %2136 = vmatpush1.msra.mxu0 0.0
  %2137 = vmatprep.subr.mxu0 0.0
  %2138 = vmatpush1.msra.mxu0 0.0
  %2139 = vmatprep.subr.mxu0 0.0
  %2140 = vmatpush1.msra.mxu0 0.0
  %2141 = vmatprep.subr.mxu0 0.0
  %2142 = vmatpush1.msra.mxu0 0.0
  %2143 = vmatprep.subr.mxu0 0.0
  %2144 = vmatpush1.msra.mxu0 0.0
  %2145 = vmatprep.subr.mxu0 0.0
  %2146 = vmatpush1.msra.mxu0 0.0
  %2147 = vmatprep.subr.mxu0 0.0
  %2148 = vmatpush1.msra.mxu0 0.0
  %2149 = vmatprep.subr.mxu0 0.0
  %2150 = vmatpush1.msra.mxu0 0.0
  %2151 = vmatprep.subr.mxu0 0.0
  %2152 = vmatpush1.msra.mxu0 0.0
  %2153 = vmatprep.subr.mxu0 0.0
  %2154 = vmatpush1.msra.mxu0 0.0
  %2155 = vmatprep.subr.mxu0 0.0
  %2156 = vmatpush1.msra.mxu0 0.0
  %2157 = vmatprep.subr.mxu0 0.0
  %2158 = vmatpush1.msra.mxu0 0.0
  %2159 = vmatprep.subr.mxu0 0.0
  %2160 = vmatpush1.msra.mxu0 0.0
  %2161 = vmatprep.subr.mxu0 0.0
  %2162 = vmatpush1.msra.mxu0 0.0
  %2163 = vmatprep.subr.mxu0 0.0
  %2164 = vmatpush1.msra.mxu0 0.0
  %2165 = vmatprep.subr.mxu0 0.0
  %2166 = vmatpush1.msra.mxu0 0.0
  %2167 = vmatprep.subr.mxu0 0.0
  %2168 = vmatpush1.msra.mxu0 0.0
  %2169 = vmatprep.subr.mxu0 0.0
  %2170 = vmatpush1.msra.mxu0 0.0
  %2171 = vmatprep.subr.mxu0 0.0
  %2172 = vmatpush1.msra.mxu0 0.0
  %2173 = vmatprep.subr.mxu0 0.0
  %2174 = vmatpush1.msra.mxu0 0.0
  %2175 = vmatprep.subr.mxu0 0.0
  %2176 = vmatpush1.msra.mxu0 0.0
  %2177 = vmatprep.subr.mxu0 0.0
  %2178 = vmatpush1.msra.mxu0 0.0
  %2179 = vmatprep.subr.mxu0 0.0
  %2180 = vmatpush1.msra.mxu0 0.0
  %2181 = vmatprep.subr.mxu0 0.0
  %2182 = vmatpush1.msra.mxu0 0.0
  %2183 = vmatprep.subr.mxu0 0.0
  %2184 = vmatpush1.msra.mxu0 0.0
  %2185 = vmatprep.subr.mxu0 0.0
  %2186 = vmatpush1.msra.mxu0 0.0
  %2187 = vmatprep.subr.mxu0 0.0
  %2188 = vmatpush1.msra.mxu0 0.0
  %2189 = vmatprep.mubr.f32.mxu0 0.0
  %2190 = vmatmul.mubr.f32.gmra.mrb[0].mxu0 %v2123
  %v2191 = vpop.f32.mrb[0].mxu0
  %v2192 = vadd.f32 0.0, %v2191
  %v2193 = vpop.f32.mrb[0].mxu0
  %2194 = vdwg.mxu0
  %v2195 = vadd.f32 %v1237, %v2192
  %v2196 = vtanh.pop %v2195
  %v2197 = vxor.u32 %v2195, 2147483648
  %v2198 = vmul.f32 %v2197, 1.442695
  %v2199 = vpow.pop %v2198
  %v2200 = vadd.f32 %v2199, 1.0
  %v2201 = vrcp.pop %v2200
  %v2202 = vmul.f32 1.0, %v2201
  %v2203 = vsel %vm36, %v2196, %v2202
  %v2205 = vrot.slane %v2108, 6
  %v2207 = vmul.f32 %v2203, %v2205
  %2209 = vrot.lane.b32.xlu0 %v2203, 64
  %v2210 = vpop.permute.xlu0 %2209
  %v2212 = vmul.f32 %v2203, %v2210
  %2214 = vrot.lane.b32.xlu0 %v2212, 32
  %v2215 = vpop.permute.xlu0 %2214
  %v2217 = vadd.f32 %v2207, %v2215
  %v2218 = vtanh.pop %v2217
  %2220 = vrot.lane.b32.xlu0 %v2218, 64
  %v2221 = vpop.permute.xlu0 %2220
  %v2223 = vmul.f32 %v2203, %v2221
  %2225 = vrot.lane.b32.xlu0 %v2223, 32
  %v2226 = vpop.permute.xlu0 %2225
  %2228 = vst.msk [vmem:[#allocation2 + $0x10] sm:$0x3] %vm248, %v2226
  %v2229 = vld [vmem:[#allocation2] sm:$0xff]
  %v2230 = vld [vmem:[#allocation2 + $0x8] sm:$0xff]
  %v2231 = vld [vmem:[#allocation2 + $0x10] sm:$0x3]
  %v2232 = vld [vmem:[%s7] sm:$0xff]
  %v2233 = vld [vmem:[%s7 + $0x8] sm:$0xff]
  %v2234 = vld [vmem:[%s7 + $0x10] sm:$0xff]
  %v2235 = vld [vmem:[%s7 + $0x18] sm:$0xff]
  %v2236 = vld [vmem:[%s8] sm:$0x1]
  %v2238 = vlaneseq
  %v2239 = vshrl.u32 %v2238, 7
  %v2240 = vsub.s32 0, %v2239
  %v2241 = vrot.slane %v2236, %v2240
  %v2244 = vsel %vm51, %v2229, 0
  %v2247 = vsel %vm51, %v2230, 0
  %v2250 = vsel %vm51, %v2231, 0
  %2252 = vmatprep.subr.mxu0 0.0
  %2253 = vmatpush1.msra.mxu0 %v2232
  %2254 = vmatprep.subr.mxu0 0.0
  %2255 = vmatpush1.msra.mxu0 %v2233
  %2256 = vmatprep.subr.mxu0 0.0
  %2257 = vmatpush1.msra.mxu0 %v2234
  %2258 = vmatprep.subr.mxu0 0.0
  %2259 = vmatpush1.msra.mxu0 %v2235
  %2260 = vmatprep.subr.mxu0 0.0
  %2261 = vmatpush1.msra.mxu0 0.0
  %2262 = vmatprep.subr.mxu0 0.0
  %2263 = vmatpush1.msra.mxu0 0.0
  %2264 = vmatprep.subr.mxu0 0.0
  %2265 = vmatpush1.msra.mxu0 0.0
  %2266 = vmatprep.subr.mxu0 0.0
  %2267 = vmatpush1.msra.mxu0 0.0
  %2268 = vmatprep.subr.mxu0 0.0
  %2269 = vmatpush1.msra.mxu0 0.0
  %2270 = vmatprep.subr.mxu0 0.0
  %2271 = vmatpush1.msra.mxu0 0.0
  %2272 = vmatprep.subr.mxu0 0.0
  %2273 = vmatpush1.msra.mxu0 0.0
  %2274 = vmatprep.subr.mxu0 0.0
  %2275 = vmatpush1.msra.mxu0 0.0
  %2276 = vmatprep.subr.mxu0 0.0
  %2277 = vmatpush1.msra.mxu0 0.0
  %2278 = vmatprep.subr.mxu0 0.0
  %2279 = vmatpush1.msra.mxu0 0.0
  %2280 = vmatprep.subr.mxu0 0.0
  %2281 = vmatpush1.msra.mxu0 0.0
  %2282 = vmatprep.subr.mxu0 0.0
  %2283 = vmatpush1.msra.mxu0 0.0
  %2284 = vmatprep.subr.mxu0 0.0
  %2285 = vmatpush1.msra.mxu0 0.0
  %2286 = vmatprep.subr.mxu0 0.0
  %2287 = vmatpush1.msra.mxu0 0.0
  %2288 = vmatprep.subr.mxu0 0.0
  %2289 = vmatpush1.msra.mxu0 0.0
  %2290 = vmatprep.subr.mxu0 0.0
  %2291 = vmatpush1.msra.mxu0 0.0
  %2292 = vmatprep.subr.mxu0 0.0
  %2293 = vmatpush1.msra.mxu0 0.0
  %2294 = vmatprep.subr.mxu0 0.0
  %2295 = vmatpush1.msra.mxu0 0.0
  %2296 = vmatprep.subr.mxu0 0.0
  %2297 = vmatpush1.msra.mxu0 0.0
  %2298 = vmatprep.subr.mxu0 0.0
  %2299 = vmatpush1.msra.mxu0 0.0
  %2300 = vmatprep.subr.mxu0 0.0
  %2301 = vmatpush1.msra.mxu0 0.0
  %2302 = vmatprep.subr.mxu0 0.0
  %2303 = vmatpush1.msra.mxu0 0.0
  %2304 = vmatprep.subr.mxu0 0.0
  %2305 = vmatpush1.msra.mxu0 0.0
  %2306 = vmatprep.subr.mxu0 0.0
  %2307 = vmatpush1.msra.mxu0 0.0
  %2308 = vmatprep.subr.mxu0 0.0
  %2309 = vmatpush1.msra.mxu0 0.0
  %2310 = vmatprep.subr.mxu0 0.0
  %2311 = vmatpush1.msra.mxu0 0.0
  %2312 = vmatprep.subr.mxu0 0.0
  %2313 = vmatpush1.msra.mxu0 0.0
  %2314 = vmatprep.subr.mxu0 0.0
  %2315 = vmatpush1.msra.mxu0 0.0
  %2316 = vmatprep.mubr.f32.mxu0 0.0
  %2317 = vmatmul.mubr.f32.gmra.mrb[0].mxu0 %v2244
  %v2318 = vpop.f32.mrb[0].mxu0
  %v2319 = vadd.f32 %v2241, %v2318
  %v2320 = vpop.f32.mrb[0].mxu0
  %2321 = vmatprep.mubr.f32.mxu0 0.0
  %2322 = vmatmul.mubr.f32.gmra.mrb[0].mxu0 %v2247
  %v2323 = vpop.f32.mrb[0].mxu0
  %v2324 = vadd.f32 %v2241, %v2323
  %v2325 = vpop.f32.mrb[0].mxu0
  %2326 = vmatprep.mubr.f32.mxu0 0.0
  %2327 = vmatmul.mubr.f32.gmra.mrb[0].mxu0 %v2250
  %v2328 = vpop.f32.mrb[0].mxu0
  %v2329 = vadd.f32 %v2241, %v2328
  %v2330 = vpop.f32.mrb[0].mxu0
  %2331 = vdwg.mxu0
  %2332 = vst [vmem:[%s9] sm:$0xff] %v2319
  %2333 = vst [vmem:[%s9 + $0x8] sm:$0xff] %v2324
  %2334 = vst [vmem:[%s9 + $0x10] sm:$0x3] %v2329
  // Predicated region
  $region38: #{cnn_to_lstm_forward.3} parent=0 // pred_check
    _
  $region39: #{cnn_to_lstm_forward.3} parent=0 // pred_check_branch
    %2336 = sbr.rel (0) target = $region41
  $region40: #{cnn_to_lstm_forward.3} parent=0 // pred_region
    _
  $region41: #{cnn_to_lstm_forward.3} parent=0 // pred_fallthru
    _
  // Predicated region
  $region42: #{cnn_to_lstm_forward.3} parent=0 // pred_check
    _
  $region43: #{cnn_to_lstm_forward.3} parent=0 // pred_check_branch
    %2338 = sbr.rel (0) target = $region45
  $region44: #{cnn_to_lstm_forward.3} parent=0 // pred_region
    _
  $region45: #{cnn_to_lstm_forward.3} parent=0 // pred_fallthru
    _

</llo_original>
